<compile_context>
chip_gen: v5e
topology: v5e:2x2
jax: 0.10.0
libtpu: 0.0.40
codegen_flags: <defaults>
</compile_context>

<pallas_src>
import functools

import numpy as np
import jax
import jax.numpy as jnp
from jax import lax
from jax.experimental import pallas as pl
from jax.experimental.pallas import tpu as pltpu


# ----------------------------- fused Pallas kernel -------------------------- #

def _fused_cnn_kernel(p1_ref, w1_ref, b1_ref,
                      g2_ref, w2_ref, b2_ref,
                      g3_ref, w3_ref, b3_ref,
                      wfc_ref, bfc_ref, o_ref):
    f32 = jnp.float32

    # conv1 (1->32, k3, pad1, stride1) + ReLU:  (P1, 9) @ (9, 32)
    y1 = jnp.dot(p1_ref[0], w1_ref[...], preferred_element_type=f32)
    y1 = jnp.maximum(y1 + b1_ref[...], 0.0)                        # (256, 32)

    # conv2 (32->64, k3, pad1, stride2) + ReLU:
    #   y2 = relu(b2 + sum_t (G2_t @ y1) @ W2_t)   — taps gathered on the MXU
    acc2 = jnp.zeros((g2_ref.shape[1], w2_ref.shape[2]), f32)      # (64, 64)
    for t in range(9):
        gathered = jnp.dot(g2_ref[t], y1, preferred_element_type=f32)       # (64, 32)
        acc2 = acc2 + jnp.dot(gathered, w2_ref[t], preferred_element_type=f32)
    y2 = jnp.maximum(acc2 + b2_ref[...], 0.0)                      # (64, 64)

    # conv3 (64->128, k3, pad1, stride2) + ReLU
    acc3 = jnp.zeros((g3_ref.shape[1], w3_ref.shape[2]), f32)      # (16, 128)
    for t in range(9):
        gathered = jnp.dot(g3_ref[t], y2, preferred_element_type=f32)       # (16, 64)
        acc3 = acc3 + jnp.dot(gathered, w3_ref[t], preferred_element_type=f32)
    y3 = jnp.maximum(acc3 + b3_ref[...], 0.0)                      # (16, 128)

    # AdaptiveAvgPool2d((1,1)) + Linear(128->10), fused while y3 is in VMEM
    pooled = jnp.mean(y3, axis=0, keepdims=True)                   # (1, 128)
    out = jnp.dot(pooled, wfc_ref[...], preferred_element_type=f32) + bfc_ref[...]
    o_ref[0] = out.astype(o_ref.dtype)                             # (1, 10)


# --------------------------- one-time preprocessing ------------------------- #

def _make_gather_mats(hin, win, stride):
    """0/1 matrices G[t] (Pout, Pin) that read tap t of a padded 3x3 conv."""
    hout = (hin + 2 - 3) // stride + 1
    wout = (win + 2 - 3) // stride + 1
    g = np.zeros((9, hout * wout, hin * win), np.float32)
    for kh in range(3):
        for kw in range(3):
            t = kh * 3 + kw
            for ho in range(hout):
                hi = ho * stride + kh - 1
                if hi < 0 or hi >= hin:
                    continue
                for wo in range(wout):
                    wi = wo * stride + kw - 1
                    if wi < 0 or wi >= win:
                        continue
                    g[t, ho * wout + wo, hi * win + wi] = 1.0
    return jnp.asarray(g), hout, wout


def prepare_params(params, h=16, w=16):
    """Hoisted weight re-layout + gather-matrix construction (done once)."""
    w1 = jnp.transpose(params["w1"], (2, 3, 1, 0)).reshape(9, 32)           # (9, 32)
    w2 = jnp.transpose(params["w2"], (2, 3, 1, 0)).reshape(9, 32, 64)       # (9, 32, 64)
    w3 = jnp.transpose(params["w3"], (2, 3, 1, 0)).reshape(9, 64, 128)      # (9, 64, 128)
    g2, h2, w2o = _make_gather_mats(h, w, stride=2)
    g3, _, _ = _make_gather_mats(h2, w2o, stride=2)
    return {
        "w1": w1, "b1": params["b1"].reshape(1, 32),
        "w2": w2, "b2": params["b2"].reshape(1, 64),
        "w3": w3, "b3": params["b3"].reshape(1, 128),
        "wfc": params["wfc"].T,                                             # (128, 10)
        "bfc": params["bfc"].reshape(1, 10),
        "g2": g2,                                                           # (9, 64, 256)
        "g3": g3,                                                           # (9, 16, 64)
    }


# ------------------------------- forward pass ------------------------------- #

def _im2col_conv1(x_nchw):
    # Cin == 1 so conv1 patches are tiny; cheap fused XLA glue feeding the kernel.
    n, _, h, w = x_nchw.shape
    x2d = x_nchw[:, 0]                                      # (N, H, W)
    xp = jnp.pad(x2d, ((0, 0), (1, 1), (1, 1)))
    cols = [xp[:, kh:kh + h, kw:kw + w] for kh in range(3) for kw in range(3)]
    return jnp.stack(cols, axis=-1).reshape(n, h * w, 9)    # (N, H*W, 9)


@jax.jit
def cnn_forward(x_nchw, prepped):
    n = x_nchw.shape[0]
    p1 = _im2col_conv1(x_nchw)                              # (N, 256, 9)
    P1 = p1.shape[1]
    P2, Pin2 = prepped["g2"].shape[1], prepped["g2"].shape[2]
    P3, Pin3 = prepped["g3"].shape[1], prepped["g3"].shape[2]

    out = pl.pallas_call(
        _fused_cnn_kernel,
        out_shape=jax.ShapeDtypeStruct((n, 1, 10), jnp.float32),
        grid_spec=pltpu.PrefetchScalarGridSpec(
            num_scalar_prefetch=0,
            grid=(n,),
            in_specs=[
                pl.BlockSpec((1, P1, 9), lambda i: (i, 0, 0)),      # conv1 patches
                pl.BlockSpec((9, 32), lambda i: (0, 0)),            # W1
                pl.BlockSpec((1, 32), lambda i: (0, 0)),            # b1
                pl.BlockSpec((9, P2, Pin2), lambda i: (0, 0, 0)),   # G2
                pl.BlockSpec((9, 32, 64), lambda i: (0, 0, 0)),     # W2
                pl.BlockSpec((1, 64), lambda i: (0, 0)),            # b2
                pl.BlockSpec((9, P3, Pin3), lambda i: (0, 0, 0)),   # G3
                pl.BlockSpec((9, 64, 128), lambda i: (0, 0, 0)),    # W3
                pl.BlockSpec((1, 128), lambda i: (0, 0)),           # b3
                pl.BlockSpec((128, 10), lambda i: (0, 0)),          # Wfc
                pl.BlockSpec((1, 10), lambda i: (0, 0)),            # bfc
            ],
            out_specs=pl.BlockSpec((1, 1, 10), lambda i: (i, 0, 0)),
        ),
        compiler_params=pltpu.CompilerParams(
            dimension_semantics=("parallel",)),   # batch across TCs on v7x
    )(p1, prepped["w1"], prepped["b1"],
      prepped["g2"], prepped["w2"], prepped["b2"],
      prepped["g3"], prepped["w3"], prepped["b3"],
      prepped["wfc"], prepped["bfc"])
    return out.reshape(n, 10)


# ------------------------------ Reference (check) ---------------------------- #

def reference_forward(x_nchw, params):
    def conv(x, w, b, stride):
        y = lax.conv_general_dilated(
            x, w, (stride, stride), ((1, 1), (1, 1)),
            dimension_numbers=("NCHW", "OIHW", "NCHW"))
        return y + b.reshape(1, -1, 1, 1)
    x1 = jnp.maximum(conv(x_nchw, params["w1"], params["b1"], 1), 0.0)
    x2 = jnp.maximum(conv(x1, params["w2"], params["b2"], 2), 0.0)
    x3 = jnp.maximum(conv(x2, params["w3"], params["b3"], 2), 0.0)
    x4 = jnp.mean(x3, axis=(2, 3))                          # (N, 128)
    return x4 @ params["wfc"].T + params["bfc"]


# --------------------------------- Main -------------------------------------- #

if __name__ == "__main__":
    key = jax.random.PRNGKey(0)
    ks = jax.random.split(key, 9)
    params = {
        # PyTorch-layout parameters (Cout, Cin, kH, kW) / (out, in).
        "w1": 0.1 * jax.random.normal(ks[0], (32, 1, 3, 3), jnp.float32),
        "b1": 0.1 * jax.random.normal(ks[1], (32,), jnp.float32),
        "w2": 0.05 * jax.random.normal(ks[2], (64, 32, 3, 3), jnp.float32),
        "b2": 0.1 * jax.random.normal(ks[3], (64,), jnp.float32),
        "w3": 0.05 * jax.random.normal(ks[4], (128, 64, 3, 3), jnp.float32),
        "b3": 0.1 * jax.random.normal(ks[5], (128,), jnp.float32),
        "wfc": 0.05 * jax.random.normal(ks[6], (10, 128), jnp.float32),
        "bfc": 0.1 * jax.random.normal(ks[7], (10,), jnp.float32),
    }
    x = jax.random.normal(ks[8], (2, 1, 16, 16), jnp.float32)   # NCHW, like PyTorch

    prepped = prepare_params(params, h=16, w=16)                # hoisted, one-time

    out = jax.block_until_ready(cnn_forward(x, prepped))
    ref = reference_forward(x, params)

    assert out.shape == (2, 10), out.shape
    assert jnp.allclose(out, ref, atol=1e-4, rtol=1e-4), (
        float(jnp.max(jnp.abs(out - ref))))
    print("KERNEL_OK")
</pallas_src>

<mosaic_0001>
module attributes {stable_mosaic.version = 11 : i64} {
  func.func @_fused_cnn_kernel(%arg0: i32, %arg1: memref<1x256x9xf32, #tpu.memory_space<vmem>>, %arg2: memref<9x32xf32, #tpu.memory_space<vmem>>, %arg3: memref<1x32xf32, #tpu.memory_space<vmem>>, %arg4: memref<9x64x256xf32, #tpu.memory_space<vmem>>, %arg5: memref<9x32x64xf32, #tpu.memory_space<vmem>>, %arg6: memref<1x64xf32, #tpu.memory_space<vmem>>, %arg7: memref<9x16x64xf32, #tpu.memory_space<vmem>>, %arg8: memref<9x64x128xf32, #tpu.memory_space<vmem>>, %arg9: memref<1x128xf32, #tpu.memory_space<vmem>>, %arg10: memref<128x10xf32, #tpu.memory_space<vmem>>, %arg11: memref<1x10xf32, #tpu.memory_space<vmem>>, %arg12: memref<1x1x10xf32, #tpu.memory_space<vmem>>) attributes {dimension_semantics = [#tpu.dimension_semantics<parallel>], iteration_bounds = array<i64: 2>, scalar_prefetch = 0 : i64, scratch_operands = 0 : i64, tpu.core_type = #tpu.core_type<tc>, window_params = [{transform_indices = @transform_0, window_bounds = array<i64: 1, 256, 9>}, {pipeline_mode = #tpu.pipeline_mode<synchronous>, transform_indices = @transform_1, window_bounds = array<i64: 9, 32>}, {pipeline_mode = #tpu.pipeline_mode<synchronous>, transform_indices = @transform_2, window_bounds = array<i64: 1, 32>}, {pipeline_mode = #tpu.pipeline_mode<synchronous>, transform_indices = @transform_3, window_bounds = array<i64: 9, 64, 256>}, {pipeline_mode = #tpu.pipeline_mode<synchronous>, transform_indices = @transform_4, window_bounds = array<i64: 9, 32, 64>}, {pipeline_mode = #tpu.pipeline_mode<synchronous>, transform_indices = @transform_5, window_bounds = array<i64: 1, 64>}, {pipeline_mode = #tpu.pipeline_mode<synchronous>, transform_indices = @transform_6, window_bounds = array<i64: 9, 16, 64>}, {pipeline_mode = #tpu.pipeline_mode<synchronous>, transform_indices = @transform_7, window_bounds = array<i64: 9, 64, 128>}, {pipeline_mode = #tpu.pipeline_mode<synchronous>, transform_indices = @transform_8, window_bounds = array<i64: 1, 128>}, {pipeline_mode = #tpu.pipeline_mode<synchronous>, transform_indices = @transform_9, window_bounds = array<i64: 128, 10>}, {pipeline_mode = #tpu.pipeline_mode<synchronous>, transform_indices = @transform_10, window_bounds = array<i64: 1, 10>}, {transform_indices = @transform_11, window_bounds = array<i64: 1, 1, 10>}]} {
    %c0 = arith.constant 0 : index
    %c0_0 = arith.constant 0 : index
    %c0_1 = arith.constant 0 : index
    %0 = vector.load %arg1[%c0, %c0_0, %c0_1] : memref<1x256x9xf32, #tpu.memory_space<vmem>>, vector<1x256x9xf32>
    %1 = vector.shape_cast %0 : vector<1x256x9xf32> to vector<256x9xf32>
    %c0_2 = arith.constant 0 : index
    %c0_3 = arith.constant 0 : index
    %2 = vector.load %arg2[%c0_2, %c0_3] : memref<9x32xf32, #tpu.memory_space<vmem>>, vector<9x32xf32>
    %cst = arith.constant dense<0.000000e+00> : vector<256x32xf32>
    %3 = tpu.matmul %1, %2, %cst {dimension_numbers = #tpu.dot_dimension_numbers<[1], [0], [0], [1], [0, 0, 1, 1], [], []>} : vector<256x9xf32>, vector<9x32xf32>, vector<256x32xf32> -> vector<256x32xf32>
    %c0_4 = arith.constant 0 : index
    %c0_5 = arith.constant 0 : index
    %4 = vector.load %arg3[%c0_4, %c0_5] : memref<1x32xf32, #tpu.memory_space<vmem>>, vector<1x32xf32>
    %5 = vector.broadcast %4 : vector<1x32xf32> to vector<256x32xf32>
    %6 = arith.addf %3, %5 : vector<256x32xf32>
    %cst_6 = arith.constant 0.000000e+00 : f32
    %7 = vector.broadcast %cst_6 : f32 to vector<256x32xf32>
    %8 = arith.maximumf %6, %7 : vector<256x32xf32>
    %cst_7 = arith.constant 0.000000e+00 : f32
    %9 = vector.broadcast %cst_7 : f32 to vector<64x64xf32>
    %c0_8 = arith.constant 0 : index
    %c0_9 = arith.constant 0 : index
    %c0_10 = arith.constant 0 : index
    %10 = vector.load %arg4[%c0_8, %c0_9, %c0_10] : memref<9x64x256xf32, #tpu.memory_space<vmem>>, vector<1x64x256xf32>
    %11 = vector.shape_cast %10 : vector<1x64x256xf32> to vector<64x256xf32>
    %cst_11 = arith.constant dense<0.000000e+00> : vector<64x32xf32>
    %12 = tpu.matmul %11, %8, %cst_11 {dimension_numbers = #tpu.dot_dimension_numbers<[1], [0], [0], [1], [0, 0, 1, 1], [], []>} : vector<64x256xf32>, vector<256x32xf32>, vector<64x32xf32> -> vector<64x32xf32>
    %c0_12 = arith.constant 0 : index
    %c0_13 = arith.constant 0 : index
    %c0_14 = arith.constant 0 : index
    %13 = vector.load %arg5[%c0_12, %c0_13, %c0_14] : memref<9x32x64xf32, #tpu.memory_space<vmem>>, vector<1x32x64xf32>
    %14 = vector.shape_cast %13 : vector<1x32x64xf32> to vector<32x64xf32>
    %cst_15 = arith.constant dense<0.000000e+00> : vector<64x64xf32>
    %15 = tpu.matmul %12, %14, %cst_15 {dimension_numbers = #tpu.dot_dimension_numbers<[1], [0], [0], [1], [0, 0, 1, 1], [], []>} : vector<64x32xf32>, vector<32x64xf32>, vector<64x64xf32> -> vector<64x64xf32>
    %16 = arith.addf %9, %15 : vector<64x64xf32>
    %c1 = arith.constant 1 : index
    %c0_16 = arith.constant 0 : index
    %c0_17 = arith.constant 0 : index
    %17 = vector.load %arg4[%c1, %c0_16, %c0_17] : memref<9x64x256xf32, #tpu.memory_space<vmem>>, vector<1x64x256xf32>
    %18 = vector.shape_cast %17 : vector<1x64x256xf32> to vector<64x256xf32>
    %cst_18 = arith.constant dense<0.000000e+00> : vector<64x32xf32>
    %19 = tpu.matmul %18, %8, %cst_18 {dimension_numbers = #tpu.dot_dimension_numbers<[1], [0], [0], [1], [0, 0, 1, 1], [], []>} : vector<64x256xf32>, vector<256x32xf32>, vector<64x32xf32> -> vector<64x32xf32>
    %c1_19 = arith.constant 1 : index
    %c0_20 = arith.constant 0 : index
    %c0_21 = arith.constant 0 : index
    %20 = vector.load %arg5[%c1_19, %c0_20, %c0_21] : memref<9x32x64xf32, #tpu.memory_space<vmem>>, vector<1x32x64xf32>
    %21 = vector.shape_cast %20 : vector<1x32x64xf32> to vector<32x64xf32>
    %cst_22 = arith.constant dense<0.000000e+00> : vector<64x64xf32>
    %22 = tpu.matmul %19, %21, %cst_22 {dimension_numbers = #tpu.dot_dimension_numbers<[1], [0], [0], [1], [0, 0, 1, 1], [], []>} : vector<64x32xf32>, vector<32x64xf32>, vector<64x64xf32> -> vector<64x64xf32>
    %23 = arith.addf %16, %22 : vector<64x64xf32>
    %c2 = arith.constant 2 : index
    %c0_23 = arith.constant 0 : index
    %c0_24 = arith.constant 0 : index
    %24 = vector.load %arg4[%c2, %c0_23, %c0_24] : memref<9x64x256xf32, #tpu.memory_space<vmem>>, vector<1x64x256xf32>
    %25 = vector.shape_cast %24 : vector<1x64x256xf32> to vector<64x256xf32>
    %cst_25 = arith.constant dense<0.000000e+00> : vector<64x32xf32>
    %26 = tpu.matmul %25, %8, %cst_25 {dimension_numbers = #tpu.dot_dimension_numbers<[1], [0], [0], [1], [0, 0, 1, 1], [], []>} : vector<64x256xf32>, vector<256x32xf32>, vector<64x32xf32> -> vector<64x32xf32>
    %c2_26 = arith.constant 2 : index
    %c0_27 = arith.constant 0 : index
    %c0_28 = arith.constant 0 : index
    %27 = vector.load %arg5[%c2_26, %c0_27, %c0_28] : memref<9x32x64xf32, #tpu.memory_space<vmem>>, vector<1x32x64xf32>
    %28 = vector.shape_cast %27 : vector<1x32x64xf32> to vector<32x64xf32>
    %cst_29 = arith.constant dense<0.000000e+00> : vector<64x64xf32>
    %29 = tpu.matmul %26, %28, %cst_29 {dimension_numbers = #tpu.dot_dimension_numbers<[1], [0], [0], [1], [0, 0, 1, 1], [], []>} : vector<64x32xf32>, vector<32x64xf32>, vector<64x64xf32> -> vector<64x64xf32>
    %30 = arith.addf %23, %29 : vector<64x64xf32>
    %c3 = arith.constant 3 : index
    %c0_30 = arith.constant 0 : index
    %c0_31 = arith.constant 0 : index
    %31 = vector.load %arg4[%c3, %c0_30, %c0_31] : memref<9x64x256xf32, #tpu.memory_space<vmem>>, vector<1x64x256xf32>
    %32 = vector.shape_cast %31 : vector<1x64x256xf32> to vector<64x256xf32>
    %cst_32 = arith.constant dense<0.000000e+00> : vector<64x32xf32>
    %33 = tpu.matmul %32, %8, %cst_32 {dimension_numbers = #tpu.dot_dimension_numbers<[1], [0], [0], [1], [0, 0, 1, 1], [], []>} : vector<64x256xf32>, vector<256x32xf32>, vector<64x32xf32> -> vector<64x32xf32>
    %c3_33 = arith.constant 3 : index
    %c0_34 = arith.constant 0 : index
    %c0_35 = arith.constant 0 : index
    %34 = vector.load %arg5[%c3_33, %c0_34, %c0_35] : memref<9x32x64xf32, #tpu.memory_space<vmem>>, vector<1x32x64xf32>
    %35 = vector.shape_cast %34 : vector<1x32x64xf32> to vector<32x64xf32>
    %cst_36 = arith.constant dense<0.000000e+00> : vector<64x64xf32>
    %36 = tpu.matmul %33, %35, %cst_36 {dimension_numbers = #tpu.dot_dimension_numbers<[1], [0], [0], [1], [0, 0, 1, 1], [], []>} : vector<64x32xf32>, vector<32x64xf32>, vector<64x64xf32> -> vector<64x64xf32>
    %37 = arith.addf %30, %36 : vector<64x64xf32>
    %c4 = arith.constant 4 : index
    %c0_37 = arith.constant 0 : index
    %c0_38 = arith.constant 0 : index
    %38 = vector.load %arg4[%c4, %c0_37, %c0_38] : memref<9x64x256xf32, #tpu.memory_space<vmem>>, vector<1x64x256xf32>
    %39 = vector.shape_cast %38 : vector<1x64x256xf32> to vector<64x256xf32>
    %cst_39 = arith.constant dense<0.000000e+00> : vector<64x32xf32>
    %40 = tpu.matmul %39, %8, %cst_39 {dimension_numbers = #tpu.dot_dimension_numbers<[1], [0], [0], [1], [0, 0, 1, 1], [], []>} : vector<64x256xf32>, vector<256x32xf32>, vector<64x32xf32> -> vector<64x32xf32>
    %c4_40 = arith.constant 4 : index
    %c0_41 = arith.constant 0 : index
    %c0_42 = arith.constant 0 : index
    %41 = vector.load %arg5[%c4_40, %c0_41, %c0_42] : memref<9x32x64xf32, #tpu.memory_space<vmem>>, vector<1x32x64xf32>
    %42 = vector.shape_cast %41 : vector<1x32x64xf32> to vector<32x64xf32>
    %cst_43 = arith.constant dense<0.000000e+00> : vector<64x64xf32>
    %43 = tpu.matmul %40, %42, %cst_43 {dimension_numbers = #tpu.dot_dimension_numbers<[1], [0], [0], [1], [0, 0, 1, 1], [], []>} : vector<64x32xf32>, vector<32x64xf32>, vector<64x64xf32> -> vector<64x64xf32>
    %44 = arith.addf %37, %43 : vector<64x64xf32>
    %c5 = arith.constant 5 : index
    %c0_44 = arith.constant 0 : index
    %c0_45 = arith.constant 0 : index
    %45 = vector.load %arg4[%c5, %c0_44, %c0_45] : memref<9x64x256xf32, #tpu.memory_space<vmem>>, vector<1x64x256xf32>
    %46 = vector.shape_cast %45 : vector<1x64x256xf32> to vector<64x256xf32>
    %cst_46 = arith.constant dense<0.000000e+00> : vector<64x32xf32>
    %47 = tpu.matmul %46, %8, %cst_46 {dimension_numbers = #tpu.dot_dimension_numbers<[1], [0], [0], [1], [0, 0, 1, 1], [], []>} : vector<64x256xf32>, vector<256x32xf32>, vector<64x32xf32> -> vector<64x32xf32>
    %c5_47 = arith.constant 5 : index
    %c0_48 = arith.constant 0 : index
    %c0_49 = arith.constant 0 : index
    %48 = vector.load %arg5[%c5_47, %c0_48, %c0_49] : memref<9x32x64xf32, #tpu.memory_space<vmem>>, vector<1x32x64xf32>
    %49 = vector.shape_cast %48 : vector<1x32x64xf32> to vector<32x64xf32>
    %cst_50 = arith.constant dense<0.000000e+00> : vector<64x64xf32>
    %50 = tpu.matmul %47, %49, %cst_50 {dimension_numbers = #tpu.dot_dimension_numbers<[1], [0], [0], [1], [0, 0, 1, 1], [], []>} : vector<64x32xf32>, vector<32x64xf32>, vector<64x64xf32> -> vector<64x64xf32>
    %51 = arith.addf %44, %50 : vector<64x64xf32>
    %c6 = arith.constant 6 : index
    %c0_51 = arith.constant 0 : index
    %c0_52 = arith.constant 0 : index
    %52 = vector.load %arg4[%c6, %c0_51, %c0_52] : memref<9x64x256xf32, #tpu.memory_space<vmem>>, vector<1x64x256xf32>
    %53 = vector.shape_cast %52 : vector<1x64x256xf32> to vector<64x256xf32>
    %cst_53 = arith.constant dense<0.000000e+00> : vector<64x32xf32>
    %54 = tpu.matmul %53, %8, %cst_53 {dimension_numbers = #tpu.dot_dimension_numbers<[1], [0], [0], [1], [0, 0, 1, 1], [], []>} : vector<64x256xf32>, vector<256x32xf32>, vector<64x32xf32> -> vector<64x32xf32>
    %c6_54 = arith.constant 6 : index
    %c0_55 = arith.constant 0 : index
    %c0_56 = arith.constant 0 : index
    %55 = vector.load %arg5[%c6_54, %c0_55, %c0_56] : memref<9x32x64xf32, #tpu.memory_space<vmem>>, vector<1x32x64xf32>
    %56 = vector.shape_cast %55 : vector<1x32x64xf32> to vector<32x64xf32>
    %cst_57 = arith.constant dense<0.000000e+00> : vector<64x64xf32>
    %57 = tpu.matmul %54, %56, %cst_57 {dimension_numbers = #tpu.dot_dimension_numbers<[1], [0], [0], [1], [0, 0, 1, 1], [], []>} : vector<64x32xf32>, vector<32x64xf32>, vector<64x64xf32> -> vector<64x64xf32>
    %58 = arith.addf %51, %57 : vector<64x64xf32>
    %c7 = arith.constant 7 : index
    %c0_58 = arith.constant 0 : index
    %c0_59 = arith.constant 0 : index
    %59 = vector.load %arg4[%c7, %c0_58, %c0_59] : memref<9x64x256xf32, #tpu.memory_space<vmem>>, vector<1x64x256xf32>
    %60 = vector.shape_cast %59 : vector<1x64x256xf32> to vector<64x256xf32>
    %cst_60 = arith.constant dense<0.000000e+00> : vector<64x32xf32>
    %61 = tpu.matmul %60, %8, %cst_60 {dimension_numbers = #tpu.dot_dimension_numbers<[1], [0], [0], [1], [0, 0, 1, 1], [], []>} : vector<64x256xf32>, vector<256x32xf32>, vector<64x32xf32> -> vector<64x32xf32>
    %c7_61 = arith.constant 7 : index
    %c0_62 = arith.constant 0 : index
    %c0_63 = arith.constant 0 : index
    %62 = vector.load %arg5[%c7_61, %c0_62, %c0_63] : memref<9x32x64xf32, #tpu.memory_space<vmem>>, vector<1x32x64xf32>
    %63 = vector.shape_cast %62 : vector<1x32x64xf32> to vector<32x64xf32>
    %cst_64 = arith.constant dense<0.000000e+00> : vector<64x64xf32>
    %64 = tpu.matmul %61, %63, %cst_64 {dimension_numbers = #tpu.dot_dimension_numbers<[1], [0], [0], [1], [0, 0, 1, 1], [], []>} : vector<64x32xf32>, vector<32x64xf32>, vector<64x64xf32> -> vector<64x64xf32>
    %65 = arith.addf %58, %64 : vector<64x64xf32>
    %c8 = arith.constant 8 : index
    %c0_65 = arith.constant 0 : index
    %c0_66 = arith.constant 0 : index
    %66 = vector.load %arg4[%c8, %c0_65, %c0_66] : memref<9x64x256xf32, #tpu.memory_space<vmem>>, vector<1x64x256xf32>
    %67 = vector.shape_cast %66 : vector<1x64x256xf32> to vector<64x256xf32>
    %cst_67 = arith.constant dense<0.000000e+00> : vector<64x32xf32>
    %68 = tpu.matmul %67, %8, %cst_67 {dimension_numbers = #tpu.dot_dimension_numbers<[1], [0], [0], [1], [0, 0, 1, 1], [], []>} : vector<64x256xf32>, vector<256x32xf32>, vector<64x32xf32> -> vector<64x32xf32>
    %c8_68 = arith.constant 8 : index
    %c0_69 = arith.constant 0 : index
    %c0_70 = arith.constant 0 : index
    %69 = vector.load %arg5[%c8_68, %c0_69, %c0_70] : memref<9x32x64xf32, #tpu.memory_space<vmem>>, vector<1x32x64xf32>
    %70 = vector.shape_cast %69 : vector<1x32x64xf32> to vector<32x64xf32>
    %cst_71 = arith.constant dense<0.000000e+00> : vector<64x64xf32>
    %71 = tpu.matmul %68, %70, %cst_71 {dimension_numbers = #tpu.dot_dimension_numbers<[1], [0], [0], [1], [0, 0, 1, 1], [], []>} : vector<64x32xf32>, vector<32x64xf32>, vector<64x64xf32> -> vector<64x64xf32>
    %72 = arith.addf %65, %71 : vector<64x64xf32>
    %c0_72 = arith.constant 0 : index
    %c0_73 = arith.constant 0 : index
    %73 = vector.load %arg6[%c0_72, %c0_73] : memref<1x64xf32, #tpu.memory_space<vmem>>, vector<1x64xf32>
    %74 = vector.broadcast %73 : vector<1x64xf32> to vector<64x64xf32>
    %75 = arith.addf %72, %74 : vector<64x64xf32>
    %cst_74 = arith.constant 0.000000e+00 : f32
    %76 = vector.broadcast %cst_74 : f32 to vector<64x64xf32>
    %77 = arith.maximumf %75, %76 : vector<64x64xf32>
    %cst_75 = arith.constant 0.000000e+00 : f32
    %78 = vector.broadcast %cst_75 : f32 to vector<16x128xf32>
    %c0_76 = arith.constant 0 : index
    %c0_77 = arith.constant 0 : index
    %c0_78 = arith.constant 0 : index
    %79 = vector.load %arg7[%c0_76, %c0_77, %c0_78] : memref<9x16x64xf32, #tpu.memory_space<vmem>>, vector<1x16x64xf32>
    %80 = vector.shape_cast %79 : vector<1x16x64xf32> to vector<16x64xf32>
    %cst_79 = arith.constant dense<0.000000e+00> : vector<16x64xf32>
    %81 = tpu.matmul %80, %77, %cst_79 {dimension_numbers = #tpu.dot_dimension_numbers<[1], [0], [0], [1], [0, 0, 1, 1], [], []>} : vector<16x64xf32>, vector<64x64xf32>, vector<16x64xf32> -> vector<16x64xf32>
    %c0_80 = arith.constant 0 : index
    %c0_81 = arith.constant 0 : index
    %c0_82 = arith.constant 0 : index
    %82 = vector.load %arg8[%c0_80, %c0_81, %c0_82] : memref<9x64x128xf32, #tpu.memory_space<vmem>>, vector<1x64x128xf32>
    %83 = vector.shape_cast %82 : vector<1x64x128xf32> to vector<64x128xf32>
    %cst_83 = arith.constant dense<0.000000e+00> : vector<16x128xf32>
    %84 = tpu.matmul %81, %83, %cst_83 {dimension_numbers = #tpu.dot_dimension_numbers<[1], [0], [0], [1], [0, 0, 1, 1], [], []>} : vector<16x64xf32>, vector<64x128xf32>, vector<16x128xf32> -> vector<16x128xf32>
    %85 = arith.addf %78, %84 : vector<16x128xf32>
    %c1_84 = arith.constant 1 : index
    %c0_85 = arith.constant 0 : index
    %c0_86 = arith.constant 0 : index
    %86 = vector.load %arg7[%c1_84, %c0_85, %c0_86] : memref<9x16x64xf32, #tpu.memory_space<vmem>>, vector<1x16x64xf32>
    %87 = vector.shape_cast %86 : vector<1x16x64xf32> to vector<16x64xf32>
    %cst_87 = arith.constant dense<0.000000e+00> : vector<16x64xf32>
    %88 = tpu.matmul %87, %77, %cst_87 {dimension_numbers = #tpu.dot_dimension_numbers<[1], [0], [0], [1], [0, 0, 1, 1], [], []>} : vector<16x64xf32>, vector<64x64xf32>, vector<16x64xf32> -> vector<16x64xf32>
    %c1_88 = arith.constant 1 : index
    %c0_89 = arith.constant 0 : index
    %c0_90 = arith.constant 0 : index
    %89 = vector.load %arg8[%c1_88, %c0_89, %c0_90] : memref<9x64x128xf32, #tpu.memory_space<vmem>>, vector<1x64x128xf32>
    %90 = vector.shape_cast %89 : vector<1x64x128xf32> to vector<64x128xf32>
    %cst_91 = arith.constant dense<0.000000e+00> : vector<16x128xf32>
    %91 = tpu.matmul %88, %90, %cst_91 {dimension_numbers = #tpu.dot_dimension_numbers<[1], [0], [0], [1], [0, 0, 1, 1], [], []>} : vector<16x64xf32>, vector<64x128xf32>, vector<16x128xf32> -> vector<16x128xf32>
    %92 = arith.addf %85, %91 : vector<16x128xf32>
    %c2_92 = arith.constant 2 : index
    %c0_93 = arith.constant 0 : index
    %c0_94 = arith.constant 0 : index
    %93 = vector.load %arg7[%c2_92, %c0_93, %c0_94] : memref<9x16x64xf32, #tpu.memory_space<vmem>>, vector<1x16x64xf32>
    %94 = vector.shape_cast %93 : vector<1x16x64xf32> to vector<16x64xf32>
    %cst_95 = arith.constant dense<0.000000e+00> : vector<16x64xf32>
    %95 = tpu.matmul %94, %77, %cst_95 {dimension_numbers = #tpu.dot_dimension_numbers<[1], [0], [0], [1], [0, 0, 1, 1], [], []>} : vector<16x64xf32>, vector<64x64xf32>, vector<16x64xf32> -> vector<16x64xf32>
    %c2_96 = arith.constant 2 : index
    %c0_97 = arith.constant 0 : index
    %c0_98 = arith.constant 0 : index
    %96 = vector.load %arg8[%c2_96, %c0_97, %c0_98] : memref<9x64x128xf32, #tpu.memory_space<vmem>>, vector<1x64x128xf32>
    %97 = vector.shape_cast %96 : vector<1x64x128xf32> to vector<64x128xf32>
    %cst_99 = arith.constant dense<0.000000e+00> : vector<16x128xf32>
    %98 = tpu.matmul %95, %97, %cst_99 {dimension_numbers = #tpu.dot_dimension_numbers<[1], [0], [0], [1], [0, 0, 1, 1], [], []>} : vector<16x64xf32>, vector<64x128xf32>, vector<16x128xf32> -> vector<16x128xf32>
    %99 = arith.addf %92, %98 : vector<16x128xf32>
    %c3_100 = arith.constant 3 : index
    %c0_101 = arith.constant 0 : index
    %c0_102 = arith.constant 0 : index
    %100 = vector.load %arg7[%c3_100, %c0_101, %c0_102] : memref<9x16x64xf32, #tpu.memory_space<vmem>>, vector<1x16x64xf32>
    %101 = vector.shape_cast %100 : vector<1x16x64xf32> to vector<16x64xf32>
    %cst_103 = arith.constant dense<0.000000e+00> : vector<16x64xf32>
    %102 = tpu.matmul %101, %77, %cst_103 {dimension_numbers = #tpu.dot_dimension_numbers<[1], [0], [0], [1], [0, 0, 1, 1], [], []>} : vector<16x64xf32>, vector<64x64xf32>, vector<16x64xf32> -> vector<16x64xf32>
    %c3_104 = arith.constant 3 : index
    %c0_105 = arith.constant 0 : index
    %c0_106 = arith.constant 0 : index
    %103 = vector.load %arg8[%c3_104, %c0_105, %c0_106] : memref<9x64x128xf32, #tpu.memory_space<vmem>>, vector<1x64x128xf32>
    %104 = vector.shape_cast %103 : vector<1x64x128xf32> to vector<64x128xf32>
    %cst_107 = arith.constant dense<0.000000e+00> : vector<16x128xf32>
    %105 = tpu.matmul %102, %104, %cst_107 {dimension_numbers = #tpu.dot_dimension_numbers<[1], [0], [0], [1], [0, 0, 1, 1], [], []>} : vector<16x64xf32>, vector<64x128xf32>, vector<16x128xf32> -> vector<16x128xf32>
    %106 = arith.addf %99, %105 : vector<16x128xf32>
    %c4_108 = arith.constant 4 : index
    %c0_109 = arith.constant 0 : index
    %c0_110 = arith.constant 0 : index
    %107 = vector.load %arg7[%c4_108, %c0_109, %c0_110] : memref<9x16x64xf32, #tpu.memory_space<vmem>>, vector<1x16x64xf32>
    %108 = vector.shape_cast %107 : vector<1x16x64xf32> to vector<16x64xf32>
    %cst_111 = arith.constant dense<0.000000e+00> : vector<16x64xf32>
    %109 = tpu.matmul %108, %77, %cst_111 {dimension_numbers = #tpu.dot_dimension_numbers<[1], [0], [0], [1], [0, 0, 1, 1], [], []>} : vector<16x64xf32>, vector<64x64xf32>, vector<16x64xf32> -> vector<16x64xf32>
    %c4_112 = arith.constant 4 : index
    %c0_113 = arith.constant 0 : index
    %c0_114 = arith.constant 0 : index
    %110 = vector.load %arg8[%c4_112, %c0_113, %c0_114] : memref<9x64x128xf32, #tpu.memory_space<vmem>>, vector<1x64x128xf32>
    %111 = vector.shape_cast %110 : vector<1x64x128xf32> to vector<64x128xf32>
    %cst_115 = arith.constant dense<0.000000e+00> : vector<16x128xf32>
    %112 = tpu.matmul %109, %111, %cst_115 {dimension_numbers = #tpu.dot_dimension_numbers<[1], [0], [0], [1], [0, 0, 1, 1], [], []>} : vector<16x64xf32>, vector<64x128xf32>, vector<16x128xf32> -> vector<16x128xf32>
    %113 = arith.addf %106, %112 : vector<16x128xf32>
    %c5_116 = arith.constant 5 : index
    %c0_117 = arith.constant 0 : index
    %c0_118 = arith.constant 0 : index
    %114 = vector.load %arg7[%c5_116, %c0_117, %c0_118] : memref<9x16x64xf32, #tpu.memory_space<vmem>>, vector<1x16x64xf32>
    %115 = vector.shape_cast %114 : vector<1x16x64xf32> to vector<16x64xf32>
    %cst_119 = arith.constant dense<0.000000e+00> : vector<16x64xf32>
    %116 = tpu.matmul %115, %77, %cst_119 {dimension_numbers = #tpu.dot_dimension_numbers<[1], [0], [0], [1], [0, 0, 1, 1], [], []>} : vector<16x64xf32>, vector<64x64xf32>, vector<16x64xf32> -> vector<16x64xf32>
    %c5_120 = arith.constant 5 : index
    %c0_121 = arith.constant 0 : index
    %c0_122 = arith.constant 0 : index
    %117 = vector.load %arg8[%c5_120, %c0_121, %c0_122] : memref<9x64x128xf32, #tpu.memory_space<vmem>>, vector<1x64x128xf32>
    %118 = vector.shape_cast %117 : vector<1x64x128xf32> to vector<64x128xf32>
    %cst_123 = arith.constant dense<0.000000e+00> : vector<16x128xf32>
    %119 = tpu.matmul %116, %118, %cst_123 {dimension_numbers = #tpu.dot_dimension_numbers<[1], [0], [0], [1], [0, 0, 1, 1], [], []>} : vector<16x64xf32>, vector<64x128xf32>, vector<16x128xf32> -> vector<16x128xf32>
    %120 = arith.addf %113, %119 : vector<16x128xf32>
    %c6_124 = arith.constant 6 : index
    %c0_125 = arith.constant 0 : index
    %c0_126 = arith.constant 0 : index
    %121 = vector.load %arg7[%c6_124, %c0_125, %c0_126] : memref<9x16x64xf32, #tpu.memory_space<vmem>>, vector<1x16x64xf32>
    %122 = vector.shape_cast %121 : vector<1x16x64xf32> to vector<16x64xf32>
    %cst_127 = arith.constant dense<0.000000e+00> : vector<16x64xf32>
    %123 = tpu.matmul %122, %77, %cst_127 {dimension_numbers = #tpu.dot_dimension_numbers<[1], [0], [0], [1], [0, 0, 1, 1], [], []>} : vector<16x64xf32>, vector<64x64xf32>, vector<16x64xf32> -> vector<16x64xf32>
    %c6_128 = arith.constant 6 : index
    %c0_129 = arith.constant 0 : index
    %c0_130 = arith.constant 0 : index
    %124 = vector.load %arg8[%c6_128, %c0_129, %c0_130] : memref<9x64x128xf32, #tpu.memory_space<vmem>>, vector<1x64x128xf32>
    %125 = vector.shape_cast %124 : vector<1x64x128xf32> to vector<64x128xf32>
    %cst_131 = arith.constant dense<0.000000e+00> : vector<16x128xf32>
    %126 = tpu.matmul %123, %125, %cst_131 {dimension_numbers = #tpu.dot_dimension_numbers<[1], [0], [0], [1], [0, 0, 1, 1], [], []>} : vector<16x64xf32>, vector<64x128xf32>, vector<16x128xf32> -> vector<16x128xf32>
    %127 = arith.addf %120, %126 : vector<16x128xf32>
    %c7_132 = arith.constant 7 : index
    %c0_133 = arith.constant 0 : index
    %c0_134 = arith.constant 0 : index
    %128 = vector.load %arg7[%c7_132, %c0_133, %c0_134] : memref<9x16x64xf32, #tpu.memory_space<vmem>>, vector<1x16x64xf32>
    %129 = vector.shape_cast %128 : vector<1x16x64xf32> to vector<16x64xf32>
    %cst_135 = arith.constant dense<0.000000e+00> : vector<16x64xf32>
    %130 = tpu.matmul %129, %77, %cst_135 {dimension_numbers = #tpu.dot_dimension_numbers<[1], [0], [0], [1], [0, 0, 1, 1], [], []>} : vector<16x64xf32>, vector<64x64xf32>, vector<16x64xf32> -> vector<16x64xf32>
    %c7_136 = arith.constant 7 : index
    %c0_137 = arith.constant 0 : index
    %c0_138 = arith.constant 0 : index
    %131 = vector.load %arg8[%c7_136, %c0_137, %c0_138] : memref<9x64x128xf32, #tpu.memory_space<vmem>>, vector<1x64x128xf32>
    %132 = vector.shape_cast %131 : vector<1x64x128xf32> to vector<64x128xf32>
    %cst_139 = arith.constant dense<0.000000e+00> : vector<16x128xf32>
    %133 = tpu.matmul %130, %132, %cst_139 {dimension_numbers = #tpu.dot_dimension_numbers<[1], [0], [0], [1], [0, 0, 1, 1], [], []>} : vector<16x64xf32>, vector<64x128xf32>, vector<16x128xf32> -> vector<16x128xf32>
    %134 = arith.addf %127, %133 : vector<16x128xf32>
    %c8_140 = arith.constant 8 : index
    %c0_141 = arith.constant 0 : index
    %c0_142 = arith.constant 0 : index
    %135 = vector.load %arg7[%c8_140, %c0_141, %c0_142] : memref<9x16x64xf32, #tpu.memory_space<vmem>>, vector<1x16x64xf32>
    %136 = vector.shape_cast %135 : vector<1x16x64xf32> to vector<16x64xf32>
    %cst_143 = arith.constant dense<0.000000e+00> : vector<16x64xf32>
    %137 = tpu.matmul %136, %77, %cst_143 {dimension_numbers = #tpu.dot_dimension_numbers<[1], [0], [0], [1], [0, 0, 1, 1], [], []>} : vector<16x64xf32>, vector<64x64xf32>, vector<16x64xf32> -> vector<16x64xf32>
    %c8_144 = arith.constant 8 : index
    %c0_145 = arith.constant 0 : index
    %c0_146 = arith.constant 0 : index
    %138 = vector.load %arg8[%c8_144, %c0_145, %c0_146] : memref<9x64x128xf32, #tpu.memory_space<vmem>>, vector<1x64x128xf32>
    %139 = vector.shape_cast %138 : vector<1x64x128xf32> to vector<64x128xf32>
    %cst_147 = arith.constant dense<0.000000e+00> : vector<16x128xf32>
    %140 = tpu.matmul %137, %139, %cst_147 {dimension_numbers = #tpu.dot_dimension_numbers<[1], [0], [0], [1], [0, 0, 1, 1], [], []>} : vector<16x64xf32>, vector<64x128xf32>, vector<16x128xf32> -> vector<16x128xf32>
    %141 = arith.addf %134, %140 : vector<16x128xf32>
    %c0_148 = arith.constant 0 : index
    %c0_149 = arith.constant 0 : index
    %142 = vector.load %arg9[%c0_148, %c0_149] : memref<1x128xf32, #tpu.memory_space<vmem>>, vector<1x128xf32>
    %143 = vector.broadcast %142 : vector<1x128xf32> to vector<16x128xf32>
    %144 = arith.addf %141, %143 : vector<16x128xf32>
    %cst_150 = arith.constant 0.000000e+00 : f32
    %145 = vector.broadcast %cst_150 : f32 to vector<16x128xf32>
    %146 = arith.maximumf %144, %145 : vector<16x128xf32>
    %cst_151 = arith.constant dense<0.000000e+00> : vector<128xf32>
    %147 = vector.multi_reduction <add>, %146, %cst_151 [0] : vector<16x128xf32> to vector<128xf32>
    %148 = vector.shape_cast %147 : vector<128xf32> to vector<1x128xf32>
    %cst_152 = arith.constant 1.600000e+01 : f32
    %149 = vector.broadcast %cst_152 : f32 to vector<1x128xf32>
    %150 = arith.divf %148, %149 : vector<1x128xf32>
    %c0_153 = arith.constant 0 : index
    %c0_154 = arith.constant 0 : index
    %151 = vector.load %arg10[%c0_153, %c0_154] : memref<128x10xf32, #tpu.memory_space<vmem>>, vector<128x10xf32>
    %cst_155 = arith.constant dense<0.000000e+00> : vector<1x10xf32>
    %152 = tpu.matmul %150, %151, %cst_155 {dimension_numbers = #tpu.dot_dimension_numbers<[1], [0], [0], [1], [0, 0, 1, 1], [], []>} : vector<1x128xf32>, vector<128x10xf32>, vector<1x10xf32> -> vector<1x10xf32>
    %c0_156 = arith.constant 0 : index
    %c0_157 = arith.constant 0 : index
    %153 = vector.load %arg11[%c0_156, %c0_157] : memref<1x10xf32, #tpu.memory_space<vmem>>, vector<1x10xf32>
    %154 = arith.addf %152, %153 : vector<1x10xf32>
    %c0_158 = arith.constant 0 : index
    %c0_159 = arith.constant 0 : index
    %c0_160 = arith.constant 0 : index
    %155 = vector.load %arg12[%c0_158, %c0_159, %c0_160] : memref<1x1x10xf32, #tpu.memory_space<vmem>>, vector<1x1x10xf32>
    %156 = vector.shape_cast %155 : vector<1x1x10xf32> to vector<1x10xf32>
    %157 = vector.shape_cast %154 : vector<1x10xf32> to vector<1x1x10xf32>
    tpu.vector_store %arg12[%c0_158, %c0_159, %c0_160], %157 {strides = array<i32>} : memref<1x1x10xf32, #tpu.memory_space<vmem>>, vector<1x1x10xf32>,
    return
  }
  func.func @transform_0(%arg0: i32) -> (i32, i32, i32) {
    %c0_i32 = arith.constant 0 : i32
    %c0_i32_0 = arith.constant 0 : i32
    %c0_i32_1 = arith.constant 0 : i32
    return %arg0, %c0_i32, %c0_i32_0 : i32, i32, i32
  }
  func.func @transform_1(%arg0: i32) -> (i32, i32) {
    %c0_i32 = arith.constant 0 : i32
    %c0_i32_0 = arith.constant 0 : i32
    %c0_i32_1 = arith.constant 0 : i32
    return %c0_i32, %c0_i32_0 : i32, i32
  }
  func.func @transform_2(%arg0: i32) -> (i32, i32) {
    %c0_i32 = arith.constant 0 : i32
    %c0_i32_0 = arith.constant 0 : i32
    %c0_i32_1 = arith.constant 0 : i32
    return %c0_i32, %c0_i32_0 : i32, i32
  }
  func.func @transform_3(%arg0: i32) -> (i32, i32, i32) {
    %c0_i32 = arith.constant 0 : i32
    %c0_i32_0 = arith.constant 0 : i32
    %c0_i32_1 = arith.constant 0 : i32
    %c0_i32_2 = arith.constant 0 : i32
    return %c0_i32, %c0_i32_0, %c0_i32_1 : i32, i32, i32
  }
  func.func @transform_4(%arg0: i32) -> (i32, i32, i32) {
    %c0_i32 = arith.constant 0 : i32
    %c0_i32_0 = arith.constant 0 : i32
    %c0_i32_1 = arith.constant 0 : i32
    %c0_i32_2 = arith.constant 0 : i32
    return %c0_i32, %c0_i32_0, %c0_i32_1 : i32, i32, i32
  }
  func.func @transform_5(%arg0: i32) -> (i32, i32) {
    %c0_i32 = arith.constant 0 : i32
    %c0_i32_0 = arith.constant 0 : i32
    %c0_i32_1 = arith.constant 0 : i32
    return %c0_i32, %c0_i32_0 : i32, i32
  }
  func.func @transform_6(%arg0: i32) -> (i32, i32, i32) {
    %c0_i32 = arith.constant 0 : i32
    %c0_i32_0 = arith.constant 0 : i32
    %c0_i32_1 = arith.constant 0 : i32
    %c0_i32_2 = arith.constant 0 : i32
    return %c0_i32, %c0_i32_0, %c0_i32_1 : i32, i32, i32
  }
  func.func @transform_7(%arg0: i32) -> (i32, i32, i32) {
    %c0_i32 = arith.constant 0 : i32
    %c0_i32_0 = arith.constant 0 : i32
    %c0_i32_1 = arith.constant 0 : i32
    %c0_i32_2 = arith.constant 0 : i32
    return %c0_i32, %c0_i32_0, %c0_i32_1 : i32, i32, i32
  }
  func.func @transform_8(%arg0: i32) -> (i32, i32) {
    %c0_i32 = arith.constant 0 : i32
    %c0_i32_0 = arith.constant 0 : i32
    %c0_i32_1 = arith.constant 0 : i32
    return %c0_i32, %c0_i32_0 : i32, i32
  }
  func.func @transform_9(%arg0: i32) -> (i32, i32) {
    %c0_i32 = arith.constant 0 : i32
    %c0_i32_0 = arith.constant 0 : i32
    %c0_i32_1 = arith.constant 0 : i32
    return %c0_i32, %c0_i32_0 : i32, i32
  }
  func.func @transform_10(%arg0: i32) -> (i32, i32) {
    %c0_i32 = arith.constant 0 : i32
    %c0_i32_0 = arith.constant 0 : i32
    %c0_i32_1 = arith.constant 0 : i32
    return %c0_i32, %c0_i32_0 : i32, i32
  }
  func.func @transform_11(%arg0: i32) -> (i32, i32, i32) {
    %c0_i32 = arith.constant 0 : i32
    %c0_i32_0 = arith.constant 0 : i32
    %c0_i32_1 = arith.constant 0 : i32
    return %arg0, %c0_i32, %c0_i32_0 : i32, i32, i32
  }
}

</mosaic_0001>

<llo_original>
// kernel: cnn_forward.1
$region0: #{cnn_forward.1}
  #allocation0 [shape = 'u32[]', space=smem, size = 0x4, offset = 0x4, fixed_abs, tag = 'smem constant byte address 0x4 - core index']
  #allocation1 [shape = 'u32[72,128]{1,0:T(1,128)}', space=vmem, size = 0x9000, scoped, tag = 'internal scratch']
  %s0 = inlined_call_operand.vmem [shape: f32[2,256,9], index: 0, kind: input, shape index: {}]
  %s1 = inlined_call_operand.vmem [shape: f32[9,32], index: 1, kind: input, shape index: {}]
  %s2 = inlined_call_operand.vmem [shape: f32[1,32], index: 2, kind: input, shape index: {}]
  %s3 = inlined_call_operand.hbm [shape: f32[9,64,256], index: 3, kind: input, shape index: {}]
  %s4 = inlined_call_operand.vmem [shape: f32[9,32,64], index: 4, kind: input, shape index: {}]
  %s5 = inlined_call_operand.vmem [shape: f32[1,64], index: 5, kind: input, shape index: {}]
  %s6 = inlined_call_operand.vmem [shape: f32[9,16,64], index: 6, kind: input, shape index: {}]
  %s7 = inlined_call_operand.vmem [shape: f32[9,64,128], index: 7, kind: input, shape index: {}]
  %s8 = inlined_call_operand.vmem [shape: f32[1,128], index: 8, kind: input, shape index: {}]
  %s9 = inlined_call_operand.vmem [shape: f32[128,10], index: 9, kind: input, shape index: {}]
  %s10 = inlined_call_operand.vmem [shape: f32[1,10], index: 10, kind: input, shape index: {}]
  %s11 = inlined_call_operand.hbm [shape: f32[2,1,10], index: 11, kind: output, shape index: {}]
  %s12 = sld [smem:[#allocation0]]
  $region81: #{cnn_forward.1} parent=0
    _
  %s14 = ssub.s32 1, %s12
  %s15 = scalar_select 0, %s14, %s12
  $region1: #{cnn_forward.1} parent=0
    #allocation2 [shape = 'u8[589824]{0}', space=vmem, size = 0x90000, scoped, tag = 'input window, operand 3, single buffered']
    #allocation3 [shape = 's32[2]{0}', space=sflag, size = 0x8, scoped, tag = 'scoped memory for cnn_forward.1']
    #allocation4 [shape = 's32[2]{0}', space=sflag, size = 0x8, scoped, tag = 'scoped memory for cnn_forward.1']
    #allocation5 [shape = 'u8[1024]{0}', space=vmem, size = 0x400, scoped, tag = 'output window, operand 0']
    %16 = vsyncpa [#allocation3], 0
    %17 = vsyncpa [#allocation4], 0
    %s18 = scalar_lea.sflag [#allocation4], 1
    %19 = vsyncpa %s18, 0
    loop: start=0, step=1, limit=4
    $region2: #{cnn_forward.1} parent=1 // loop_pre_header
      _
    $region3: #{cnn_forward.1} parent=1 // loop_header
      %s21 = sphi 0, %s25
      %p22 = scmp.ge.s32.totalorder %s21, 4
      %s31 = sphi 0, %s33
      %s34 = sphi 0, %s31
      %s35 = sphi 0, %s34
      %s51 = sphi 0, %s35
      %s55 = sphi 0, %s55
      %s57 = sphi 0, %s55
      %s58 = sphi 0, %s57
      %s72 = sphi 0, %s58
      %s76 = sphi 0, %s76
      %s78 = sphi 0, %s76
      %s79 = sphi 0, %s78
      %s93 = sphi 0, %s79
      %s97 = sphi 0, %s97
      %s99 = sphi 0, %s97
      %s100 = sphi 0, %s99
      %s114 = sphi 0, %s100
      %s118 = sphi 0, %s118
      %s120 = sphi 0, %s118
      %s121 = sphi 0, %s120
      %s135 = sphi 0, %s121
      %s139 = sphi 0, %s139
      %s141 = sphi 0, %s139
      %s142 = sphi 0, %s141
      %s156 = sphi 0, %s142
      %s160 = sphi 0, %s160
      %s162 = sphi 0, %s160
      %s163 = sphi 0, %s162
      %s177 = sphi 0, %s163
      %s181 = sphi 0, %s181
      %s183 = sphi 0, %s181
      %s184 = sphi 0, %s183
      %s198 = sphi 0, %s184
      %s202 = sphi 0, %s202
      %s204 = sphi 0, %s202
      %s205 = sphi 0, %s204
      %s219 = sphi 0, %s205
      %s223 = sphi 0, %s223
      %s225 = sphi 0, %s223
      %s226 = sphi 0, %s225
      %s240 = sphi 0, %s226
      %s244 = sphi 0, %s244
      %s246 = sphi 0, %s244
      %s247 = sphi 0, %s246
      %s261 = sphi 0, %s247
      %s267 = sphi 0, %s269
      %s270 = sphi 0, %s267
      %s271 = sphi 0, %s270
      %s287 = sphi 0, %s271
    $region4: #{cnn_forward.1} parent=1 // loop_header_branch
      %24 = sbr.rel (%p22) target = $region8
    $region5: #{cnn_forward.1} parent=1 // loop_body
      %s26 = ssub.s32 %s21, 1
      %s27 = ssub.s32 %s21, 2
      %s28 = sadd.s32 %s21, 1
      %s29 = ssub.s32 %s21, %s28
      %p30 = scmp.eq.s32.totalorder %s29, 0
      %s32 = sadd.s32 %s31, 1
      %s33 = scalar_select %p30, %s31, %s32
      %p36 = pneg %p30
      %p37 = scmp.eq.s32.totalorder %s21, 1
      %p38 = por %p36, %p37
      %p39 = scmp.ne.s32.totalorder %s31, %s34
      %p40 = scmp.eq.s32.totalorder %s21, 0
      %p41 = por %p39, %p40
      %p42 = scmp.ne.s32.totalorder %s31, %s34
      %p43 = scmp.eq.s32.totalorder %s26, 1
      %p44 = por %p42, %p43
      %p45 = scmp.ne.s32.totalorder %s34, %s35
      %p46 = scmp.eq.s32.totalorder %s26, 0
      %p47 = por %p45, %p46
      %p48 = scmp.ne.s32.totalorder %s34, %s35
      %p49 = scmp.eq.s32.totalorder %s27, 1
      %p50 = por %p48, %p49
      %p52 = scmp.ne.s32.totalorder %s35, %s51
      %p53 = scmp.eq.s32.totalorder %s27, 0
      %p54 = por %p52, %p53
      %s56 = sadd.s32 %s55, 1
      %p59 = scmp.eq.s32.totalorder %s21, 1
      %p60 = scmp.ne.s32.totalorder %s55, %s57
      %p61 = scmp.eq.s32.totalorder %s21, 0
      %p62 = por %p60, %p61
      %p63 = scmp.ne.s32.totalorder %s55, %s57
      %p64 = scmp.eq.s32.totalorder %s26, 1
      %p65 = por %p63, %p64
      %p66 = scmp.ne.s32.totalorder %s57, %s58
      %p67 = scmp.eq.s32.totalorder %s26, 0
      %p68 = por %p66, %p67
      %p69 = scmp.ne.s32.totalorder %s57, %s58
      %p70 = scmp.eq.s32.totalorder %s27, 1
      %p71 = por %p69, %p70
      %p73 = scmp.ne.s32.totalorder %s58, %s72
      %p74 = scmp.eq.s32.totalorder %s27, 0
      %p75 = por %p73, %p74
      %s77 = sadd.s32 %s76, 1
      %p80 = scmp.eq.s32.totalorder %s21, 1
      %p81 = scmp.ne.s32.totalorder %s76, %s78
      %p82 = scmp.eq.s32.totalorder %s21, 0
      %p83 = por %p81, %p82
      %p84 = scmp.ne.s32.totalorder %s76, %s78
      %p85 = scmp.eq.s32.totalorder %s26, 1
      %p86 = por %p84, %p85
      %p87 = scmp.ne.s32.totalorder %s78, %s79
      %p88 = scmp.eq.s32.totalorder %s26, 0
      %p89 = por %p87, %p88
      %p90 = scmp.ne.s32.totalorder %s78, %s79
      %p91 = scmp.eq.s32.totalorder %s27, 1
      %p92 = por %p90, %p91
      %p94 = scmp.ne.s32.totalorder %s79, %s93
      %p95 = scmp.eq.s32.totalorder %s27, 0
      %p96 = por %p94, %p95
      %s98 = sadd.s32 %s97, 1
      %p101 = scmp.eq.s32.totalorder %s21, 1
      %p102 = scmp.ne.s32.totalorder %s97, %s99
      %p103 = scmp.eq.s32.totalorder %s21, 0
      %p104 = por %p102, %p103
      %p105 = scmp.ne.s32.totalorder %s97, %s99
      %p106 = scmp.eq.s32.totalorder %s26, 1
      %p107 = por %p105, %p106
      %p108 = scmp.ne.s32.totalorder %s99, %s100
      %p109 = scmp.eq.s32.totalorder %s26, 0
      %p110 = por %p108, %p109
      %p111 = scmp.ne.s32.totalorder %s99, %s100
      %p112 = scmp.eq.s32.totalorder %s27, 1
      %p113 = por %p111, %p112
      %p115 = scmp.ne.s32.totalorder %s100, %s114
      %p116 = scmp.eq.s32.totalorder %s27, 0
      %p117 = por %p115, %p116
      %s119 = sadd.s32 %s118, 1
      %p122 = scmp.eq.s32.totalorder %s21, 1
      %p123 = scmp.ne.s32.totalorder %s118, %s120
      %p124 = scmp.eq.s32.totalorder %s21, 0
      %p125 = por %p123, %p124
      %p126 = scmp.ne.s32.totalorder %s118, %s120
      %p127 = scmp.eq.s32.totalorder %s26, 1
      %p128 = por %p126, %p127
      %p129 = scmp.ne.s32.totalorder %s120, %s121
      %p130 = scmp.eq.s32.totalorder %s26, 0
      %p131 = por %p129, %p130
      %p132 = scmp.ne.s32.totalorder %s120, %s121
      %p133 = scmp.eq.s32.totalorder %s27, 1
      %p134 = por %p132, %p133
      %p136 = scmp.ne.s32.totalorder %s121, %s135
      %p137 = scmp.eq.s32.totalorder %s27, 0
      %p138 = por %p136, %p137
      %s140 = sadd.s32 %s139, 1
      %p143 = scmp.eq.s32.totalorder %s21, 1
      %p144 = scmp.ne.s32.totalorder %s139, %s141
      %p145 = scmp.eq.s32.totalorder %s21, 0
      %p146 = por %p144, %p145
      %p147 = scmp.ne.s32.totalorder %s139, %s141
      %p148 = scmp.eq.s32.totalorder %s26, 1
      %p149 = por %p147, %p148
      %p150 = scmp.ne.s32.totalorder %s141, %s142
      %p151 = scmp.eq.s32.totalorder %s26, 0
      %p152 = por %p150, %p151
      %p153 = scmp.ne.s32.totalorder %s141, %s142
      %p154 = scmp.eq.s32.totalorder %s27, 1
      %p155 = por %p153, %p154
      %p157 = scmp.ne.s32.totalorder %s142, %s156
      %p158 = scmp.eq.s32.totalorder %s27, 0
      %p159 = por %p157, %p158
      %s161 = sadd.s32 %s160, 1
      %p164 = scmp.eq.s32.totalorder %s21, 1
      %p165 = scmp.ne.s32.totalorder %s160, %s162
      %p166 = scmp.eq.s32.totalorder %s21, 0
      %p167 = por %p165, %p166
      %p168 = scmp.ne.s32.totalorder %s160, %s162
      %p169 = scmp.eq.s32.totalorder %s26, 1
      %p170 = por %p168, %p169
      %p171 = scmp.ne.s32.totalorder %s162, %s163
      %p172 = scmp.eq.s32.totalorder %s26, 0
      %p173 = por %p171, %p172
      %p174 = scmp.ne.s32.totalorder %s162, %s163
      %p175 = scmp.eq.s32.totalorder %s27, 1
      %p176 = por %p174, %p175
      %p178 = scmp.ne.s32.totalorder %s163, %s177
      %p179 = scmp.eq.s32.totalorder %s27, 0
      %p180 = por %p178, %p179
      %s182 = sadd.s32 %s181, 1
      %p185 = scmp.eq.s32.totalorder %s21, 1
      %p186 = scmp.ne.s32.totalorder %s181, %s183
      %p187 = scmp.eq.s32.totalorder %s21, 0
      %p188 = por %p186, %p187
      %p189 = scmp.ne.s32.totalorder %s181, %s183
      %p190 = scmp.eq.s32.totalorder %s26, 1
      %p191 = por %p189, %p190
      %p192 = scmp.ne.s32.totalorder %s183, %s184
      %p193 = scmp.eq.s32.totalorder %s26, 0
      %p194 = por %p192, %p193
      %p195 = scmp.ne.s32.totalorder %s183, %s184
      %p196 = scmp.eq.s32.totalorder %s27, 1
      %p197 = por %p195, %p196
      %p199 = scmp.ne.s32.totalorder %s184, %s198
      %p200 = scmp.eq.s32.totalorder %s27, 0
      %p201 = por %p199, %p200
      %s203 = sadd.s32 %s202, 1
      %p206 = scmp.eq.s32.totalorder %s21, 1
      %p207 = scmp.ne.s32.totalorder %s202, %s204
      %p208 = scmp.eq.s32.totalorder %s21, 0
      %p209 = por %p207, %p208
      %p210 = scmp.ne.s32.totalorder %s202, %s204
      %p211 = scmp.eq.s32.totalorder %s26, 1
      %p212 = por %p210, %p211
      %p213 = scmp.ne.s32.totalorder %s204, %s205
      %p214 = scmp.eq.s32.totalorder %s26, 0
      %p215 = por %p213, %p214
      %p216 = scmp.ne.s32.totalorder %s204, %s205
      %p217 = scmp.eq.s32.totalorder %s27, 1
      %p218 = por %p216, %p217
      %p220 = scmp.ne.s32.totalorder %s205, %s219
      %p221 = scmp.eq.s32.totalorder %s27, 0
      %p222 = por %p220, %p221
      %s224 = sadd.s32 %s223, 1
      %p227 = scmp.eq.s32.totalorder %s21, 1
      %p228 = scmp.ne.s32.totalorder %s223, %s225
      %p229 = scmp.eq.s32.totalorder %s21, 0
      %p230 = por %p228, %p229
      %p231 = scmp.ne.s32.totalorder %s223, %s225
      %p232 = scmp.eq.s32.totalorder %s26, 1
      %p233 = por %p231, %p232
      %p234 = scmp.ne.s32.totalorder %s225, %s226
      %p235 = scmp.eq.s32.totalorder %s26, 0
      %p236 = por %p234, %p235
      %p237 = scmp.ne.s32.totalorder %s225, %s226
      %p238 = scmp.eq.s32.totalorder %s27, 1
      %p239 = por %p237, %p238
      %p241 = scmp.ne.s32.totalorder %s226, %s240
      %p242 = scmp.eq.s32.totalorder %s27, 0
      %p243 = por %p241, %p242
      %s245 = sadd.s32 %s244, 1
      %p248 = scmp.eq.s32.totalorder %s21, 1
      %p249 = scmp.ne.s32.totalorder %s244, %s246
      %p250 = scmp.eq.s32.totalorder %s21, 0
      %p251 = por %p249, %p250
      %p252 = scmp.ne.s32.totalorder %s244, %s246
      %p253 = scmp.eq.s32.totalorder %s26, 1
      %p254 = por %p252, %p253
      %p255 = scmp.ne.s32.totalorder %s246, %s247
      %p256 = scmp.eq.s32.totalorder %s26, 0
      %p257 = por %p255, %p256
      %p258 = scmp.ne.s32.totalorder %s246, %s247
      %p259 = scmp.eq.s32.totalorder %s27, 1
      %p260 = por %p258, %p259
      %p262 = scmp.ne.s32.totalorder %s247, %s261
      %p263 = scmp.eq.s32.totalorder %s27, 0
      %p264 = por %p262, %p263
      %s265 = ssub.s32 %s21, %s28
      %p266 = scmp.eq.s32.totalorder %s265, 0
      %s268 = sadd.s32 %s267, 1
      %s269 = scalar_select %p266, %s267, %s268
      %p272 = pneg %p266
      %p273 = scmp.eq.s32.totalorder %s21, 1
      %p274 = por %p272, %p273
      %p275 = scmp.ne.s32.totalorder %s267, %s270
      %p276 = scmp.eq.s32.totalorder %s21, 0
      %p277 = por %p275, %p276
      %p278 = scmp.ne.s32.totalorder %s267, %s270
      %p279 = scmp.eq.s32.totalorder %s26, 1
      %p280 = por %p278, %p279
      %p281 = scmp.ne.s32.totalorder %s270, %s271
      %p282 = scmp.eq.s32.totalorder %s26, 0
      %p283 = por %p281, %p282
      %p284 = scmp.ne.s32.totalorder %s270, %s271
      %p285 = scmp.eq.s32.totalorder %s27, 1
      %p286 = por %p284, %p285
      %p288 = scmp.ne.s32.totalorder %s271, %s287
      %p289 = scmp.eq.s32.totalorder %s27, 0
      %p290 = por %p288, %p289
      %p291 = scmp.le.s32.totalorder 1, %s21
      %p292 = scmp.lt.s32.totalorder %s21, 3
      %p293 = pnand %p291, %p292
      %p294 = pneg %p293
      // Predicated region
      $region9: #{cnn_forward.1} parent=5 // pred_check
        _
      $region10: #{cnn_forward.1} parent=5 // pred_check_branch
        %296 = sbr.rel (%p293) target = $region12
      $region11: #{cnn_forward.1} parent=5 // pred_region
        %s297 = ssub.s32 %s21, 1
        // Predicated region
        $region13: #{cnn_forward.1} parent=11 // pred_check
          %p298 = pneg %p68
        $region14: #{cnn_forward.1} parent=11 // pred_check_branch
          %300 = sbr.rel (%p298) target = $region16
        $region15: #{cnn_forward.1} parent=11 // pred_region
          _
        $region16: #{cnn_forward.1} parent=11 // pred_fallthru
          _
        // Predicated region
        $region17: #{cnn_forward.1} parent=11 // pred_check
          %p301 = pneg %p89
        $region18: #{cnn_forward.1} parent=11 // pred_check_branch
          %303 = sbr.rel (%p301) target = $region20
        $region19: #{cnn_forward.1} parent=11 // pred_region
          _
        $region20: #{cnn_forward.1} parent=11 // pred_fallthru
          _
        // Predicated region
        $region21: #{cnn_forward.1} parent=11 // pred_check
          %p304 = pneg %p110
        $region22: #{cnn_forward.1} parent=11 // pred_check_branch
          %306 = sbr.rel (%p304) target = $region24
        $region23: #{cnn_forward.1} parent=11 // pred_region
          %308 = vsyncadd [#allocation3], 0
          %s309 = sshll.u32 %s3, 4
          %s310 = int_to_ptr.hbm [resolvable:$true] %s309
          %s311 = sshll.u32 [#allocation2], 4
          %s312 = int_to_ptr.vmem [resolvable:$true] %s311
          %317 = dma.hbm_to_vmem [thread:$0]  %s310, 18432, %s312, [#allocation3], 256, 256, 16
        $region24: #{cnn_forward.1} parent=11 // pred_fallthru
          _
        // Predicated region
        $region25: #{cnn_forward.1} parent=11 // pred_check
          %p318 = pneg %p131
        $region26: #{cnn_forward.1} parent=11 // pred_check_branch
          %320 = sbr.rel (%p318) target = $region28
        $region27: #{cnn_forward.1} parent=11 // pred_region
          _
        $region28: #{cnn_forward.1} parent=11 // pred_fallthru
          _
        // Predicated region
        $region29: #{cnn_forward.1} parent=11 // pred_check
          %p321 = pneg %p152
        $region30: #{cnn_forward.1} parent=11 // pred_check_branch
          %323 = sbr.rel (%p321) target = $region32
        $region31: #{cnn_forward.1} parent=11 // pred_region
          _
        $region32: #{cnn_forward.1} parent=11 // pred_fallthru
          _
        // Predicated region
        $region33: #{cnn_forward.1} parent=11 // pred_check
          %p324 = pneg %p173
        $region34: #{cnn_forward.1} parent=11 // pred_check_branch
          %326 = sbr.rel (%p324) target = $region36
        $region35: #{cnn_forward.1} parent=11 // pred_region
          _
        $region36: #{cnn_forward.1} parent=11 // pred_fallthru
          _
        // Predicated region
        $region37: #{cnn_forward.1} parent=11 // pred_check
          %p327 = pneg %p194
        $region38: #{cnn_forward.1} parent=11 // pred_check_branch
          %329 = sbr.rel (%p327) target = $region40
        $region39: #{cnn_forward.1} parent=11 // pred_region
          _
        $region40: #{cnn_forward.1} parent=11 // pred_fallthru
          _
        // Predicated region
        $region41: #{cnn_forward.1} parent=11 // pred_check
          %p330 = pneg %p215
        $region42: #{cnn_forward.1} parent=11 // pred_check_branch
          %332 = sbr.rel (%p330) target = $region44
        $region43: #{cnn_forward.1} parent=11 // pred_region
          _
        $region44: #{cnn_forward.1} parent=11 // pred_fallthru
          _
        // Predicated region
        $region45: #{cnn_forward.1} parent=11 // pred_check
          %p333 = pneg %p236
        $region46: #{cnn_forward.1} parent=11 // pred_check_branch
          %335 = sbr.rel (%p333) target = $region48
        $region47: #{cnn_forward.1} parent=11 // pred_region
          _
        $region48: #{cnn_forward.1} parent=11 // pred_fallthru
          _
        // Predicated region
        $region49: #{cnn_forward.1} parent=11 // pred_check
          %p336 = pneg %p257
        $region50: #{cnn_forward.1} parent=11 // pred_check_branch
          %338 = sbr.rel (%p336) target = $region52
        $region51: #{cnn_forward.1} parent=11 // pred_region
          _
        $region52: #{cnn_forward.1} parent=11 // pred_fallthru
          _
      $region12: #{cnn_forward.1} parent=5 // pred_fallthru
        _
      %p339 = scmp.lt.s32.totalorder %s21, 2
      // Predicated region
      $region53: #{cnn_forward.1} parent=5 // pred_check
        %p340 = pneg %p339
      $region54: #{cnn_forward.1} parent=5 // pred_check_branch
        %342 = sbr.rel (%p340) target = $region56
      $region55: #{cnn_forward.1} parent=5 // pred_region
        // Predicated region
        $region57: #{cnn_forward.1} parent=55 // pred_check
          %p343 = pneg %p41
        $region58: #{cnn_forward.1} parent=55 // pred_check_branch
          %345 = sbr.rel (%p343) target = $region60
        $region59: #{cnn_forward.1} parent=55 // pred_region
          %p346 = scmp.lt.s32.totalorder %s21, 1
          %s347 = scalar_select %p346, %s21, 1
          %s348 = smul.addr %s347, 32
          %s349 = smul.addr %s348, 8
          %s350 = scalar_lea.vmem %s0, %s349
        $region60: #{cnn_forward.1} parent=55 // pred_fallthru
          _
      $region56: #{cnn_forward.1} parent=5 // pred_fallthru
        _
      %p351 = scmp.le.s32.totalorder 1, %s21
      %p352 = scmp.lt.s32.totalorder %s21, 3
      %p353 = pnand %p351, %p352
      %p354 = pneg %p353
      // Predicated region
      $region61: #{cnn_forward.1} parent=5 // pred_check
        _
      $region62: #{cnn_forward.1} parent=5 // pred_check_branch
        %356 = sbr.rel (%p353) target = $region64
      $region63: #{cnn_forward.1} parent=5 // pred_region
        %s357 = ssub.s32 %s21, 1
        // Predicated region
        $region65: #{cnn_forward.1} parent=63 // pred_check
          %p358 = pneg %p110
        $region66: #{cnn_forward.1} parent=63 // pred_check_branch
          %360 = sbr.rel (%p358) target = $region68
        $region67: #{cnn_forward.1} parent=63 // pred_region
          %362 = dma.done [#allocation3], 18432
        $region68: #{cnn_forward.1} parent=63 // pred_fallthru
          _
        %p363 = scmp.lt.s32.totalorder %s26, 1
        %s364 = scalar_select %p363, %s26, 1
        %s365 = smul.addr %s364, 32
        %s366 = smul.addr %s365, 8
        %s367 = scalar_lea.vmem %s0, %s366
        %p368 = pneg %p47
        %p369 = pneg %p44
        %p370 = pneg %p68
        %p371 = pneg %p65
        %p372 = pneg %p89
        %p373 = pneg %p86
        %p374 = pneg %p110
        %p375 = pneg %p107
        %p376 = pneg %p131
        %p377 = pneg %p128
        %p378 = pneg %p152
        %p379 = pneg %p149
        %p380 = pneg %p173
        %p381 = pneg %p170
        %p382 = pneg %p194
        %p383 = pneg %p191
        %p384 = pneg %p215
        %p385 = pneg %p212
        %p386 = pneg %p236
        %p387 = pneg %p233
        %p388 = pneg %p257
        %p389 = pneg %p254
        %p390 = pneg %p283
        %p391 = pneg %p280
        %s392 = sand.u32 %s270, 1
        %s393 = scalar_lea.sflag [#allocation4], %s392
        %s394 = sand.u32 %s270, 1
        %s395 = scalar_lea.vmem [#allocation5], %s394
        %p396 = scmp.lt.s32.totalorder %s26, 1
        %s397 = scalar_select %p396, %s26, 1
        %s398 = smul.addr %s397, 32
        %s399 = smul.addr %s398, 8
        %s400 = scalar_lea.vmem %s0, %s399
        %v401 = vld [vmem:[%s400] sm:$0xff]
        %v402 = vld [vmem:[%s400 + $0x8] sm:$0xff]
        %v403 = vld [vmem:[%s400 + $0x10] sm:$0xff]
        %v404 = vld [vmem:[%s400 + $0x18] sm:$0xff]
        %v405 = vld [vmem:[%s400 + $0x20] sm:$0xff]
        %v406 = vld [vmem:[%s400 + $0x28] sm:$0xff]
        %v407 = vld [vmem:[%s400 + $0x30] sm:$0xff]
        %v408 = vld [vmem:[%s400 + $0x38] sm:$0xff]
        %v409 = vld [vmem:[%s400 + $0x40] sm:$0xff]
        %v410 = vld [vmem:[%s400 + $0x48] sm:$0xff]
        %v411 = vld [vmem:[%s400 + $0x50] sm:$0xff]
        %v412 = vld [vmem:[%s400 + $0x58] sm:$0xff]
        %v413 = vld [vmem:[%s400 + $0x60] sm:$0xff]
        %v414 = vld [vmem:[%s400 + $0x68] sm:$0xff]
        %v415 = vld [vmem:[%s400 + $0x70] sm:$0xff]
        %v416 = vld [vmem:[%s400 + $0x78] sm:$0xff]
        %v417 = vld [vmem:[%s400 + $0x80] sm:$0xff]
        %v418 = vld [vmem:[%s400 + $0x88] sm:$0xff]
        %v419 = vld [vmem:[%s400 + $0x90] sm:$0xff]
        %v420 = vld [vmem:[%s400 + $0x98] sm:$0xff]
        %v421 = vld [vmem:[%s400 + $0xa0] sm:$0xff]
        %v422 = vld [vmem:[%s400 + $0xa8] sm:$0xff]
        %v423 = vld [vmem:[%s400 + $0xb0] sm:$0xff]
        %v424 = vld [vmem:[%s400 + $0xb8] sm:$0xff]
        %v425 = vld [vmem:[%s400 + $0xc0] sm:$0xff]
        %v426 = vld [vmem:[%s400 + $0xc8] sm:$0xff]
        %v427 = vld [vmem:[%s400 + $0xd0] sm:$0xff]
        %v428 = vld [vmem:[%s400 + $0xd8] sm:$0xff]
        %v429 = vld [vmem:[%s400 + $0xe0] sm:$0xff]
        %v430 = vld [vmem:[%s400 + $0xe8] sm:$0xff]
        %v431 = vld [vmem:[%s400 + $0xf0] sm:$0xff]
        %v432 = vld [vmem:[%s400 + $0xf8] sm:$0xff]
        %v433 = vld [vmem:[%s1] sm:$0xff]
        %v434 = vld [vmem:[%s1 + $0x8] sm:$0x1]
        %v435 = vld [vmem:[%s2] sm:$0x1]
        %v437 = vperm.slane %v435, 0
        %vm439 = vcmask 72704
        %v441 = vsel %vm439, %v401, 0
        %v444 = vsel %vm439, %v402, 0
        %v447 = vsel %vm439, %v403, 0
        %v450 = vsel %vm439, %v404, 0
        %v453 = vsel %vm439, %v405, 0
        %v456 = vsel %vm439, %v406, 0
        %v459 = vsel %vm439, %v407, 0
        %v462 = vsel %vm439, %v408, 0
        %v465 = vsel %vm439, %v409, 0
        %v468 = vsel %vm439, %v410, 0
        %v471 = vsel %vm439, %v411, 0
        %v474 = vsel %vm439, %v412, 0
        %v477 = vsel %vm439, %v413, 0
        %v480 = vsel %vm439, %v414, 0
        %v483 = vsel %vm439, %v415, 0
        %v486 = vsel %vm439, %v416, 0
        %v489 = vsel %vm439, %v417, 0
        %v492 = vsel %vm439, %v418, 0
        %v495 = vsel %vm439, %v419, 0
        %v498 = vsel %vm439, %v420, 0
        %v501 = vsel %vm439, %v421, 0
        %v504 = vsel %vm439, %v422, 0
        %v507 = vsel %vm439, %v423, 0
        %v510 = vsel %vm439, %v424, 0
        %v513 = vsel %vm439, %v425, 0
        %v516 = vsel %vm439, %v426, 0
        %v519 = vsel %vm439, %v427, 0
        %v522 = vsel %vm439, %v428, 0
        %v525 = vsel %vm439, %v429, 0
        %v528 = vsel %vm439, %v430, 0
        %v531 = vsel %vm439, %v431, 0
        %v534 = vsel %vm439, %v432, 0
        %vm536 = vcmask 1040384
        %v538 = vsel %vm536, %v434, 0
        %540 = vmatpush.msra.mxu0 0.0
        %541 = vmatpush.msra.mxu0 0.0
        %542 = vmatpush.msra.mxu0 0.0
        %543 = vmatpush.msra.mxu0 0.0
        %544 = vmatpush.msra.mxu0 0.0
        %545 = vmatpush.msra.mxu0 0.0
        %546 = vmatpush.msra.mxu0 0.0
        %547 = vmatpush.msra.mxu0 0.0
        %548 = vmatpush.msra.mxu0 0.0
        %549 = vmatpush.msra.mxu0 0.0
        %550 = vmatpush.msra.mxu0 0.0
        %551 = vmatpush.msra.mxu0 0.0
        %552 = vmatpush.msra.mxu0 0.0
        %553 = vmatpush.msra.mxu0 0.0
        %554 = vmatpush.msra.mxu0 %v538
        %555 = vmatpush.msra.mxu0 %v433
        %556 = vmatmul.f32.gmra.mxu0 %v441
        %v557 = vpop.f32.mrf.mxu0
        %v558 = vadd.f32 %v437, %v557
        %559 = vmatmul.f32.gmra.mxu0 %v444
        %v560 = vpop.f32.mrf.mxu0
        %v561 = vadd.f32 %v437, %v560
        %562 = vmatmul.f32.gmra.mxu0 %v447
        %v563 = vpop.f32.mrf.mxu0
        %v564 = vadd.f32 %v437, %v563
        %565 = vmatmul.f32.gmra.mxu0 %v450
        %v566 = vpop.f32.mrf.mxu0
        %v567 = vadd.f32 %v437, %v566
        %568 = vmatmul.f32.gmra.mxu0 %v453
        %v569 = vpop.f32.mrf.mxu0
        %v570 = vadd.f32 %v437, %v569
        %571 = vmatmul.f32.gmra.mxu0 %v456
        %v572 = vpop.f32.mrf.mxu0
        %v573 = vadd.f32 %v437, %v572
        %574 = vmatmul.f32.gmra.mxu0 %v459
        %v575 = vpop.f32.mrf.mxu0
        %v576 = vadd.f32 %v437, %v575
        %577 = vmatmul.f32.gmra.mxu0 %v462
        %v578 = vpop.f32.mrf.mxu0
        %v579 = vadd.f32 %v437, %v578
        %580 = vmatmul.f32.gmra.mxu0 %v465
        %v581 = vpop.f32.mrf.mxu0
        %v582 = vadd.f32 %v437, %v581
        %583 = vmatmul.f32.gmra.mxu0 %v468
        %v584 = vpop.f32.mrf.mxu0
        %v585 = vadd.f32 %v437, %v584
        %586 = vmatmul.f32.gmra.mxu0 %v471
        %v587 = vpop.f32.mrf.mxu0
        %v588 = vadd.f32 %v437, %v587
        %589 = vmatmul.f32.gmra.mxu0 %v474
        %v590 = vpop.f32.mrf.mxu0
        %v591 = vadd.f32 %v437, %v590
        %592 = vmatmul.f32.gmra.mxu0 %v477
        %v593 = vpop.f32.mrf.mxu0
        %v594 = vadd.f32 %v437, %v593
        %595 = vmatmul.f32.gmra.mxu0 %v480
        %v596 = vpop.f32.mrf.mxu0
        %v597 = vadd.f32 %v437, %v596
        %598 = vmatmul.f32.gmra.mxu0 %v483
        %v599 = vpop.f32.mrf.mxu0
        %v600 = vadd.f32 %v437, %v599
        %601 = vmatmul.f32.gmra.mxu0 %v486
        %v602 = vpop.f32.mrf.mxu0
        %v603 = vadd.f32 %v437, %v602
        %604 = vmatmul.f32.gmra.mxu0 %v489
        %v605 = vpop.f32.mrf.mxu0
        %v606 = vadd.f32 %v437, %v605
        %607 = vmatmul.f32.gmra.mxu0 %v492
        %v608 = vpop.f32.mrf.mxu0
        %v609 = vadd.f32 %v437, %v608
        %610 = vmatmul.f32.gmra.mxu0 %v495
        %v611 = vpop.f32.mrf.mxu0
        %v612 = vadd.f32 %v437, %v611
        %613 = vmatmul.f32.gmra.mxu0 %v498
        %v614 = vpop.f32.mrf.mxu0
        %v615 = vadd.f32 %v437, %v614
        %616 = vmatmul.f32.gmra.mxu0 %v501
        %v617 = vpop.f32.mrf.mxu0
        %v618 = vadd.f32 %v437, %v617
        %619 = vmatmul.f32.gmra.mxu0 %v504
        %v620 = vpop.f32.mrf.mxu0
        %v621 = vadd.f32 %v437, %v620
        %622 = vmatmul.f32.gmra.mxu0 %v507
        %v623 = vpop.f32.mrf.mxu0
        %v624 = vadd.f32 %v437, %v623
        %625 = vmatmul.f32.gmra.mxu0 %v510
        %v626 = vpop.f32.mrf.mxu0
        %v627 = vadd.f32 %v437, %v626
        %628 = vmatmul.f32.gmra.mxu0 %v513
        %v629 = vpop.f32.mrf.mxu0
        %v630 = vadd.f32 %v437, %v629
        %631 = vmatmul.f32.gmra.mxu0 %v516
        %v632 = vpop.f32.mrf.mxu0
        %v633 = vadd.f32 %v437, %v632
        %634 = vmatmul.f32.gmra.mxu0 %v519
        %v635 = vpop.f32.mrf.mxu0
        %v636 = vadd.f32 %v437, %v635
        %637 = vmatmul.f32.gmra.mxu0 %v522
        %v638 = vpop.f32.mrf.mxu0
        %v639 = vadd.f32 %v437, %v638
        %640 = vmatmul.f32.gmra.mxu0 %v525
        %v641 = vpop.f32.mrf.mxu0
        %v642 = vadd.f32 %v437, %v641
        %643 = vmatmul.f32.gmra.mxu0 %v528
        %v644 = vpop.f32.mrf.mxu0
        %v645 = vadd.f32 %v437, %v644
        %646 = vmatmul.f32.gmra.mxu0 %v531
        %v647 = vpop.f32.mrf.mxu0
        %v648 = vadd.f32 %v437, %v647
        %649 = vmatmul.f32.gmra.mxu0 %v534
        %v650 = vpop.f32.mrf.mxu0
        %v651 = vadd.f32 %v437, %v650
        %652 = vdwg.mxu0
        %v653 = vmax.f32 %v558, 0.0
        %v654 = vmax.f32 %v561, 0.0
        %v655 = vmax.f32 %v564, 0.0
        %v656 = vmax.f32 %v567, 0.0
        %v657 = vmax.f32 %v570, 0.0
        %v658 = vmax.f32 %v573, 0.0
        %v659 = vmax.f32 %v576, 0.0
        %v660 = vmax.f32 %v579, 0.0
        %v661 = vmax.f32 %v582, 0.0
        %v662 = vmax.f32 %v585, 0.0
        %v663 = vmax.f32 %v588, 0.0
        %v664 = vmax.f32 %v591, 0.0
        %v665 = vmax.f32 %v594, 0.0
        %v666 = vmax.f32 %v597, 0.0
        %v667 = vmax.f32 %v600, 0.0
        %v668 = vmax.f32 %v603, 0.0
        %v669 = vmax.f32 %v606, 0.0
        %v670 = vmax.f32 %v609, 0.0
        %v671 = vmax.f32 %v612, 0.0
        %v672 = vmax.f32 %v615, 0.0
        %v673 = vmax.f32 %v618, 0.0
        %v674 = vmax.f32 %v621, 0.0
        %v675 = vmax.f32 %v624, 0.0
        %v676 = vmax.f32 %v627, 0.0
        %v677 = vmax.f32 %v630, 0.0
        %v678 = vmax.f32 %v633, 0.0
        %v679 = vmax.f32 %v636, 0.0
        %v680 = vmax.f32 %v639, 0.0
        %v681 = vmax.f32 %v642, 0.0
        %v682 = vmax.f32 %v645, 0.0
        %v683 = vmax.f32 %v648, 0.0
        %v684 = vmax.f32 %v651, 0.0
        %v685 = vld [vmem:[#allocation2] sm:$0xff]
        %v686 = vld [vmem:[#allocation2 + $0x8] sm:$0xff]
        %v687 = vld [vmem:[#allocation2 + $0x10] sm:$0xff]
        %v688 = vld [vmem:[#allocation2 + $0x18] sm:$0xff]
        %v689 = vld [vmem:[#allocation2 + $0x20] sm:$0xff]
        %v690 = vld [vmem:[#allocation2 + $0x28] sm:$0xff]
        %v691 = vld [vmem:[#allocation2 + $0x30] sm:$0xff]
        %v692 = vld [vmem:[#allocation2 + $0x38] sm:$0xff]
        %v693 = vld [vmem:[#allocation2 + $0x40] sm:$0xff]
        %v694 = vld [vmem:[#allocation2 + $0x48] sm:$0xff]
        %v695 = vld [vmem:[#allocation2 + $0x50] sm:$0xff]
        %v696 = vld [vmem:[#allocation2 + $0x58] sm:$0xff]
        %v697 = vld [vmem:[#allocation2 + $0x60] sm:$0xff]
        %v698 = vld [vmem:[#allocation2 + $0x68] sm:$0xff]
        %v699 = vld [vmem:[#allocation2 + $0x70] sm:$0xff]
        %v700 = vld [vmem:[#allocation2 + $0x78] sm:$0xff]
        %701 = vmatpush.msra.mxu0 %v668
        %702 = vmatpush.msra.mxu0 %v667
        %703 = vmatpush.msra.mxu0 %v666
        %704 = vmatpush.msra.mxu0 %v665
        %705 = vmatpush.msra.mxu0 %v664
        %706 = vmatpush.msra.mxu0 %v663
        %707 = vmatpush.msra.mxu0 %v662
        %708 = vmatpush.msra.mxu0 %v661
        %709 = vmatpush.msra.mxu0 %v660
        %710 = vmatpush.msra.mxu0 %v659
        %711 = vmatpush.msra.mxu0 %v658
        %712 = vmatpush.msra.mxu0 %v657
        %713 = vmatpush.msra.mxu0 %v656
        %714 = vmatpush.msra.mxu0 %v655
        %715 = vmatpush.msra.mxu0 %v654
        %716 = vmatpush.msra.mxu0 %v653
        %717 = vmatmul.f32.gmra.mxu0 %v685
        %v718 = vpop.f32.mrf.mxu0
        %v719 = vadd.f32 0.0, %v718
        %720 = vmatmul.f32.gmra.mxu0 %v687
        %v721 = vpop.f32.mrf.mxu0
        %v722 = vadd.f32 0.0, %v721
        %723 = vmatmul.f32.gmra.mxu0 %v689
        %v724 = vpop.f32.mrf.mxu0
        %v725 = vadd.f32 0.0, %v724
        %726 = vmatmul.f32.gmra.mxu0 %v691
        %v727 = vpop.f32.mrf.mxu0
        %v728 = vadd.f32 0.0, %v727
        %729 = vmatmul.f32.gmra.mxu0 %v693
        %v730 = vpop.f32.mrf.mxu0
        %v731 = vadd.f32 0.0, %v730
        %732 = vmatmul.f32.gmra.mxu0 %v695
        %v733 = vpop.f32.mrf.mxu0
        %v734 = vadd.f32 0.0, %v733
        %735 = vmatmul.f32.gmra.mxu0 %v697
        %v736 = vpop.f32.mrf.mxu0
        %v737 = vadd.f32 0.0, %v736
        %738 = vmatmul.f32.gmra.mxu0 %v699
        %v739 = vpop.f32.mrf.mxu0
        %v740 = vadd.f32 0.0, %v739
        %741 = vdwg.mxu0
        %742 = vmatpush.msra.mxu0 %v684
        %743 = vmatpush.msra.mxu0 %v683
        %744 = vmatpush.msra.mxu0 %v682
        %745 = vmatpush.msra.mxu0 %v681
        %746 = vmatpush.msra.mxu0 %v680
        %747 = vmatpush.msra.mxu0 %v679
        %748 = vmatpush.msra.mxu0 %v678
        %749 = vmatpush.msra.mxu0 %v677
        %750 = vmatpush.msra.mxu0 %v676
        %751 = vmatpush.msra.mxu0 %v675
        %752 = vmatpush.msra.mxu0 %v674
        %753 = vmatpush.msra.mxu0 %v673
        %754 = vmatpush.msra.mxu0 %v672
        %755 = vmatpush.msra.mxu0 %v671
        %756 = vmatpush.msra.mxu0 %v670
        %757 = vmatpush.msra.mxu0 %v669
        %758 = vmatmul.f32.gmra.mxu0 %v686
        %v759 = vpop.f32.mrf.mxu0
        %v760 = vadd.f32 %v719, %v759
        %761 = vmatmul.f32.gmra.mxu0 %v688
        %v762 = vpop.f32.mrf.mxu0
        %v763 = vadd.f32 %v722, %v762
        %764 = vmatmul.f32.gmra.mxu0 %v690
        %v765 = vpop.f32.mrf.mxu0
        %v766 = vadd.f32 %v725, %v765
        %767 = vmatmul.f32.gmra.mxu0 %v692
        %v768 = vpop.f32.mrf.mxu0
        %v769 = vadd.f32 %v728, %v768
        %770 = vmatmul.f32.gmra.mxu0 %v694
        %v771 = vpop.f32.mrf.mxu0
        %v772 = vadd.f32 %v731, %v771
        %773 = vmatmul.f32.gmra.mxu0 %v696
        %v774 = vpop.f32.mrf.mxu0
        %v775 = vadd.f32 %v734, %v774
        %776 = vmatmul.f32.gmra.mxu0 %v698
        %v777 = vpop.f32.mrf.mxu0
        %v778 = vadd.f32 %v737, %v777
        %779 = vmatmul.f32.gmra.mxu0 %v700
        %v780 = vpop.f32.mrf.mxu0
        %v781 = vadd.f32 %v740, %v780
        %782 = vdwg.mxu0
        %v783 = vld [vmem:[%s4] sm:$0xff]
        %v784 = vld [vmem:[%s4 + $0x8] sm:$0xff]
        %v785 = vld [vmem:[%s4 + $0x10] sm:$0xff]
        %v786 = vld [vmem:[%s4 + $0x18] sm:$0xff]
        %s787 = scalar_lea.vmem [#allocation2], 128
        %v788 = vld [vmem:[%s787] sm:$0xff]
        %v789 = vld [vmem:[%s787 + $0x8] sm:$0xff]
        %v790 = vld [vmem:[%s787 + $0x10] sm:$0xff]
        %v791 = vld [vmem:[%s787 + $0x18] sm:$0xff]
        %v792 = vld [vmem:[%s787 + $0x20] sm:$0xff]
        %v793 = vld [vmem:[%s787 + $0x28] sm:$0xff]
        %v794 = vld [vmem:[%s787 + $0x30] sm:$0xff]
        %v795 = vld [vmem:[%s787 + $0x38] sm:$0xff]
        %v796 = vld [vmem:[%s787 + $0x40] sm:$0xff]
        %v797 = vld [vmem:[%s787 + $0x48] sm:$0xff]
        %v798 = vld [vmem:[%s787 + $0x50] sm:$0xff]
        %v799 = vld [vmem:[%s787 + $0x58] sm:$0xff]
        %v800 = vld [vmem:[%s787 + $0x60] sm:$0xff]
        %v801 = vld [vmem:[%s787 + $0x68] sm:$0xff]
        %v802 = vld [vmem:[%s787 + $0x70] sm:$0xff]
        %v803 = vld [vmem:[%s787 + $0x78] sm:$0xff]
        %804 = vmatpush.msra.mxu0 %v668
        %805 = vmatpush.msra.mxu0 %v667
        %806 = vmatpush.msra.mxu0 %v666
        %807 = vmatpush.msra.mxu0 %v665
        %808 = vmatpush.msra.mxu0 %v664
        %809 = vmatpush.msra.mxu0 %v663
        %810 = vmatpush.msra.mxu0 %v662
        %811 = vmatpush.msra.mxu0 %v661
        %812 = vmatpush.msra.mxu0 %v660
        %813 = vmatpush.msra.mxu0 %v659
        %814 = vmatpush.msra.mxu0 %v658
        %815 = vmatpush.msra.mxu0 %v657
        %816 = vmatpush.msra.mxu0 %v656
        %817 = vmatpush.msra.mxu0 %v655
        %818 = vmatpush.msra.mxu0 %v654
        %819 = vmatpush.msra.mxu0 %v653
        %820 = vmatmul.f32.gmra.mxu0 %v788
        %v821 = vpop.f32.mrf.mxu0
        %v822 = vadd.f32 0.0, %v821
        %823 = vmatmul.f32.gmra.mxu0 %v790
        %v824 = vpop.f32.mrf.mxu0
        %v825 = vadd.f32 0.0, %v824
        %826 = vmatmul.f32.gmra.mxu0 %v792
        %v827 = vpop.f32.mrf.mxu0
        %v828 = vadd.f32 0.0, %v827
        %829 = vmatmul.f32.gmra.mxu0 %v794
        %v830 = vpop.f32.mrf.mxu0
        %v831 = vadd.f32 0.0, %v830
        %832 = vmatmul.f32.gmra.mxu0 %v796
        %v833 = vpop.f32.mrf.mxu0
        %v834 = vadd.f32 0.0, %v833
        %835 = vmatmul.f32.gmra.mxu0 %v798
        %v836 = vpop.f32.mrf.mxu0
        %v837 = vadd.f32 0.0, %v836
        %838 = vmatmul.f32.gmra.mxu0 %v800
        %v839 = vpop.f32.mrf.mxu0
        %v840 = vadd.f32 0.0, %v839
        %841 = vmatmul.f32.gmra.mxu0 %v802
        %v842 = vpop.f32.mrf.mxu0
        %v843 = vadd.f32 0.0, %v842
        %844 = vdwg.mxu0
        %845 = vmatpush.msra.mxu0 %v684
        %846 = vmatpush.msra.mxu0 %v683
        %847 = vmatpush.msra.mxu0 %v682
        %848 = vmatpush.msra.mxu0 %v681
        %849 = vmatpush.msra.mxu0 %v680
        %850 = vmatpush.msra.mxu0 %v679
        %851 = vmatpush.msra.mxu0 %v678
        %852 = vmatpush.msra.mxu0 %v677
        %853 = vmatpush.msra.mxu0 %v676
        %854 = vmatpush.msra.mxu0 %v675
        %855 = vmatpush.msra.mxu0 %v674
        %856 = vmatpush.msra.mxu0 %v673
        %857 = vmatpush.msra.mxu0 %v672
        %858 = vmatpush.msra.mxu0 %v671
        %859 = vmatpush.msra.mxu0 %v670
        %860 = vmatpush.msra.mxu0 %v669
        %861 = vmatmul.f32.gmra.mxu0 %v789
        %v862 = vpop.f32.mrf.mxu0
        %v863 = vadd.f32 %v822, %v862
        %864 = vmatmul.f32.gmra.mxu0 %v791
        %v865 = vpop.f32.mrf.mxu0
        %v866 = vadd.f32 %v825, %v865
        %867 = vmatmul.f32.gmra.mxu0 %v793
        %v868 = vpop.f32.mrf.mxu0
        %v869 = vadd.f32 %v828, %v868
        %870 = vmatmul.f32.gmra.mxu0 %v795
        %v871 = vpop.f32.mrf.mxu0
        %v872 = vadd.f32 %v831, %v871
        %873 = vmatmul.f32.gmra.mxu0 %v797
        %v874 = vpop.f32.mrf.mxu0
        %v875 = vadd.f32 %v834, %v874
        %876 = vmatmul.f32.gmra.mxu0 %v799
        %v877 = vpop.f32.mrf.mxu0
        %v878 = vadd.f32 %v837, %v877
        %879 = vmatmul.f32.gmra.mxu0 %v801
        %v880 = vpop.f32.mrf.mxu0
        %v881 = vadd.f32 %v840, %v880
        %882 = vmatmul.f32.gmra.mxu0 %v803
        %v883 = vpop.f32.mrf.mxu0
        %v884 = vadd.f32 %v843, %v883
        %885 = vdwg.mxu0
        %s886 = scalar_lea.vmem %s4, 32
        %v887 = vld [vmem:[%s886] sm:$0xff]
        %v888 = vld [vmem:[%s886 + $0x8] sm:$0xff]
        %v889 = vld [vmem:[%s886 + $0x10] sm:$0xff]
        %v890 = vld [vmem:[%s886 + $0x18] sm:$0xff]
        %vm891 = vcmask 261120
        %v893 = vsel %vm891, %v863, 0
        %v896 = vsel %vm891, %v866, 0
        %v899 = vsel %vm891, %v869, 0
        %v902 = vsel %vm891, %v872, 0
        %v905 = vsel %vm891, %v875, 0
        %v908 = vsel %vm891, %v878, 0
        %v911 = vsel %vm891, %v881, 0
        %v914 = vsel %vm891, %v884, 0
        %916 = vmatpush.msra.mxu0 0.0
        %917 = vmatpush.msra.mxu0 0.0
        %918 = vmatpush.msra.mxu0 0.0
        %919 = vmatpush.msra.mxu0 0.0
        %920 = vmatpush.msra.mxu0 0.0
        %921 = vmatpush.msra.mxu0 0.0
        %922 = vmatpush.msra.mxu0 0.0
        %923 = vmatpush.msra.mxu0 0.0
        %924 = vmatpush.msra.mxu0 0.0
        %925 = vmatpush.msra.mxu0 0.0
        %926 = vmatpush.msra.mxu0 0.0
        %927 = vmatpush.msra.mxu0 0.0
        %928 = vmatpush.msra.mxu0 %v890
        %929 = vmatpush.msra.mxu0 %v889
        %930 = vmatpush.msra.mxu0 %v888
        %931 = vmatpush.msra.mxu0 %v887
        %932 = vmatmul.f32.gmra.mxu0 %v893
        %v933 = vpop.f32.mrf.mxu0
        %v934 = vadd.f32 0.0, %v933
        %935 = vmatmul.f32.gmra.mxu0 %v896
        %v936 = vpop.f32.mrf.mxu0
        %v937 = vadd.f32 0.0, %v936
        %938 = vmatmul.f32.gmra.mxu0 %v899
        %v939 = vpop.f32.mrf.mxu0
        %v940 = vadd.f32 0.0, %v939
        %941 = vmatmul.f32.gmra.mxu0 %v902
        %v942 = vpop.f32.mrf.mxu0
        %v943 = vadd.f32 0.0, %v942
        %944 = vmatmul.f32.gmra.mxu0 %v905
        %v945 = vpop.f32.mrf.mxu0
        %v946 = vadd.f32 0.0, %v945
        %947 = vmatmul.f32.gmra.mxu0 %v908
        %v948 = vpop.f32.mrf.mxu0
        %v949 = vadd.f32 0.0, %v948
        %950 = vmatmul.f32.gmra.mxu0 %v911
        %v951 = vpop.f32.mrf.mxu0
        %v952 = vadd.f32 0.0, %v951
        %953 = vmatmul.f32.gmra.mxu0 %v914
        %v954 = vpop.f32.mrf.mxu0
        %v955 = vadd.f32 0.0, %v954
        %956 = vdwg.mxu0
        %v958 = vsel %vm891, %v760, 0
        %v961 = vsel %vm891, %v763, 0
        %v964 = vsel %vm891, %v766, 0
        %v967 = vsel %vm891, %v769, 0
        %v970 = vsel %vm891, %v772, 0
        %v973 = vsel %vm891, %v775, 0
        %v976 = vsel %vm891, %v778, 0
        %v979 = vsel %vm891, %v781, 0
        %981 = vmatpush.msra.mxu0 0.0
        %982 = vmatpush.msra.mxu0 0.0
        %983 = vmatpush.msra.mxu0 0.0
        %984 = vmatpush.msra.mxu0 0.0
        %985 = vmatpush.msra.mxu0 0.0
        %986 = vmatpush.msra.mxu0 0.0
        %987 = vmatpush.msra.mxu0 0.0
        %988 = vmatpush.msra.mxu0 0.0
        %989 = vmatpush.msra.mxu0 0.0
        %990 = vmatpush.msra.mxu0 0.0
        %991 = vmatpush.msra.mxu0 0.0
        %992 = vmatpush.msra.mxu0 0.0
        %993 = vmatpush.msra.mxu0 %v786
        %994 = vmatpush.msra.mxu0 %v785
        %995 = vmatpush.msra.mxu0 %v784
        %996 = vmatpush.msra.mxu0 %v783
        %997 = vmatmul.f32.gmra.mxu0 %v958
        %v998 = vpop.f32.mrf.mxu0
        %v999 = vadd.f32 %v934, %v998
        %1000 = vmatmul.f32.gmra.mxu0 %v961
        %v1001 = vpop.f32.mrf.mxu0
        %v1002 = vadd.f32 %v937, %v1001
        %1003 = vmatmul.f32.gmra.mxu0 %v964
        %v1004 = vpop.f32.mrf.mxu0
        %v1005 = vadd.f32 %v940, %v1004
        %1006 = vmatmul.f32.gmra.mxu0 %v967
        %v1007 = vpop.f32.mrf.mxu0
        %v1008 = vadd.f32 %v943, %v1007
        %1009 = vmatmul.f32.gmra.mxu0 %v970
        %v1010 = vpop.f32.mrf.mxu0
        %v1011 = vadd.f32 %v946, %v1010
        %1012 = vmatmul.f32.gmra.mxu0 %v973
        %v1013 = vpop.f32.mrf.mxu0
        %v1014 = vadd.f32 %v949, %v1013
        %1015 = vmatmul.f32.gmra.mxu0 %v976
        %v1016 = vpop.f32.mrf.mxu0
        %v1017 = vadd.f32 %v952, %v1016
        %1018 = vmatmul.f32.gmra.mxu0 %v979
        %v1019 = vpop.f32.mrf.mxu0
        %v1020 = vadd.f32 %v955, %v1019
        %1021 = vdwg.mxu0
        %s1022 = scalar_lea.vmem [#allocation2], 256
        %v1023 = vld [vmem:[%s1022] sm:$0xff]
        %v1024 = vld [vmem:[%s1022 + $0x8] sm:$0xff]
        %v1025 = vld [vmem:[%s1022 + $0x10] sm:$0xff]
        %v1026 = vld [vmem:[%s1022 + $0x18] sm:$0xff]
        %v1027 = vld [vmem:[%s1022 + $0x20] sm:$0xff]
        %v1028 = vld [vmem:[%s1022 + $0x28] sm:$0xff]
        %v1029 = vld [vmem:[%s1022 + $0x30] sm:$0xff]
        %v1030 = vld [vmem:[%s1022 + $0x38] sm:$0xff]
        %v1031 = vld [vmem:[%s1022 + $0x40] sm:$0xff]
        %v1032 = vld [vmem:[%s1022 + $0x48] sm:$0xff]
        %v1033 = vld [vmem:[%s1022 + $0x50] sm:$0xff]
        %v1034 = vld [vmem:[%s1022 + $0x58] sm:$0xff]
        %v1035 = vld [vmem:[%s1022 + $0x60] sm:$0xff]
        %v1036 = vld [vmem:[%s1022 + $0x68] sm:$0xff]
        %v1037 = vld [vmem:[%s1022 + $0x70] sm:$0xff]
        %v1038 = vld [vmem:[%s1022 + $0x78] sm:$0xff]
        %1039 = vmatpush.msra.mxu0 %v668
        %1040 = vmatpush.msra.mxu0 %v667
        %1041 = vmatpush.msra.mxu0 %v666
        %1042 = vmatpush.msra.mxu0 %v665
        %1043 = vmatpush.msra.mxu0 %v664
        %1044 = vmatpush.msra.mxu0 %v663
        %1045 = vmatpush.msra.mxu0 %v662
        %1046 = vmatpush.msra.mxu0 %v661
        %1047 = vmatpush.msra.mxu0 %v660
        %1048 = vmatpush.msra.mxu0 %v659
        %1049 = vmatpush.msra.mxu0 %v658
        %1050 = vmatpush.msra.mxu0 %v657
        %1051 = vmatpush.msra.mxu0 %v656
        %1052 = vmatpush.msra.mxu0 %v655
        %1053 = vmatpush.msra.mxu0 %v654
        %1054 = vmatpush.msra.mxu0 %v653
        %1055 = vmatmul.f32.gmra.mxu0 %v1023
        %v1056 = vpop.f32.mrf.mxu0
        %v1057 = vadd.f32 0.0, %v1056
        %1058 = vmatmul.f32.gmra.mxu0 %v1025
        %v1059 = vpop.f32.mrf.mxu0
        %v1060 = vadd.f32 0.0, %v1059
        %1061 = vmatmul.f32.gmra.mxu0 %v1027
        %v1062 = vpop.f32.mrf.mxu0
        %v1063 = vadd.f32 0.0, %v1062
        %1064 = vmatmul.f32.gmra.mxu0 %v1029
        %v1065 = vpop.f32.mrf.mxu0
        %v1066 = vadd.f32 0.0, %v1065
        %1067 = vmatmul.f32.gmra.mxu0 %v1031
        %v1068 = vpop.f32.mrf.mxu0
        %v1069 = vadd.f32 0.0, %v1068
        %1070 = vmatmul.f32.gmra.mxu0 %v1033
        %v1071 = vpop.f32.mrf.mxu0
        %v1072 = vadd.f32 0.0, %v1071
        %1073 = vmatmul.f32.gmra.mxu0 %v1035
        %v1074 = vpop.f32.mrf.mxu0
        %v1075 = vadd.f32 0.0, %v1074
        %1076 = vmatmul.f32.gmra.mxu0 %v1037
        %v1077 = vpop.f32.mrf.mxu0
        %v1078 = vadd.f32 0.0, %v1077
        %1079 = vdwg.mxu0
        %1080 = vmatpush.msra.mxu0 %v684
        %1081 = vmatpush.msra.mxu0 %v683
        %1082 = vmatpush.msra.mxu0 %v682
        %1083 = vmatpush.msra.mxu0 %v681
        %1084 = vmatpush.msra.mxu0 %v680
        %1085 = vmatpush.msra.mxu0 %v679
        %1086 = vmatpush.msra.mxu0 %v678
        %1087 = vmatpush.msra.mxu0 %v677
        %1088 = vmatpush.msra.mxu0 %v676
        %1089 = vmatpush.msra.mxu0 %v675
        %1090 = vmatpush.msra.mxu0 %v674
        %1091 = vmatpush.msra.mxu0 %v673
        %1092 = vmatpush.msra.mxu0 %v672
        %1093 = vmatpush.msra.mxu0 %v671
        %1094 = vmatpush.msra.mxu0 %v670
        %1095 = vmatpush.msra.mxu0 %v669
        %1096 = vmatmul.f32.gmra.mxu0 %v1024
        %v1097 = vpop.f32.mrf.mxu0
        %v1098 = vadd.f32 %v1057, %v1097
        %1099 = vmatmul.f32.gmra.mxu0 %v1026
        %v1100 = vpop.f32.mrf.mxu0
        %v1101 = vadd.f32 %v1060, %v1100
        %1102 = vmatmul.f32.gmra.mxu0 %v1028
        %v1103 = vpop.f32.mrf.mxu0
        %v1104 = vadd.f32 %v1063, %v1103
        %1105 = vmatmul.f32.gmra.mxu0 %v1030
        %v1106 = vpop.f32.mrf.mxu0
        %v1107 = vadd.f32 %v1066, %v1106
        %1108 = vmatmul.f32.gmra.mxu0 %v1032
        %v1109 = vpop.f32.mrf.mxu0
        %v1110 = vadd.f32 %v1069, %v1109
        %1111 = vmatmul.f32.gmra.mxu0 %v1034
        %v1112 = vpop.f32.mrf.mxu0
        %v1113 = vadd.f32 %v1072, %v1112
        %1114 = vmatmul.f32.gmra.mxu0 %v1036
        %v1115 = vpop.f32.mrf.mxu0
        %v1116 = vadd.f32 %v1075, %v1115
        %1117 = vmatmul.f32.gmra.mxu0 %v1038
        %v1118 = vpop.f32.mrf.mxu0
        %v1119 = vadd.f32 %v1078, %v1118
        %1120 = vdwg.mxu0
        %s1121 = scalar_lea.vmem %s4, 64
        %v1122 = vld [vmem:[%s1121] sm:$0xff]
        %v1123 = vld [vmem:[%s1121 + $0x8] sm:$0xff]
        %v1124 = vld [vmem:[%s1121 + $0x10] sm:$0xff]
        %v1125 = vld [vmem:[%s1121 + $0x18] sm:$0xff]
        %v1127 = vsel %vm891, %v1098, 0
        %v1130 = vsel %vm891, %v1101, 0
        %v1133 = vsel %vm891, %v1104, 0
        %v1136 = vsel %vm891, %v1107, 0
        %v1139 = vsel %vm891, %v1110, 0
        %v1142 = vsel %vm891, %v1113, 0
        %v1145 = vsel %vm891, %v1116, 0
        %v1148 = vsel %vm891, %v1119, 0
        %1150 = vmatpush.msra.mxu0 0.0
        %1151 = vmatpush.msra.mxu0 0.0
        %1152 = vmatpush.msra.mxu0 0.0
        %1153 = vmatpush.msra.mxu0 0.0
        %1154 = vmatpush.msra.mxu0 0.0
        %1155 = vmatpush.msra.mxu0 0.0
        %1156 = vmatpush.msra.mxu0 0.0
        %1157 = vmatpush.msra.mxu0 0.0
        %1158 = vmatpush.msra.mxu0 0.0
        %1159 = vmatpush.msra.mxu0 0.0
        %1160 = vmatpush.msra.mxu0 0.0
        %1161 = vmatpush.msra.mxu0 0.0
        %1162 = vmatpush.msra.mxu0 %v1125
        %1163 = vmatpush.msra.mxu0 %v1124
        %1164 = vmatpush.msra.mxu0 %v1123
        %1165 = vmatpush.msra.mxu0 %v1122
        %1166 = vmatmul.f32.gmra.mxu0 %v1127
        %v1167 = vpop.f32.mrf.mxu0
        %v1168 = vadd.f32 0.0, %v1167
        %1169 = vmatmul.f32.gmra.mxu0 %v1130
        %v1170 = vpop.f32.mrf.mxu0
        %v1171 = vadd.f32 0.0, %v1170
        %1172 = vmatmul.f32.gmra.mxu0 %v1133
        %v1173 = vpop.f32.mrf.mxu0
        %v1174 = vadd.f32 0.0, %v1173
        %1175 = vmatmul.f32.gmra.mxu0 %v1136
        %v1176 = vpop.f32.mrf.mxu0
        %v1177 = vadd.f32 0.0, %v1176
        %1178 = vmatmul.f32.gmra.mxu0 %v1139
        %v1179 = vpop.f32.mrf.mxu0
        %v1180 = vadd.f32 0.0, %v1179
        %1181 = vmatmul.f32.gmra.mxu0 %v1142
        %v1182 = vpop.f32.mrf.mxu0
        %v1183 = vadd.f32 0.0, %v1182
        %1184 = vmatmul.f32.gmra.mxu0 %v1145
        %v1185 = vpop.f32.mrf.mxu0
        %v1186 = vadd.f32 0.0, %v1185
        %1187 = vmatmul.f32.gmra.mxu0 %v1148
        %v1188 = vpop.f32.mrf.mxu0
        %v1189 = vadd.f32 0.0, %v1188
        %1190 = vdwg.mxu0
        %v1191 = vadd.f32 %v999, %v1168
        %v1192 = vadd.f32 %v1002, %v1171
        %v1193 = vadd.f32 %v1005, %v1174
        %v1194 = vadd.f32 %v1008, %v1177
        %v1195 = vadd.f32 %v1011, %v1180
        %v1196 = vadd.f32 %v1014, %v1183
        %v1197 = vadd.f32 %v1017, %v1186
        %v1198 = vadd.f32 %v1020, %v1189
        %s1199 = scalar_lea.vmem [#allocation2], 384
        %v1200 = vld [vmem:[%s1199] sm:$0xff]
        %v1201 = vld [vmem:[%s1199 + $0x8] sm:$0xff]
        %v1202 = vld [vmem:[%s1199 + $0x10] sm:$0xff]
        %v1203 = vld [vmem:[%s1199 + $0x18] sm:$0xff]
        %v1204 = vld [vmem:[%s1199 + $0x20] sm:$0xff]
        %v1205 = vld [vmem:[%s1199 + $0x28] sm:$0xff]
        %v1206 = vld [vmem:[%s1199 + $0x30] sm:$0xff]
        %v1207 = vld [vmem:[%s1199 + $0x38] sm:$0xff]
        %v1208 = vld [vmem:[%s1199 + $0x40] sm:$0xff]
        %v1209 = vld [vmem:[%s1199 + $0x48] sm:$0xff]
        %v1210 = vld [vmem:[%s1199 + $0x50] sm:$0xff]
        %v1211 = vld [vmem:[%s1199 + $0x58] sm:$0xff]
        %v1212 = vld [vmem:[%s1199 + $0x60] sm:$0xff]
        %v1213 = vld [vmem:[%s1199 + $0x68] sm:$0xff]
        %v1214 = vld [vmem:[%s1199 + $0x70] sm:$0xff]
        %v1215 = vld [vmem:[%s1199 + $0x78] sm:$0xff]
        %1216 = vmatpush.msra.mxu0 %v668
        %1217 = vmatpush.msra.mxu0 %v667
        %1218 = vmatpush.msra.mxu0 %v666
        %1219 = vmatpush.msra.mxu0 %v665
        %1220 = vmatpush.msra.mxu0 %v664
        %1221 = vmatpush.msra.mxu0 %v663
        %1222 = vmatpush.msra.mxu0 %v662
        %1223 = vmatpush.msra.mxu0 %v661
        %1224 = vmatpush.msra.mxu0 %v660
        %1225 = vmatpush.msra.mxu0 %v659
        %1226 = vmatpush.msra.mxu0 %v658
        %1227 = vmatpush.msra.mxu0 %v657
        %1228 = vmatpush.msra.mxu0 %v656
        %1229 = vmatpush.msra.mxu0 %v655
        %1230 = vmatpush.msra.mxu0 %v654
        %1231 = vmatpush.msra.mxu0 %v653
        %1232 = vmatmul.f32.gmra.mxu0 %v1200
        %v1233 = vpop.f32.mrf.mxu0
        %v1234 = vadd.f32 0.0, %v1233
        %1235 = vmatmul.f32.gmra.mxu0 %v1202
        %v1236 = vpop.f32.mrf.mxu0
        %v1237 = vadd.f32 0.0, %v1236
        %1238 = vmatmul.f32.gmra.mxu0 %v1204
        %v1239 = vpop.f32.mrf.mxu0
        %v1240 = vadd.f32 0.0, %v1239
        %1241 = vmatmul.f32.gmra.mxu0 %v1206
        %v1242 = vpop.f32.mrf.mxu0
        %v1243 = vadd.f32 0.0, %v1242
        %1244 = vmatmul.f32.gmra.mxu0 %v1208
        %v1245 = vpop.f32.mrf.mxu0
        %v1246 = vadd.f32 0.0, %v1245
        %1247 = vmatmul.f32.gmra.mxu0 %v1210
        %v1248 = vpop.f32.mrf.mxu0
        %v1249 = vadd.f32 0.0, %v1248
        %1250 = vmatmul.f32.gmra.mxu0 %v1212
        %v1251 = vpop.f32.mrf.mxu0
        %v1252 = vadd.f32 0.0, %v1251
        %1253 = vmatmul.f32.gmra.mxu0 %v1214
        %v1254 = vpop.f32.mrf.mxu0
        %v1255 = vadd.f32 0.0, %v1254
        %1256 = vdwg.mxu0
        %1257 = vmatpush.msra.mxu0 %v684
        %1258 = vmatpush.msra.mxu0 %v683
        %1259 = vmatpush.msra.mxu0 %v682
        %1260 = vmatpush.msra.mxu0 %v681
        %1261 = vmatpush.msra.mxu0 %v680
        %1262 = vmatpush.msra.mxu0 %v679
        %1263 = vmatpush.msra.mxu0 %v678
        %1264 = vmatpush.msra.mxu0 %v677
        %1265 = vmatpush.msra.mxu0 %v676
        %1266 = vmatpush.msra.mxu0 %v675
        %1267 = vmatpush.msra.mxu0 %v674
        %1268 = vmatpush.msra.mxu0 %v673
        %1269 = vmatpush.msra.mxu0 %v672
        %1270 = vmatpush.msra.mxu0 %v671
        %1271 = vmatpush.msra.mxu0 %v670
        %1272 = vmatpush.msra.mxu0 %v669
        %1273 = vmatmul.f32.gmra.mxu0 %v1201
        %v1274 = vpop.f32.mrf.mxu0
        %v1275 = vadd.f32 %v1234, %v1274
        %1276 = vmatmul.f32.gmra.mxu0 %v1203
        %v1277 = vpop.f32.mrf.mxu0
        %v1278 = vadd.f32 %v1237, %v1277
        %1279 = vmatmul.f32.gmra.mxu0 %v1205
        %v1280 = vpop.f32.mrf.mxu0
        %v1281 = vadd.f32 %v1240, %v1280
        %1282 = vmatmul.f32.gmra.mxu0 %v1207
        %v1283 = vpop.f32.mrf.mxu0
        %v1284 = vadd.f32 %v1243, %v1283
        %1285 = vmatmul.f32.gmra.mxu0 %v1209
        %v1286 = vpop.f32.mrf.mxu0
        %v1287 = vadd.f32 %v1246, %v1286
        %1288 = vmatmul.f32.gmra.mxu0 %v1211
        %v1289 = vpop.f32.mrf.mxu0
        %v1290 = vadd.f32 %v1249, %v1289
        %1291 = vmatmul.f32.gmra.mxu0 %v1213
        %v1292 = vpop.f32.mrf.mxu0
        %v1293 = vadd.f32 %v1252, %v1292
        %1294 = vmatmul.f32.gmra.mxu0 %v1215
        %v1295 = vpop.f32.mrf.mxu0
        %v1296 = vadd.f32 %v1255, %v1295
        %1297 = vdwg.mxu0
        %s1298 = scalar_lea.vmem %s4, 96
        %v1299 = vld [vmem:[%s1298] sm:$0xff]
        %v1300 = vld [vmem:[%s1298 + $0x8] sm:$0xff]
        %v1301 = vld [vmem:[%s1298 + $0x10] sm:$0xff]
        %v1302 = vld [vmem:[%s1298 + $0x18] sm:$0xff]
        %v1304 = vsel %vm891, %v1275, 0
        %v1307 = vsel %vm891, %v1278, 0
        %v1310 = vsel %vm891, %v1281, 0
        %v1313 = vsel %vm891, %v1284, 0
        %v1316 = vsel %vm891, %v1287, 0
        %v1319 = vsel %vm891, %v1290, 0
        %v1322 = vsel %vm891, %v1293, 0
        %v1325 = vsel %vm891, %v1296, 0
        %1327 = vmatpush.msra.mxu0 0.0
        %1328 = vmatpush.msra.mxu0 0.0
        %1329 = vmatpush.msra.mxu0 0.0
        %1330 = vmatpush.msra.mxu0 0.0
        %1331 = vmatpush.msra.mxu0 0.0
        %1332 = vmatpush.msra.mxu0 0.0
        %1333 = vmatpush.msra.mxu0 0.0
        %1334 = vmatpush.msra.mxu0 0.0
        %1335 = vmatpush.msra.mxu0 0.0
        %1336 = vmatpush.msra.mxu0 0.0
        %1337 = vmatpush.msra.mxu0 0.0
        %1338 = vmatpush.msra.mxu0 0.0
        %1339 = vmatpush.msra.mxu0 %v1302
        %1340 = vmatpush.msra.mxu0 %v1301
        %1341 = vmatpush.msra.mxu0 %v1300
        %1342 = vmatpush.msra.mxu0 %v1299
        %1343 = vmatmul.f32.gmra.mxu0 %v1304
        %v1344 = vpop.f32.mrf.mxu0
        %v1345 = vadd.f32 0.0, %v1344
        %1346 = vmatmul.f32.gmra.mxu0 %v1307
        %v1347 = vpop.f32.mrf.mxu0
        %v1348 = vadd.f32 0.0, %v1347
        %1349 = vmatmul.f32.gmra.mxu0 %v1310
        %v1350 = vpop.f32.mrf.mxu0
        %v1351 = vadd.f32 0.0, %v1350
        %1352 = vmatmul.f32.gmra.mxu0 %v1313
        %v1353 = vpop.f32.mrf.mxu0
        %v1354 = vadd.f32 0.0, %v1353
        %1355 = vmatmul.f32.gmra.mxu0 %v1316
        %v1356 = vpop.f32.mrf.mxu0
        %v1357 = vadd.f32 0.0, %v1356
        %1358 = vmatmul.f32.gmra.mxu0 %v1319
        %v1359 = vpop.f32.mrf.mxu0
        %v1360 = vadd.f32 0.0, %v1359
        %1361 = vmatmul.f32.gmra.mxu0 %v1322
        %v1362 = vpop.f32.mrf.mxu0
        %v1363 = vadd.f32 0.0, %v1362
        %1364 = vmatmul.f32.gmra.mxu0 %v1325
        %v1365 = vpop.f32.mrf.mxu0
        %v1366 = vadd.f32 0.0, %v1365
        %1367 = vdwg.mxu0
        %v1368 = vadd.f32 %v1191, %v1345
        %v1369 = vadd.f32 %v1192, %v1348
        %v1370 = vadd.f32 %v1193, %v1351
        %v1371 = vadd.f32 %v1194, %v1354
        %v1372 = vadd.f32 %v1195, %v1357
        %v1373 = vadd.f32 %v1196, %v1360
        %v1374 = vadd.f32 %v1197, %v1363
        %v1375 = vadd.f32 %v1198, %v1366
        %s1376 = scalar_lea.vmem [#allocation2], 512
        %v1377 = vld [vmem:[%s1376] sm:$0xff]
        %v1378 = vld [vmem:[%s1376 + $0x8] sm:$0xff]
        %v1379 = vld [vmem:[%s1376 + $0x10] sm:$0xff]
        %v1380 = vld [vmem:[%s1376 + $0x18] sm:$0xff]
        %v1381 = vld [vmem:[%s1376 + $0x20] sm:$0xff]
        %v1382 = vld [vmem:[%s1376 + $0x28] sm:$0xff]
        %v1383 = vld [vmem:[%s1376 + $0x30] sm:$0xff]
        %v1384 = vld [vmem:[%s1376 + $0x38] sm:$0xff]
        %v1385 = vld [vmem:[%s1376 + $0x40] sm:$0xff]
        %v1386 = vld [vmem:[%s1376 + $0x48] sm:$0xff]
        %v1387 = vld [vmem:[%s1376 + $0x50] sm:$0xff]
        %v1388 = vld [vmem:[%s1376 + $0x58] sm:$0xff]
        %v1389 = vld [vmem:[%s1376 + $0x60] sm:$0xff]
        %v1390 = vld [vmem:[%s1376 + $0x68] sm:$0xff]
        %v1391 = vld [vmem:[%s1376 + $0x70] sm:$0xff]
        %v1392 = vld [vmem:[%s1376 + $0x78] sm:$0xff]
        %1393 = vmatpush.msra.mxu0 %v668
        %1394 = vmatpush.msra.mxu0 %v667
        %1395 = vmatpush.msra.mxu0 %v666
        %1396 = vmatpush.msra.mxu0 %v665
        %1397 = vmatpush.msra.mxu0 %v664
        %1398 = vmatpush.msra.mxu0 %v663
        %1399 = vmatpush.msra.mxu0 %v662
        %1400 = vmatpush.msra.mxu0 %v661
        %1401 = vmatpush.msra.mxu0 %v660
        %1402 = vmatpush.msra.mxu0 %v659
        %1403 = vmatpush.msra.mxu0 %v658
        %1404 = vmatpush.msra.mxu0 %v657
        %1405 = vmatpush.msra.mxu0 %v656
        %1406 = vmatpush.msra.mxu0 %v655
        %1407 = vmatpush.msra.mxu0 %v654
        %1408 = vmatpush.msra.mxu0 %v653
        %1409 = vmatmul.f32.gmra.mxu0 %v1377
        %v1410 = vpop.f32.mrf.mxu0
        %v1411 = vadd.f32 0.0, %v1410
        %1412 = vmatmul.f32.gmra.mxu0 %v1379
        %v1413 = vpop.f32.mrf.mxu0
        %v1414 = vadd.f32 0.0, %v1413
        %1415 = vmatmul.f32.gmra.mxu0 %v1381
        %v1416 = vpop.f32.mrf.mxu0
        %v1417 = vadd.f32 0.0, %v1416
        %1418 = vmatmul.f32.gmra.mxu0 %v1383
        %v1419 = vpop.f32.mrf.mxu0
        %v1420 = vadd.f32 0.0, %v1419
        %1421 = vmatmul.f32.gmra.mxu0 %v1385
        %v1422 = vpop.f32.mrf.mxu0
        %v1423 = vadd.f32 0.0, %v1422
        %1424 = vmatmul.f32.gmra.mxu0 %v1387
        %v1425 = vpop.f32.mrf.mxu0
        %v1426 = vadd.f32 0.0, %v1425
        %1427 = vmatmul.f32.gmra.mxu0 %v1389
        %v1428 = vpop.f32.mrf.mxu0
        %v1429 = vadd.f32 0.0, %v1428
        %1430 = vmatmul.f32.gmra.mxu0 %v1391
        %v1431 = vpop.f32.mrf.mxu0
        %v1432 = vadd.f32 0.0, %v1431
        %1433 = vdwg.mxu0
        %1434 = vmatpush.msra.mxu0 %v684
        %1435 = vmatpush.msra.mxu0 %v683
        %1436 = vmatpush.msra.mxu0 %v682
        %1437 = vmatpush.msra.mxu0 %v681
        %1438 = vmatpush.msra.mxu0 %v680
        %1439 = vmatpush.msra.mxu0 %v679
        %1440 = vmatpush.msra.mxu0 %v678
        %1441 = vmatpush.msra.mxu0 %v677
        %1442 = vmatpush.msra.mxu0 %v676
        %1443 = vmatpush.msra.mxu0 %v675
        %1444 = vmatpush.msra.mxu0 %v674
        %1445 = vmatpush.msra.mxu0 %v673
        %1446 = vmatpush.msra.mxu0 %v672
        %1447 = vmatpush.msra.mxu0 %v671
        %1448 = vmatpush.msra.mxu0 %v670
        %1449 = vmatpush.msra.mxu0 %v669
        %1450 = vmatmul.f32.gmra.mxu0 %v1378
        %v1451 = vpop.f32.mrf.mxu0
        %v1452 = vadd.f32 %v1411, %v1451
        %1453 = vmatmul.f32.gmra.mxu0 %v1380
        %v1454 = vpop.f32.mrf.mxu0
        %v1455 = vadd.f32 %v1414, %v1454
        %1456 = vmatmul.f32.gmra.mxu0 %v1382
        %v1457 = vpop.f32.mrf.mxu0
        %v1458 = vadd.f32 %v1417, %v1457
        %1459 = vmatmul.f32.gmra.mxu0 %v1384
        %v1460 = vpop.f32.mrf.mxu0
        %v1461 = vadd.f32 %v1420, %v1460
        %1462 = vmatmul.f32.gmra.mxu0 %v1386
        %v1463 = vpop.f32.mrf.mxu0
        %v1464 = vadd.f32 %v1423, %v1463
        %1465 = vmatmul.f32.gmra.mxu0 %v1388
        %v1466 = vpop.f32.mrf.mxu0
        %v1467 = vadd.f32 %v1426, %v1466
        %1468 = vmatmul.f32.gmra.mxu0 %v1390
        %v1469 = vpop.f32.mrf.mxu0
        %v1470 = vadd.f32 %v1429, %v1469
        %1471 = vmatmul.f32.gmra.mxu0 %v1392
        %v1472 = vpop.f32.mrf.mxu0
        %v1473 = vadd.f32 %v1432, %v1472
        %1474 = vdwg.mxu0
        %s1475 = scalar_lea.vmem %s4, 128
        %v1476 = vld [vmem:[%s1475] sm:$0xff]
        %v1477 = vld [vmem:[%s1475 + $0x8] sm:$0xff]
        %v1478 = vld [vmem:[%s1475 + $0x10] sm:$0xff]
        %v1479 = vld [vmem:[%s1475 + $0x18] sm:$0xff]
        %v1481 = vsel %vm891, %v1452, 0
        %v1484 = vsel %vm891, %v1455, 0
        %v1487 = vsel %vm891, %v1458, 0
        %v1490 = vsel %vm891, %v1461, 0
        %v1493 = vsel %vm891, %v1464, 0
        %v1496 = vsel %vm891, %v1467, 0
        %v1499 = vsel %vm891, %v1470, 0
        %v1502 = vsel %vm891, %v1473, 0
        %1504 = vmatpush.msra.mxu0 0.0
        %1505 = vmatpush.msra.mxu0 0.0
        %1506 = vmatpush.msra.mxu0 0.0
        %1507 = vmatpush.msra.mxu0 0.0
        %1508 = vmatpush.msra.mxu0 0.0
        %1509 = vmatpush.msra.mxu0 0.0
        %1510 = vmatpush.msra.mxu0 0.0
        %1511 = vmatpush.msra.mxu0 0.0
        %1512 = vmatpush.msra.mxu0 0.0
        %1513 = vmatpush.msra.mxu0 0.0
        %1514 = vmatpush.msra.mxu0 0.0
        %1515 = vmatpush.msra.mxu0 0.0
        %1516 = vmatpush.msra.mxu0 %v1479
        %1517 = vmatpush.msra.mxu0 %v1478
        %1518 = vmatpush.msra.mxu0 %v1477
        %1519 = vmatpush.msra.mxu0 %v1476
        %1520 = vmatmul.f32.gmra.mxu0 %v1481
        %v1521 = vpop.f32.mrf.mxu0
        %v1522 = vadd.f32 0.0, %v1521
        %1523 = vmatmul.f32.gmra.mxu0 %v1484
        %v1524 = vpop.f32.mrf.mxu0
        %v1525 = vadd.f32 0.0, %v1524
        %1526 = vmatmul.f32.gmra.mxu0 %v1487
        %v1527 = vpop.f32.mrf.mxu0
        %v1528 = vadd.f32 0.0, %v1527
        %1529 = vmatmul.f32.gmra.mxu0 %v1490
        %v1530 = vpop.f32.mrf.mxu0
        %v1531 = vadd.f32 0.0, %v1530
        %1532 = vmatmul.f32.gmra.mxu0 %v1493
        %v1533 = vpop.f32.mrf.mxu0
        %v1534 = vadd.f32 0.0, %v1533
        %1535 = vmatmul.f32.gmra.mxu0 %v1496
        %v1536 = vpop.f32.mrf.mxu0
        %v1537 = vadd.f32 0.0, %v1536
        %1538 = vmatmul.f32.gmra.mxu0 %v1499
        %v1539 = vpop.f32.mrf.mxu0
        %v1540 = vadd.f32 0.0, %v1539
        %1541 = vmatmul.f32.gmra.mxu0 %v1502
        %v1542 = vpop.f32.mrf.mxu0
        %v1543 = vadd.f32 0.0, %v1542
        %1544 = vdwg.mxu0
        %v1545 = vadd.f32 %v1368, %v1522
        %v1546 = vadd.f32 %v1369, %v1525
        %v1547 = vadd.f32 %v1370, %v1528
        %v1548 = vadd.f32 %v1371, %v1531
        %v1549 = vadd.f32 %v1372, %v1534
        %v1550 = vadd.f32 %v1373, %v1537
        %v1551 = vadd.f32 %v1374, %v1540
        %v1552 = vadd.f32 %v1375, %v1543
        %s1553 = scalar_lea.vmem [#allocation2], 640
        %v1554 = vld [vmem:[%s1553] sm:$0xff]
        %v1555 = vld [vmem:[%s1553 + $0x8] sm:$0xff]
        %v1556 = vld [vmem:[%s1553 + $0x10] sm:$0xff]
        %v1557 = vld [vmem:[%s1553 + $0x18] sm:$0xff]
        %v1558 = vld [vmem:[%s1553 + $0x20] sm:$0xff]
        %v1559 = vld [vmem:[%s1553 + $0x28] sm:$0xff]
        %v1560 = vld [vmem:[%s1553 + $0x30] sm:$0xff]
        %v1561 = vld [vmem:[%s1553 + $0x38] sm:$0xff]
        %v1562 = vld [vmem:[%s1553 + $0x40] sm:$0xff]
        %v1563 = vld [vmem:[%s1553 + $0x48] sm:$0xff]
        %v1564 = vld [vmem:[%s1553 + $0x50] sm:$0xff]
        %v1565 = vld [vmem:[%s1553 + $0x58] sm:$0xff]
        %v1566 = vld [vmem:[%s1553 + $0x60] sm:$0xff]
        %v1567 = vld [vmem:[%s1553 + $0x68] sm:$0xff]
        %v1568 = vld [vmem:[%s1553 + $0x70] sm:$0xff]
        %v1569 = vld [vmem:[%s1553 + $0x78] sm:$0xff]
        %1570 = vmatpush.msra.mxu0 %v668
        %1571 = vmatpush.msra.mxu0 %v667
        %1572 = vmatpush.msra.mxu0 %v666
        %1573 = vmatpush.msra.mxu0 %v665
        %1574 = vmatpush.msra.mxu0 %v664
        %1575 = vmatpush.msra.mxu0 %v663
        %1576 = vmatpush.msra.mxu0 %v662
        %1577 = vmatpush.msra.mxu0 %v661
        %1578 = vmatpush.msra.mxu0 %v660
        %1579 = vmatpush.msra.mxu0 %v659
        %1580 = vmatpush.msra.mxu0 %v658
        %1581 = vmatpush.msra.mxu0 %v657
        %1582 = vmatpush.msra.mxu0 %v656
        %1583 = vmatpush.msra.mxu0 %v655
        %1584 = vmatpush.msra.mxu0 %v654
        %1585 = vmatpush.msra.mxu0 %v653
        %1586 = vmatmul.f32.gmra.mxu0 %v1554
        %v1587 = vpop.f32.mrf.mxu0
        %v1588 = vadd.f32 0.0, %v1587
        %1589 = vmatmul.f32.gmra.mxu0 %v1556
        %v1590 = vpop.f32.mrf.mxu0
        %v1591 = vadd.f32 0.0, %v1590
        %1592 = vmatmul.f32.gmra.mxu0 %v1558
        %v1593 = vpop.f32.mrf.mxu0
        %v1594 = vadd.f32 0.0, %v1593
        %1595 = vmatmul.f32.gmra.mxu0 %v1560
        %v1596 = vpop.f32.mrf.mxu0
        %v1597 = vadd.f32 0.0, %v1596
        %1598 = vmatmul.f32.gmra.mxu0 %v1562
        %v1599 = vpop.f32.mrf.mxu0
        %v1600 = vadd.f32 0.0, %v1599
        %1601 = vmatmul.f32.gmra.mxu0 %v1564
        %v1602 = vpop.f32.mrf.mxu0
        %v1603 = vadd.f32 0.0, %v1602
        %1604 = vmatmul.f32.gmra.mxu0 %v1566
        %v1605 = vpop.f32.mrf.mxu0
        %v1606 = vadd.f32 0.0, %v1605
        %1607 = vmatmul.f32.gmra.mxu0 %v1568
        %v1608 = vpop.f32.mrf.mxu0
        %v1609 = vadd.f32 0.0, %v1608
        %1610 = vdwg.mxu0
        %1611 = vmatpush.msra.mxu0 %v684
        %1612 = vmatpush.msra.mxu0 %v683
        %1613 = vmatpush.msra.mxu0 %v682
        %1614 = vmatpush.msra.mxu0 %v681
        %1615 = vmatpush.msra.mxu0 %v680
        %1616 = vmatpush.msra.mxu0 %v679
        %1617 = vmatpush.msra.mxu0 %v678
        %1618 = vmatpush.msra.mxu0 %v677
        %1619 = vmatpush.msra.mxu0 %v676
        %1620 = vmatpush.msra.mxu0 %v675
        %1621 = vmatpush.msra.mxu0 %v674
        %1622 = vmatpush.msra.mxu0 %v673
        %1623 = vmatpush.msra.mxu0 %v672
        %1624 = vmatpush.msra.mxu0 %v671
        %1625 = vmatpush.msra.mxu0 %v670
        %1626 = vmatpush.msra.mxu0 %v669
        %1627 = vmatmul.f32.gmra.mxu0 %v1555
        %v1628 = vpop.f32.mrf.mxu0
        %v1629 = vadd.f32 %v1588, %v1628
        %1630 = vmatmul.f32.gmra.mxu0 %v1557
        %v1631 = vpop.f32.mrf.mxu0
        %v1632 = vadd.f32 %v1591, %v1631
        %1633 = vmatmul.f32.gmra.mxu0 %v1559
        %v1634 = vpop.f32.mrf.mxu0
        %v1635 = vadd.f32 %v1594, %v1634
        %1636 = vmatmul.f32.gmra.mxu0 %v1561
        %v1637 = vpop.f32.mrf.mxu0
        %v1638 = vadd.f32 %v1597, %v1637
        %1639 = vmatmul.f32.gmra.mxu0 %v1563
        %v1640 = vpop.f32.mrf.mxu0
        %v1641 = vadd.f32 %v1600, %v1640
        %1642 = vmatmul.f32.gmra.mxu0 %v1565
        %v1643 = vpop.f32.mrf.mxu0
        %v1644 = vadd.f32 %v1603, %v1643
        %1645 = vmatmul.f32.gmra.mxu0 %v1567
        %v1646 = vpop.f32.mrf.mxu0
        %v1647 = vadd.f32 %v1606, %v1646
        %1648 = vmatmul.f32.gmra.mxu0 %v1569
        %v1649 = vpop.f32.mrf.mxu0
        %v1650 = vadd.f32 %v1609, %v1649
        %1651 = vdwg.mxu0
        %s1652 = scalar_lea.vmem %s4, 160
        %v1653 = vld [vmem:[%s1652] sm:$0xff]
        %v1654 = vld [vmem:[%s1652 + $0x8] sm:$0xff]
        %v1655 = vld [vmem:[%s1652 + $0x10] sm:$0xff]
        %v1656 = vld [vmem:[%s1652 + $0x18] sm:$0xff]
        %v1658 = vsel %vm891, %v1629, 0
        %v1661 = vsel %vm891, %v1632, 0
        %v1664 = vsel %vm891, %v1635, 0
        %v1667 = vsel %vm891, %v1638, 0
        %v1670 = vsel %vm891, %v1641, 0
        %v1673 = vsel %vm891, %v1644, 0
        %v1676 = vsel %vm891, %v1647, 0
        %v1679 = vsel %vm891, %v1650, 0
        %1681 = vmatpush.msra.mxu0 0.0
        %1682 = vmatpush.msra.mxu0 0.0
        %1683 = vmatpush.msra.mxu0 0.0
        %1684 = vmatpush.msra.mxu0 0.0
        %1685 = vmatpush.msra.mxu0 0.0
        %1686 = vmatpush.msra.mxu0 0.0
        %1687 = vmatpush.msra.mxu0 0.0
        %1688 = vmatpush.msra.mxu0 0.0
        %1689 = vmatpush.msra.mxu0 0.0
        %1690 = vmatpush.msra.mxu0 0.0
        %1691 = vmatpush.msra.mxu0 0.0
        %1692 = vmatpush.msra.mxu0 0.0
        %1693 = vmatpush.msra.mxu0 %v1656
        %1694 = vmatpush.msra.mxu0 %v1655
        %1695 = vmatpush.msra.mxu0 %v1654
        %1696 = vmatpush.msra.mxu0 %v1653
        %1697 = vmatmul.f32.gmra.mxu0 %v1658
        %v1698 = vpop.f32.mrf.mxu0
        %v1699 = vadd.f32 0.0, %v1698
        %1700 = vmatmul.f32.gmra.mxu0 %v1661
        %v1701 = vpop.f32.mrf.mxu0
        %v1702 = vadd.f32 0.0, %v1701
        %1703 = vmatmul.f32.gmra.mxu0 %v1664
        %v1704 = vpop.f32.mrf.mxu0
        %v1705 = vadd.f32 0.0, %v1704
        %1706 = vmatmul.f32.gmra.mxu0 %v1667
        %v1707 = vpop.f32.mrf.mxu0
        %v1708 = vadd.f32 0.0, %v1707
        %1709 = vmatmul.f32.gmra.mxu0 %v1670
        %v1710 = vpop.f32.mrf.mxu0
        %v1711 = vadd.f32 0.0, %v1710
        %1712 = vmatmul.f32.gmra.mxu0 %v1673
        %v1713 = vpop.f32.mrf.mxu0
        %v1714 = vadd.f32 0.0, %v1713
        %1715 = vmatmul.f32.gmra.mxu0 %v1676
        %v1716 = vpop.f32.mrf.mxu0
        %v1717 = vadd.f32 0.0, %v1716
        %1718 = vmatmul.f32.gmra.mxu0 %v1679
        %v1719 = vpop.f32.mrf.mxu0
        %v1720 = vadd.f32 0.0, %v1719
        %1721 = vdwg.mxu0
        %v1722 = vadd.f32 %v1545, %v1699
        %v1723 = vadd.f32 %v1546, %v1702
        %v1724 = vadd.f32 %v1547, %v1705
        %v1725 = vadd.f32 %v1548, %v1708
        %v1726 = vadd.f32 %v1549, %v1711
        %v1727 = vadd.f32 %v1550, %v1714
        %v1728 = vadd.f32 %v1551, %v1717
        %v1729 = vadd.f32 %v1552, %v1720
        %s1730 = scalar_lea.vmem [#allocation2], 768
        %v1731 = vld [vmem:[%s1730] sm:$0xff]
        %v1732 = vld [vmem:[%s1730 + $0x8] sm:$0xff]
        %v1733 = vld [vmem:[%s1730 + $0x10] sm:$0xff]
        %v1734 = vld [vmem:[%s1730 + $0x18] sm:$0xff]
        %v1735 = vld [vmem:[%s1730 + $0x20] sm:$0xff]
        %v1736 = vld [vmem:[%s1730 + $0x28] sm:$0xff]
        %v1737 = vld [vmem:[%s1730 + $0x30] sm:$0xff]
        %v1738 = vld [vmem:[%s1730 + $0x38] sm:$0xff]
        %v1739 = vld [vmem:[%s1730 + $0x40] sm:$0xff]
        %v1740 = vld [vmem:[%s1730 + $0x48] sm:$0xff]
        %v1741 = vld [vmem:[%s1730 + $0x50] sm:$0xff]
        %v1742 = vld [vmem:[%s1730 + $0x58] sm:$0xff]
        %v1743 = vld [vmem:[%s1730 + $0x60] sm:$0xff]
        %v1744 = vld [vmem:[%s1730 + $0x68] sm:$0xff]
        %v1745 = vld [vmem:[%s1730 + $0x70] sm:$0xff]
        %v1746 = vld [vmem:[%s1730 + $0x78] sm:$0xff]
        %1747 = vmatpush.msra.mxu0 %v668
        %1748 = vmatpush.msra.mxu0 %v667
        %1749 = vmatpush.msra.mxu0 %v666
        %1750 = vmatpush.msra.mxu0 %v665
        %1751 = vmatpush.msra.mxu0 %v664
        %1752 = vmatpush.msra.mxu0 %v663
        %1753 = vmatpush.msra.mxu0 %v662
        %1754 = vmatpush.msra.mxu0 %v661
        %1755 = vmatpush.msra.mxu0 %v660
        %1756 = vmatpush.msra.mxu0 %v659
        %1757 = vmatpush.msra.mxu0 %v658
        %1758 = vmatpush.msra.mxu0 %v657
        %1759 = vmatpush.msra.mxu0 %v656
        %1760 = vmatpush.msra.mxu0 %v655
        %1761 = vmatpush.msra.mxu0 %v654
        %1762 = vmatpush.msra.mxu0 %v653
        %1763 = vmatmul.f32.gmra.mxu0 %v1731
        %v1764 = vpop.f32.mrf.mxu0
        %v1765 = vadd.f32 0.0, %v1764
        %1766 = vmatmul.f32.gmra.mxu0 %v1733
        %v1767 = vpop.f32.mrf.mxu0
        %v1768 = vadd.f32 0.0, %v1767
        %1769 = vmatmul.f32.gmra.mxu0 %v1735
        %v1770 = vpop.f32.mrf.mxu0
        %v1771 = vadd.f32 0.0, %v1770
        %1772 = vmatmul.f32.gmra.mxu0 %v1737
        %v1773 = vpop.f32.mrf.mxu0
        %v1774 = vadd.f32 0.0, %v1773
        %1775 = vmatmul.f32.gmra.mxu0 %v1739
        %v1776 = vpop.f32.mrf.mxu0
        %v1777 = vadd.f32 0.0, %v1776
        %1778 = vmatmul.f32.gmra.mxu0 %v1741
        %v1779 = vpop.f32.mrf.mxu0
        %v1780 = vadd.f32 0.0, %v1779
        %1781 = vmatmul.f32.gmra.mxu0 %v1743
        %v1782 = vpop.f32.mrf.mxu0
        %v1783 = vadd.f32 0.0, %v1782
        %1784 = vmatmul.f32.gmra.mxu0 %v1745
        %v1785 = vpop.f32.mrf.mxu0
        %v1786 = vadd.f32 0.0, %v1785
        %1787 = vdwg.mxu0
        %1788 = vmatpush.msra.mxu0 %v684
        %1789 = vmatpush.msra.mxu0 %v683
        %1790 = vmatpush.msra.mxu0 %v682
        %1791 = vmatpush.msra.mxu0 %v681
        %1792 = vmatpush.msra.mxu0 %v680
        %1793 = vmatpush.msra.mxu0 %v679
        %1794 = vmatpush.msra.mxu0 %v678
        %1795 = vmatpush.msra.mxu0 %v677
        %1796 = vmatpush.msra.mxu0 %v676
        %1797 = vmatpush.msra.mxu0 %v675
        %1798 = vmatpush.msra.mxu0 %v674
        %1799 = vmatpush.msra.mxu0 %v673
        %1800 = vmatpush.msra.mxu0 %v672
        %1801 = vmatpush.msra.mxu0 %v671
        %1802 = vmatpush.msra.mxu0 %v670
        %1803 = vmatpush.msra.mxu0 %v669
        %1804 = vmatmul.f32.gmra.mxu0 %v1732
        %v1805 = vpop.f32.mrf.mxu0
        %v1806 = vadd.f32 %v1765, %v1805
        %1807 = vmatmul.f32.gmra.mxu0 %v1734
        %v1808 = vpop.f32.mrf.mxu0
        %v1809 = vadd.f32 %v1768, %v1808
        %1810 = vmatmul.f32.gmra.mxu0 %v1736
        %v1811 = vpop.f32.mrf.mxu0
        %v1812 = vadd.f32 %v1771, %v1811
        %1813 = vmatmul.f32.gmra.mxu0 %v1738
        %v1814 = vpop.f32.mrf.mxu0
        %v1815 = vadd.f32 %v1774, %v1814
        %1816 = vmatmul.f32.gmra.mxu0 %v1740
        %v1817 = vpop.f32.mrf.mxu0
        %v1818 = vadd.f32 %v1777, %v1817
        %1819 = vmatmul.f32.gmra.mxu0 %v1742
        %v1820 = vpop.f32.mrf.mxu0
        %v1821 = vadd.f32 %v1780, %v1820
        %1822 = vmatmul.f32.gmra.mxu0 %v1744
        %v1823 = vpop.f32.mrf.mxu0
        %v1824 = vadd.f32 %v1783, %v1823
        %1825 = vmatmul.f32.gmra.mxu0 %v1746
        %v1826 = vpop.f32.mrf.mxu0
        %v1827 = vadd.f32 %v1786, %v1826
        %1828 = vdwg.mxu0
        %s1829 = scalar_lea.vmem %s4, 192
        %v1830 = vld [vmem:[%s1829] sm:$0xff]
        %v1831 = vld [vmem:[%s1829 + $0x8] sm:$0xff]
        %v1832 = vld [vmem:[%s1829 + $0x10] sm:$0xff]
        %v1833 = vld [vmem:[%s1829 + $0x18] sm:$0xff]
        %v1835 = vsel %vm891, %v1806, 0
        %v1838 = vsel %vm891, %v1809, 0
        %v1841 = vsel %vm891, %v1812, 0
        %v1844 = vsel %vm891, %v1815, 0
        %v1847 = vsel %vm891, %v1818, 0
        %v1850 = vsel %vm891, %v1821, 0
        %v1853 = vsel %vm891, %v1824, 0
        %v1856 = vsel %vm891, %v1827, 0
        %1858 = vmatpush.msra.mxu0 0.0
        %1859 = vmatpush.msra.mxu0 0.0
        %1860 = vmatpush.msra.mxu0 0.0
        %1861 = vmatpush.msra.mxu0 0.0
        %1862 = vmatpush.msra.mxu0 0.0
        %1863 = vmatpush.msra.mxu0 0.0
        %1864 = vmatpush.msra.mxu0 0.0
        %1865 = vmatpush.msra.mxu0 0.0
        %1866 = vmatpush.msra.mxu0 0.0
        %1867 = vmatpush.msra.mxu0 0.0
        %1868 = vmatpush.msra.mxu0 0.0
        %1869 = vmatpush.msra.mxu0 0.0
        %1870 = vmatpush.msra.mxu0 %v1833
        %1871 = vmatpush.msra.mxu0 %v1832
        %1872 = vmatpush.msra.mxu0 %v1831
        %1873 = vmatpush.msra.mxu0 %v1830
        %1874 = vmatmul.f32.gmra.mxu0 %v1835
        %v1875 = vpop.f32.mrf.mxu0
        %v1876 = vadd.f32 0.0, %v1875
        %1877 = vmatmul.f32.gmra.mxu0 %v1838
        %v1878 = vpop.f32.mrf.mxu0
        %v1879 = vadd.f32 0.0, %v1878
        %1880 = vmatmul.f32.gmra.mxu0 %v1841
        %v1881 = vpop.f32.mrf.mxu0
        %v1882 = vadd.f32 0.0, %v1881
        %1883 = vmatmul.f32.gmra.mxu0 %v1844
        %v1884 = vpop.f32.mrf.mxu0
        %v1885 = vadd.f32 0.0, %v1884
        %1886 = vmatmul.f32.gmra.mxu0 %v1847
        %v1887 = vpop.f32.mrf.mxu0
        %v1888 = vadd.f32 0.0, %v1887
        %1889 = vmatmul.f32.gmra.mxu0 %v1850
        %v1890 = vpop.f32.mrf.mxu0
        %v1891 = vadd.f32 0.0, %v1890
        %1892 = vmatmul.f32.gmra.mxu0 %v1853
        %v1893 = vpop.f32.mrf.mxu0
        %v1894 = vadd.f32 0.0, %v1893
        %1895 = vmatmul.f32.gmra.mxu0 %v1856
        %v1896 = vpop.f32.mrf.mxu0
        %v1897 = vadd.f32 0.0, %v1896
        %1898 = vdwg.mxu0
        %v1899 = vadd.f32 %v1722, %v1876
        %v1900 = vadd.f32 %v1723, %v1879
        %v1901 = vadd.f32 %v1724, %v1882
        %v1902 = vadd.f32 %v1725, %v1885
        %v1903 = vadd.f32 %v1726, %v1888
        %v1904 = vadd.f32 %v1727, %v1891
        %v1905 = vadd.f32 %v1728, %v1894
        %v1906 = vadd.f32 %v1729, %v1897
        %s1907 = scalar_lea.vmem [#allocation2], 896
        %v1908 = vld [vmem:[%s1907] sm:$0xff]
        %v1909 = vld [vmem:[%s1907 + $0x8] sm:$0xff]
        %v1910 = vld [vmem:[%s1907 + $0x10] sm:$0xff]
        %v1911 = vld [vmem:[%s1907 + $0x18] sm:$0xff]
        %v1912 = vld [vmem:[%s1907 + $0x20] sm:$0xff]
        %v1913 = vld [vmem:[%s1907 + $0x28] sm:$0xff]
        %v1914 = vld [vmem:[%s1907 + $0x30] sm:$0xff]
        %v1915 = vld [vmem:[%s1907 + $0x38] sm:$0xff]
        %v1916 = vld [vmem:[%s1907 + $0x40] sm:$0xff]
        %v1917 = vld [vmem:[%s1907 + $0x48] sm:$0xff]
        %v1918 = vld [vmem:[%s1907 + $0x50] sm:$0xff]
        %v1919 = vld [vmem:[%s1907 + $0x58] sm:$0xff]
        %v1920 = vld [vmem:[%s1907 + $0x60] sm:$0xff]
        %v1921 = vld [vmem:[%s1907 + $0x68] sm:$0xff]
        %v1922 = vld [vmem:[%s1907 + $0x70] sm:$0xff]
        %v1923 = vld [vmem:[%s1907 + $0x78] sm:$0xff]
        %1924 = vmatpush.msra.mxu0 %v668
        %1925 = vmatpush.msra.mxu0 %v667
        %1926 = vmatpush.msra.mxu0 %v666
        %1927 = vmatpush.msra.mxu0 %v665
        %1928 = vmatpush.msra.mxu0 %v664
        %1929 = vmatpush.msra.mxu0 %v663
        %1930 = vmatpush.msra.mxu0 %v662
        %1931 = vmatpush.msra.mxu0 %v661
        %1932 = vmatpush.msra.mxu0 %v660
        %1933 = vmatpush.msra.mxu0 %v659
        %1934 = vmatpush.msra.mxu0 %v658
        %1935 = vmatpush.msra.mxu0 %v657
        %1936 = vmatpush.msra.mxu0 %v656
        %1937 = vmatpush.msra.mxu0 %v655
        %1938 = vmatpush.msra.mxu0 %v654
        %1939 = vmatpush.msra.mxu0 %v653
        %1940 = vmatmul.f32.gmra.mxu0 %v1908
        %v1941 = vpop.f32.mrf.mxu0
        %v1942 = vadd.f32 0.0, %v1941
        %1943 = vmatmul.f32.gmra.mxu0 %v1910
        %v1944 = vpop.f32.mrf.mxu0
        %v1945 = vadd.f32 0.0, %v1944
        %1946 = vmatmul.f32.gmra.mxu0 %v1912
        %v1947 = vpop.f32.mrf.mxu0
        %v1948 = vadd.f32 0.0, %v1947
        %1949 = vmatmul.f32.gmra.mxu0 %v1914
        %v1950 = vpop.f32.mrf.mxu0
        %v1951 = vadd.f32 0.0, %v1950
        %1952 = vmatmul.f32.gmra.mxu0 %v1916
        %v1953 = vpop.f32.mrf.mxu0
        %v1954 = vadd.f32 0.0, %v1953
        %1955 = vmatmul.f32.gmra.mxu0 %v1918
        %v1956 = vpop.f32.mrf.mxu0
        %v1957 = vadd.f32 0.0, %v1956
        %1958 = vmatmul.f32.gmra.mxu0 %v1920
        %v1959 = vpop.f32.mrf.mxu0
        %v1960 = vadd.f32 0.0, %v1959
        %1961 = vmatmul.f32.gmra.mxu0 %v1922
        %v1962 = vpop.f32.mrf.mxu0
        %v1963 = vadd.f32 0.0, %v1962
        %1964 = vdwg.mxu0
        %1965 = vmatpush.msra.mxu0 %v684
        %1966 = vmatpush.msra.mxu0 %v683
        %1967 = vmatpush.msra.mxu0 %v682
        %1968 = vmatpush.msra.mxu0 %v681
        %1969 = vmatpush.msra.mxu0 %v680
        %1970 = vmatpush.msra.mxu0 %v679
        %1971 = vmatpush.msra.mxu0 %v678
        %1972 = vmatpush.msra.mxu0 %v677
        %1973 = vmatpush.msra.mxu0 %v676
        %1974 = vmatpush.msra.mxu0 %v675
        %1975 = vmatpush.msra.mxu0 %v674
        %1976 = vmatpush.msra.mxu0 %v673
        %1977 = vmatpush.msra.mxu0 %v672
        %1978 = vmatpush.msra.mxu0 %v671
        %1979 = vmatpush.msra.mxu0 %v670
        %1980 = vmatpush.msra.mxu0 %v669
        %1981 = vmatmul.f32.gmra.mxu0 %v1909
        %v1982 = vpop.f32.mrf.mxu0
        %v1983 = vadd.f32 %v1942, %v1982
        %1984 = vmatmul.f32.gmra.mxu0 %v1911
        %v1985 = vpop.f32.mrf.mxu0
        %v1986 = vadd.f32 %v1945, %v1985
        %1987 = vmatmul.f32.gmra.mxu0 %v1913
        %v1988 = vpop.f32.mrf.mxu0
        %v1989 = vadd.f32 %v1948, %v1988
        %1990 = vmatmul.f32.gmra.mxu0 %v1915
        %v1991 = vpop.f32.mrf.mxu0
        %v1992 = vadd.f32 %v1951, %v1991
        %1993 = vmatmul.f32.gmra.mxu0 %v1917
        %v1994 = vpop.f32.mrf.mxu0
        %v1995 = vadd.f32 %v1954, %v1994
        %1996 = vmatmul.f32.gmra.mxu0 %v1919
        %v1997 = vpop.f32.mrf.mxu0
        %v1998 = vadd.f32 %v1957, %v1997
        %1999 = vmatmul.f32.gmra.mxu0 %v1921
        %v2000 = vpop.f32.mrf.mxu0
        %v2001 = vadd.f32 %v1960, %v2000
        %2002 = vmatmul.f32.gmra.mxu0 %v1923
        %v2003 = vpop.f32.mrf.mxu0
        %v2004 = vadd.f32 %v1963, %v2003
        %2005 = vdwg.mxu0
        %s2006 = scalar_lea.vmem %s4, 224
        %v2007 = vld [vmem:[%s2006] sm:$0xff]
        %v2008 = vld [vmem:[%s2006 + $0x8] sm:$0xff]
        %v2009 = vld [vmem:[%s2006 + $0x10] sm:$0xff]
        %v2010 = vld [vmem:[%s2006 + $0x18] sm:$0xff]
        %v2012 = vsel %vm891, %v1983, 0
        %v2015 = vsel %vm891, %v1986, 0
        %v2018 = vsel %vm891, %v1989, 0
        %v2021 = vsel %vm891, %v1992, 0
        %v2024 = vsel %vm891, %v1995, 0
        %v2027 = vsel %vm891, %v1998, 0
        %v2030 = vsel %vm891, %v2001, 0
        %v2033 = vsel %vm891, %v2004, 0
        %2035 = vmatpush.msra.mxu0 0.0
        %2036 = vmatpush.msra.mxu0 0.0
        %2037 = vmatpush.msra.mxu0 0.0
        %2038 = vmatpush.msra.mxu0 0.0
        %2039 = vmatpush.msra.mxu0 0.0
        %2040 = vmatpush.msra.mxu0 0.0
        %2041 = vmatpush.msra.mxu0 0.0
        %2042 = vmatpush.msra.mxu0 0.0
        %2043 = vmatpush.msra.mxu0 0.0
        %2044 = vmatpush.msra.mxu0 0.0
        %2045 = vmatpush.msra.mxu0 0.0
        %2046 = vmatpush.msra.mxu0 0.0
        %2047 = vmatpush.msra.mxu0 %v2010
        %2048 = vmatpush.msra.mxu0 %v2009
        %2049 = vmatpush.msra.mxu0 %v2008
        %2050 = vmatpush.msra.mxu0 %v2007
        %2051 = vmatmul.f32.gmra.mxu0 %v2012
        %v2052 = vpop.f32.mrf.mxu0
        %v2053 = vadd.f32 0.0, %v2052
        %2054 = vmatmul.f32.gmra.mxu0 %v2015
        %v2055 = vpop.f32.mrf.mxu0
        %v2056 = vadd.f32 0.0, %v2055
        %2057 = vmatmul.f32.gmra.mxu0 %v2018
        %v2058 = vpop.f32.mrf.mxu0
        %v2059 = vadd.f32 0.0, %v2058
        %2060 = vmatmul.f32.gmra.mxu0 %v2021
        %v2061 = vpop.f32.mrf.mxu0
        %v2062 = vadd.f32 0.0, %v2061
        %2063 = vmatmul.f32.gmra.mxu0 %v2024
        %v2064 = vpop.f32.mrf.mxu0
        %v2065 = vadd.f32 0.0, %v2064
        %2066 = vmatmul.f32.gmra.mxu0 %v2027
        %v2067 = vpop.f32.mrf.mxu0
        %v2068 = vadd.f32 0.0, %v2067
        %2069 = vmatmul.f32.gmra.mxu0 %v2030
        %v2070 = vpop.f32.mrf.mxu0
        %v2071 = vadd.f32 0.0, %v2070
        %2072 = vmatmul.f32.gmra.mxu0 %v2033
        %v2073 = vpop.f32.mrf.mxu0
        %v2074 = vadd.f32 0.0, %v2073
        %2075 = vdwg.mxu0
        %v2076 = vadd.f32 %v1899, %v2053
        %v2077 = vadd.f32 %v1900, %v2056
        %v2078 = vadd.f32 %v1901, %v2059
        %v2079 = vadd.f32 %v1902, %v2062
        %v2080 = vadd.f32 %v1903, %v2065
        %v2081 = vadd.f32 %v1904, %v2068
        %v2082 = vadd.f32 %v1905, %v2071
        %v2083 = vadd.f32 %v1906, %v2074
        %s2084 = scalar_lea.vmem [#allocation2], 1024
        %v2085 = vld [vmem:[%s2084] sm:$0xff]
        %v2086 = vld [vmem:[%s2084 + $0x8] sm:$0xff]
        %v2087 = vld [vmem:[%s2084 + $0x10] sm:$0xff]
        %v2088 = vld [vmem:[%s2084 + $0x18] sm:$0xff]
        %v2089 = vld [vmem:[%s2084 + $0x20] sm:$0xff]
        %v2090 = vld [vmem:[%s2084 + $0x28] sm:$0xff]
        %v2091 = vld [vmem:[%s2084 + $0x30] sm:$0xff]
        %v2092 = vld [vmem:[%s2084 + $0x38] sm:$0xff]
        %v2093 = vld [vmem:[%s2084 + $0x40] sm:$0xff]
        %v2094 = vld [vmem:[%s2084 + $0x48] sm:$0xff]
        %v2095 = vld [vmem:[%s2084 + $0x50] sm:$0xff]
        %v2096 = vld [vmem:[%s2084 + $0x58] sm:$0xff]
        %v2097 = vld [vmem:[%s2084 + $0x60] sm:$0xff]
        %v2098 = vld [vmem:[%s2084 + $0x68] sm:$0xff]
        %v2099 = vld [vmem:[%s2084 + $0x70] sm:$0xff]
        %v2100 = vld [vmem:[%s2084 + $0x78] sm:$0xff]
        %2101 = vmatpush.msra.mxu0 %v668
        %2102 = vmatpush.msra.mxu0 %v667
        %2103 = vmatpush.msra.mxu0 %v666
        %2104 = vmatpush.msra.mxu0 %v665
        %2105 = vmatpush.msra.mxu0 %v664
        %2106 = vmatpush.msra.mxu0 %v663
        %2107 = vmatpush.msra.mxu0 %v662
        %2108 = vmatpush.msra.mxu0 %v661
        %2109 = vmatpush.msra.mxu0 %v660
        %2110 = vmatpush.msra.mxu0 %v659
        %2111 = vmatpush.msra.mxu0 %v658
        %2112 = vmatpush.msra.mxu0 %v657
        %2113 = vmatpush.msra.mxu0 %v656
        %2114 = vmatpush.msra.mxu0 %v655
        %2115 = vmatpush.msra.mxu0 %v654
        %2116 = vmatpush.msra.mxu0 %v653
        %2117 = vmatmul.f32.gmra.mxu0 %v2085
        %v2118 = vpop.f32.mrf.mxu0
        %v2119 = vadd.f32 0.0, %v2118
        %2120 = vmatmul.f32.gmra.mxu0 %v2087
        %v2121 = vpop.f32.mrf.mxu0
        %v2122 = vadd.f32 0.0, %v2121
        %2123 = vmatmul.f32.gmra.mxu0 %v2089
        %v2124 = vpop.f32.mrf.mxu0
        %v2125 = vadd.f32 0.0, %v2124
        %2126 = vmatmul.f32.gmra.mxu0 %v2091
        %v2127 = vpop.f32.mrf.mxu0
        %v2128 = vadd.f32 0.0, %v2127
        %2129 = vmatmul.f32.gmra.mxu0 %v2093
        %v2130 = vpop.f32.mrf.mxu0
        %v2131 = vadd.f32 0.0, %v2130
        %2132 = vmatmul.f32.gmra.mxu0 %v2095
        %v2133 = vpop.f32.mrf.mxu0
        %v2134 = vadd.f32 0.0, %v2133
        %2135 = vmatmul.f32.gmra.mxu0 %v2097
        %v2136 = vpop.f32.mrf.mxu0
        %v2137 = vadd.f32 0.0, %v2136
        %2138 = vmatmul.f32.gmra.mxu0 %v2099
        %v2139 = vpop.f32.mrf.mxu0
        %v2140 = vadd.f32 0.0, %v2139
        %2141 = vdwg.mxu0
        %2142 = vmatpush.msra.mxu0 %v684
        %2143 = vmatpush.msra.mxu0 %v683
        %2144 = vmatpush.msra.mxu0 %v682
        %2145 = vmatpush.msra.mxu0 %v681
        %2146 = vmatpush.msra.mxu0 %v680
        %2147 = vmatpush.msra.mxu0 %v679
        %2148 = vmatpush.msra.mxu0 %v678
        %2149 = vmatpush.msra.mxu0 %v677
        %2150 = vmatpush.msra.mxu0 %v676
        %2151 = vmatpush.msra.mxu0 %v675
        %2152 = vmatpush.msra.mxu0 %v674
        %2153 = vmatpush.msra.mxu0 %v673
        %2154 = vmatpush.msra.mxu0 %v672
        %2155 = vmatpush.msra.mxu0 %v671
        %2156 = vmatpush.msra.mxu0 %v670
        %2157 = vmatpush.msra.mxu0 %v669
        %2158 = vmatmul.f32.gmra.mxu0 %v2086
        %v2159 = vpop.f32.mrf.mxu0
        %v2160 = vadd.f32 %v2119, %v2159
        %2161 = vmatmul.f32.gmra.mxu0 %v2088
        %v2162 = vpop.f32.mrf.mxu0
        %v2163 = vadd.f32 %v2122, %v2162
        %2164 = vmatmul.f32.gmra.mxu0 %v2090
        %v2165 = vpop.f32.mrf.mxu0
        %v2166 = vadd.f32 %v2125, %v2165
        %2167 = vmatmul.f32.gmra.mxu0 %v2092
        %v2168 = vpop.f32.mrf.mxu0
        %v2169 = vadd.f32 %v2128, %v2168
        %2170 = vmatmul.f32.gmra.mxu0 %v2094
        %v2171 = vpop.f32.mrf.mxu0
        %v2172 = vadd.f32 %v2131, %v2171
        %2173 = vmatmul.f32.gmra.mxu0 %v2096
        %v2174 = vpop.f32.mrf.mxu0
        %v2175 = vadd.f32 %v2134, %v2174
        %2176 = vmatmul.f32.gmra.mxu0 %v2098
        %v2177 = vpop.f32.mrf.mxu0
        %v2178 = vadd.f32 %v2137, %v2177
        %2179 = vmatmul.f32.gmra.mxu0 %v2100
        %v2180 = vpop.f32.mrf.mxu0
        %v2181 = vadd.f32 %v2140, %v2180
        %2182 = vdwg.mxu0
        %s2183 = scalar_lea.vmem %s4, 256
        %v2184 = vld [vmem:[%s2183] sm:$0xff]
        %v2185 = vld [vmem:[%s2183 + $0x8] sm:$0xff]
        %v2186 = vld [vmem:[%s2183 + $0x10] sm:$0xff]
        %v2187 = vld [vmem:[%s2183 + $0x18] sm:$0xff]
        %v2189 = vsel %vm891, %v2160, 0
        %v2192 = vsel %vm891, %v2163, 0
        %v2195 = vsel %vm891, %v2166, 0
        %v2198 = vsel %vm891, %v2169, 0
        %v2201 = vsel %vm891, %v2172, 0
        %v2204 = vsel %vm891, %v2175, 0
        %v2207 = vsel %vm891, %v2178, 0
        %v2210 = vsel %vm891, %v2181, 0
        %2212 = vmatpush.msra.mxu0 0.0
        %2213 = vmatpush.msra.mxu0 0.0
        %2214 = vmatpush.msra.mxu0 0.0
        %2215 = vmatpush.msra.mxu0 0.0
        %2216 = vmatpush.msra.mxu0 0.0
        %2217 = vmatpush.msra.mxu0 0.0
        %2218 = vmatpush.msra.mxu0 0.0
        %2219 = vmatpush.msra.mxu0 0.0
        %2220 = vmatpush.msra.mxu0 0.0
        %2221 = vmatpush.msra.mxu0 0.0
        %2222 = vmatpush.msra.mxu0 0.0
        %2223 = vmatpush.msra.mxu0 0.0
        %2224 = vmatpush.msra.mxu0 %v2187
        %2225 = vmatpush.msra.mxu0 %v2186
        %2226 = vmatpush.msra.mxu0 %v2185
        %2227 = vmatpush.msra.mxu0 %v2184
        %2228 = vmatmul.f32.gmra.mxu0 %v2189
        %v2229 = vpop.f32.mrf.mxu0
        %v2230 = vadd.f32 0.0, %v2229
        %2231 = vmatmul.f32.gmra.mxu0 %v2192
        %v2232 = vpop.f32.mrf.mxu0
        %v2233 = vadd.f32 0.0, %v2232
        %2234 = vmatmul.f32.gmra.mxu0 %v2195
        %v2235 = vpop.f32.mrf.mxu0
        %v2236 = vadd.f32 0.0, %v2235
        %2237 = vmatmul.f32.gmra.mxu0 %v2198
        %v2238 = vpop.f32.mrf.mxu0
        %v2239 = vadd.f32 0.0, %v2238
        %2240 = vmatmul.f32.gmra.mxu0 %v2201
        %v2241 = vpop.f32.mrf.mxu0
        %v2242 = vadd.f32 0.0, %v2241
        %2243 = vmatmul.f32.gmra.mxu0 %v2204
        %v2244 = vpop.f32.mrf.mxu0
        %v2245 = vadd.f32 0.0, %v2244
        %2246 = vmatmul.f32.gmra.mxu0 %v2207
        %v2247 = vpop.f32.mrf.mxu0
        %v2248 = vadd.f32 0.0, %v2247
        %2249 = vmatmul.f32.gmra.mxu0 %v2210
        %v2250 = vpop.f32.mrf.mxu0
        %v2251 = vadd.f32 0.0, %v2250
        %2252 = vdwg.mxu0
        %v2253 = vadd.f32 %v2076, %v2230
        %v2254 = vadd.f32 %v2077, %v2233
        %v2255 = vadd.f32 %v2078, %v2236
        %v2256 = vadd.f32 %v2079, %v2239
        %v2257 = vadd.f32 %v2080, %v2242
        %v2258 = vadd.f32 %v2081, %v2245
        %v2259 = vadd.f32 %v2082, %v2248
        %v2260 = vadd.f32 %v2083, %v2251
        %v2261 = vld [vmem:[%s5] sm:$0x1]
        %v2263 = vperm.slane %v2261, 0
        %v2265 = vadd.f32 %v2253, %v2263
        %v2266 = vadd.f32 %v2254, %v2263
        %v2267 = vadd.f32 %v2255, %v2263
        %v2268 = vadd.f32 %v2256, %v2263
        %v2269 = vadd.f32 %v2257, %v2263
        %v2270 = vadd.f32 %v2258, %v2263
        %v2271 = vadd.f32 %v2259, %v2263
        %v2272 = vadd.f32 %v2260, %v2263
        %v2273 = vmax.f32 %v2265, 0.0
        %v2274 = vmax.f32 %v2266, 0.0
        %v2275 = vmax.f32 %v2267, 0.0
        %v2276 = vmax.f32 %v2268, 0.0
        %v2277 = vmax.f32 %v2269, 0.0
        %v2278 = vmax.f32 %v2270, 0.0
        %v2279 = vmax.f32 %v2271, 0.0
        %v2280 = vmax.f32 %v2272, 0.0
        %v2281 = vld [vmem:[%s6] sm:$0xff]
        %v2282 = vld [vmem:[%s6 + $0x8] sm:$0xff]
        %vm2283 = vcmask 523264
        %v2285 = vsel %vm2283, %v2281, 0
        %v2288 = vsel %vm2283, %v2282, 0
        %2290 = vmatpush.msra.mxu0 0.0
        %2291 = vmatpush.msra.mxu0 0.0
        %2292 = vmatpush.msra.mxu0 0.0
        %2293 = vmatpush.msra.mxu0 0.0
        %2294 = vmatpush.msra.mxu0 0.0
        %2295 = vmatpush.msra.mxu0 0.0
        %2296 = vmatpush.msra.mxu0 0.0
        %2297 = vmatpush.msra.mxu0 0.0
        %2298 = vmatpush.msra.mxu0 %v2280
        %2299 = vmatpush.msra.mxu0 %v2279
        %2300 = vmatpush.msra.mxu0 %v2278
        %2301 = vmatpush.msra.mxu0 %v2277
        %2302 = vmatpush.msra.mxu0 %v2276
        %2303 = vmatpush.msra.mxu0 %v2275
        %2304 = vmatpush.msra.mxu0 %v2274
        %2305 = vmatpush.msra.mxu0 %v2273
        %2306 = vmatmul.f32.gmra.mxu0 %v2285
        %v2307 = vpop.f32.mrf.mxu0
        %v2308 = vadd.f32 0.0, %v2307
        %2309 = vmatmul.f32.gmra.mxu0 %v2288
        %v2310 = vpop.f32.mrf.mxu0
        %v2311 = vadd.f32 0.0, %v2310
        %2312 = vdwg.mxu0
        %v2313 = vld [vmem:[%s7] sm:$0xff]
        %v2314 = vld [vmem:[%s7 + $0x8] sm:$0xff]
        %v2315 = vld [vmem:[%s7 + $0x10] sm:$0xff]
        %v2316 = vld [vmem:[%s7 + $0x18] sm:$0xff]
        %v2317 = vld [vmem:[%s7 + $0x20] sm:$0xff]
        %v2318 = vld [vmem:[%s7 + $0x28] sm:$0xff]
        %v2319 = vld [vmem:[%s7 + $0x30] sm:$0xff]
        %v2320 = vld [vmem:[%s7 + $0x38] sm:$0xff]
        %s2321 = scalar_lea.vmem %s6, 16
        %v2322 = vld [vmem:[%s2321] sm:$0xff]
        %v2323 = vld [vmem:[%s2321 + $0x8] sm:$0xff]
        %v2325 = vsel %vm2283, %v2322, 0
        %v2328 = vsel %vm2283, %v2323, 0
        %2330 = vmatpush.msra.mxu0 0.0
        %2331 = vmatpush.msra.mxu0 0.0
        %2332 = vmatpush.msra.mxu0 0.0
        %2333 = vmatpush.msra.mxu0 0.0
        %2334 = vmatpush.msra.mxu0 0.0
        %2335 = vmatpush.msra.mxu0 0.0
        %2336 = vmatpush.msra.mxu0 0.0
        %2337 = vmatpush.msra.mxu0 0.0
        %2338 = vmatpush.msra.mxu0 %v2280
        %2339 = vmatpush.msra.mxu0 %v2279
        %2340 = vmatpush.msra.mxu0 %v2278
        %2341 = vmatpush.msra.mxu0 %v2277
        %2342 = vmatpush.msra.mxu0 %v2276
        %2343 = vmatpush.msra.mxu0 %v2275
        %2344 = vmatpush.msra.mxu0 %v2274
        %2345 = vmatpush.msra.mxu0 %v2273
        %2346 = vmatmul.f32.gmra.mxu0 %v2325
        %v2347 = vpop.f32.mrf.mxu0
        %v2348 = vadd.f32 0.0, %v2347
        %2349 = vmatmul.f32.gmra.mxu0 %v2328
        %v2350 = vpop.f32.mrf.mxu0
        %v2351 = vadd.f32 0.0, %v2350
        %2352 = vdwg.mxu0
        %s2353 = scalar_lea.vmem %s7, 64
        %v2354 = vld [vmem:[%s2353] sm:$0xff]
        %v2355 = vld [vmem:[%s2353 + $0x8] sm:$0xff]
        %v2356 = vld [vmem:[%s2353 + $0x10] sm:$0xff]
        %v2357 = vld [vmem:[%s2353 + $0x18] sm:$0xff]
        %v2358 = vld [vmem:[%s2353 + $0x20] sm:$0xff]
        %v2359 = vld [vmem:[%s2353 + $0x28] sm:$0xff]
        %v2360 = vld [vmem:[%s2353 + $0x30] sm:$0xff]
        %v2361 = vld [vmem:[%s2353 + $0x38] sm:$0xff]
        %v2363 = vsel %vm2283, %v2348, 0
        %v2366 = vsel %vm2283, %v2351, 0
        %2368 = vmatpush.msra.mxu0 0.0
        %2369 = vmatpush.msra.mxu0 0.0
        %2370 = vmatpush.msra.mxu0 0.0
        %2371 = vmatpush.msra.mxu0 0.0
        %2372 = vmatpush.msra.mxu0 0.0
        %2373 = vmatpush.msra.mxu0 0.0
        %2374 = vmatpush.msra.mxu0 0.0
        %2375 = vmatpush.msra.mxu0 0.0
        %2376 = vmatpush.msra.mxu0 %v2361
        %2377 = vmatpush.msra.mxu0 %v2360
        %2378 = vmatpush.msra.mxu0 %v2359
        %2379 = vmatpush.msra.mxu0 %v2358
        %2380 = vmatpush.msra.mxu0 %v2357
        %2381 = vmatpush.msra.mxu0 %v2356
        %2382 = vmatpush.msra.mxu0 %v2355
        %2383 = vmatpush.msra.mxu0 %v2354
        %2384 = vmatmul.f32.gmra.mxu0 %v2363
        %v2385 = vpop.f32.mrf.mxu0
        %v2386 = vadd.f32 0.0, %v2385
        %2387 = vmatmul.f32.gmra.mxu0 %v2366
        %v2388 = vpop.f32.mrf.mxu0
        %v2389 = vadd.f32 0.0, %v2388
        %2390 = vdwg.mxu0
        %v2392 = vsel %vm2283, %v2308, 0
        %v2395 = vsel %vm2283, %v2311, 0
        %2397 = vmatpush.msra.mxu0 0.0
        %2398 = vmatpush.msra.mxu0 0.0
        %2399 = vmatpush.msra.mxu0 0.0
        %2400 = vmatpush.msra.mxu0 0.0
        %2401 = vmatpush.msra.mxu0 0.0
        %2402 = vmatpush.msra.mxu0 0.0
        %2403 = vmatpush.msra.mxu0 0.0
        %2404 = vmatpush.msra.mxu0 0.0
        %2405 = vmatpush.msra.mxu0 %v2320
        %2406 = vmatpush.msra.mxu0 %v2319
        %2407 = vmatpush.msra.mxu0 %v2318
        %2408 = vmatpush.msra.mxu0 %v2317
        %2409 = vmatpush.msra.mxu0 %v2316
        %2410 = vmatpush.msra.mxu0 %v2315
        %2411 = vmatpush.msra.mxu0 %v2314
        %2412 = vmatpush.msra.mxu0 %v2313
        %2413 = vmatmul.f32.gmra.mxu0 %v2392
        %v2414 = vpop.f32.mrf.mxu0
        %v2415 = vadd.f32 %v2386, %v2414
        %2416 = vmatmul.f32.gmra.mxu0 %v2395
        %v2417 = vpop.f32.mrf.mxu0
        %v2418 = vadd.f32 %v2389, %v2417
        %2419 = vdwg.mxu0
        %s2420 = scalar_lea.vmem %s6, 32
        %v2421 = vld [vmem:[%s2420] sm:$0xff]
        %v2422 = vld [vmem:[%s2420 + $0x8] sm:$0xff]
        %v2424 = vsel %vm2283, %v2421, 0
        %v2427 = vsel %vm2283, %v2422, 0
        %2429 = vmatpush.msra.mxu0 0.0
        %2430 = vmatpush.msra.mxu0 0.0
        %2431 = vmatpush.msra.mxu0 0.0
        %2432 = vmatpush.msra.mxu0 0.0
        %2433 = vmatpush.msra.mxu0 0.0
        %2434 = vmatpush.msra.mxu0 0.0
        %2435 = vmatpush.msra.mxu0 0.0
        %2436 = vmatpush.msra.mxu0 0.0
        %2437 = vmatpush.msra.mxu0 %v2280
        %2438 = vmatpush.msra.mxu0 %v2279
        %2439 = vmatpush.msra.mxu0 %v2278
        %2440 = vmatpush.msra.mxu0 %v2277
        %2441 = vmatpush.msra.mxu0 %v2276
        %2442 = vmatpush.msra.mxu0 %v2275
        %2443 = vmatpush.msra.mxu0 %v2274
        %2444 = vmatpush.msra.mxu0 %v2273
        %2445 = vmatmul.f32.gmra.mxu0 %v2424
        %v2446 = vpop.f32.mrf.mxu0
        %v2447 = vadd.f32 0.0, %v2446
        %2448 = vmatmul.f32.gmra.mxu0 %v2427
        %v2449 = vpop.f32.mrf.mxu0
        %v2450 = vadd.f32 0.0, %v2449
        %2451 = vdwg.mxu0
        %s2452 = scalar_lea.vmem %s7, 128
        %v2453 = vld [vmem:[%s2452] sm:$0xff]
        %v2454 = vld [vmem:[%s2452 + $0x8] sm:$0xff]
        %v2455 = vld [vmem:[%s2452 + $0x10] sm:$0xff]
        %v2456 = vld [vmem:[%s2452 + $0x18] sm:$0xff]
        %v2457 = vld [vmem:[%s2452 + $0x20] sm:$0xff]
        %v2458 = vld [vmem:[%s2452 + $0x28] sm:$0xff]
        %v2459 = vld [vmem:[%s2452 + $0x30] sm:$0xff]
        %v2460 = vld [vmem:[%s2452 + $0x38] sm:$0xff]
        %v2462 = vsel %vm2283, %v2447, 0
        %v2465 = vsel %vm2283, %v2450, 0
        %2467 = vmatpush.msra.mxu0 0.0
        %2468 = vmatpush.msra.mxu0 0.0
        %2469 = vmatpush.msra.mxu0 0.0
        %2470 = vmatpush.msra.mxu0 0.0
        %2471 = vmatpush.msra.mxu0 0.0
        %2472 = vmatpush.msra.mxu0 0.0
        %2473 = vmatpush.msra.mxu0 0.0
        %2474 = vmatpush.msra.mxu0 0.0
        %2475 = vmatpush.msra.mxu0 %v2460
        %2476 = vmatpush.msra.mxu0 %v2459
        %2477 = vmatpush.msra.mxu0 %v2458
        %2478 = vmatpush.msra.mxu0 %v2457
        %2479 = vmatpush.msra.mxu0 %v2456
        %2480 = vmatpush.msra.mxu0 %v2455
        %2481 = vmatpush.msra.mxu0 %v2454
        %2482 = vmatpush.msra.mxu0 %v2453
        %2483 = vmatmul.f32.gmra.mxu0 %v2462
        %v2484 = vpop.f32.mrf.mxu0
        %v2485 = vadd.f32 0.0, %v2484
        %2486 = vmatmul.f32.gmra.mxu0 %v2465
        %v2487 = vpop.f32.mrf.mxu0
        %v2488 = vadd.f32 0.0, %v2487
        %2489 = vdwg.mxu0
        %v2490 = vadd.f32 %v2415, %v2485
        %v2491 = vadd.f32 %v2418, %v2488
        %s2492 = scalar_lea.vmem %s6, 48
        %v2493 = vld [vmem:[%s2492] sm:$0xff]
        %v2494 = vld [vmem:[%s2492 + $0x8] sm:$0xff]
        %v2496 = vsel %vm2283, %v2493, 0
        %v2499 = vsel %vm2283, %v2494, 0
        %2501 = vmatpush.msra.mxu0 0.0
        %2502 = vmatpush.msra.mxu0 0.0
        %2503 = vmatpush.msra.mxu0 0.0
        %2504 = vmatpush.msra.mxu0 0.0
        %2505 = vmatpush.msra.mxu0 0.0
        %2506 = vmatpush.msra.mxu0 0.0
        %2507 = vmatpush.msra.mxu0 0.0
        %2508 = vmatpush.msra.mxu0 0.0
        %2509 = vmatpush.msra.mxu0 %v2280
        %2510 = vmatpush.msra.mxu0 %v2279
        %2511 = vmatpush.msra.mxu0 %v2278
        %2512 = vmatpush.msra.mxu0 %v2277
        %2513 = vmatpush.msra.mxu0 %v2276
        %2514 = vmatpush.msra.mxu0 %v2275
        %2515 = vmatpush.msra.mxu0 %v2274
        %2516 = vmatpush.msra.mxu0 %v2273
        %2517 = vmatmul.f32.gmra.mxu0 %v2496
        %v2518 = vpop.f32.mrf.mxu0
        %v2519 = vadd.f32 0.0, %v2518
        %2520 = vmatmul.f32.gmra.mxu0 %v2499
        %v2521 = vpop.f32.mrf.mxu0
        %v2522 = vadd.f32 0.0, %v2521
        %2523 = vdwg.mxu0
        %s2524 = scalar_lea.vmem %s7, 192
        %v2525 = vld [vmem:[%s2524] sm:$0xff]
        %v2526 = vld [vmem:[%s2524 + $0x8] sm:$0xff]
        %v2527 = vld [vmem:[%s2524 + $0x10] sm:$0xff]
        %v2528 = vld [vmem:[%s2524 + $0x18] sm:$0xff]
        %v2529 = vld [vmem:[%s2524 + $0x20] sm:$0xff]
        %v2530 = vld [vmem:[%s2524 + $0x28] sm:$0xff]
        %v2531 = vld [vmem:[%s2524 + $0x30] sm:$0xff]
        %v2532 = vld [vmem:[%s2524 + $0x38] sm:$0xff]
        %v2534 = vsel %vm2283, %v2519, 0
        %v2537 = vsel %vm2283, %v2522, 0
        %2539 = vmatpush.msra.mxu0 0.0
        %2540 = vmatpush.msra.mxu0 0.0
        %2541 = vmatpush.msra.mxu0 0.0
        %2542 = vmatpush.msra.mxu0 0.0
        %2543 = vmatpush.msra.mxu0 0.0
        %2544 = vmatpush.msra.mxu0 0.0
        %2545 = vmatpush.msra.mxu0 0.0
        %2546 = vmatpush.msra.mxu0 0.0
        %2547 = vmatpush.msra.mxu0 %v2532
        %2548 = vmatpush.msra.mxu0 %v2531
        %2549 = vmatpush.msra.mxu0 %v2530
        %2550 = vmatpush.msra.mxu0 %v2529
        %2551 = vmatpush.msra.mxu0 %v2528
        %2552 = vmatpush.msra.mxu0 %v2527
        %2553 = vmatpush.msra.mxu0 %v2526
        %2554 = vmatpush.msra.mxu0 %v2525
        %2555 = vmatmul.f32.gmra.mxu0 %v2534
        %v2556 = vpop.f32.mrf.mxu0
        %v2557 = vadd.f32 0.0, %v2556
        %2558 = vmatmul.f32.gmra.mxu0 %v2537
        %v2559 = vpop.f32.mrf.mxu0
        %v2560 = vadd.f32 0.0, %v2559
        %2561 = vdwg.mxu0
        %v2562 = vadd.f32 %v2490, %v2557
        %v2563 = vadd.f32 %v2491, %v2560
        %s2564 = scalar_lea.vmem %s6, 64
        %v2565 = vld [vmem:[%s2564] sm:$0xff]
        %v2566 = vld [vmem:[%s2564 + $0x8] sm:$0xff]
        %v2568 = vsel %vm2283, %v2565, 0
        %v2571 = vsel %vm2283, %v2566, 0
        %2573 = vmatpush.msra.mxu0 0.0
        %2574 = vmatpush.msra.mxu0 0.0
        %2575 = vmatpush.msra.mxu0 0.0
        %2576 = vmatpush.msra.mxu0 0.0
        %2577 = vmatpush.msra.mxu0 0.0
        %2578 = vmatpush.msra.mxu0 0.0
        %2579 = vmatpush.msra.mxu0 0.0
        %2580 = vmatpush.msra.mxu0 0.0
        %2581 = vmatpush.msra.mxu0 %v2280
        %2582 = vmatpush.msra.mxu0 %v2279
        %2583 = vmatpush.msra.mxu0 %v2278
        %2584 = vmatpush.msra.mxu0 %v2277
        %2585 = vmatpush.msra.mxu0 %v2276
        %2586 = vmatpush.msra.mxu0 %v2275
        %2587 = vmatpush.msra.mxu0 %v2274
        %2588 = vmatpush.msra.mxu0 %v2273
        %2589 = vmatmul.f32.gmra.mxu0 %v2568
        %v2590 = vpop.f32.mrf.mxu0
        %v2591 = vadd.f32 0.0, %v2590
        %2592 = vmatmul.f32.gmra.mxu0 %v2571
        %v2593 = vpop.f32.mrf.mxu0
        %v2594 = vadd.f32 0.0, %v2593
        %2595 = vdwg.mxu0
        %s2596 = scalar_lea.vmem %s7, 256
        %v2597 = vld [vmem:[%s2596] sm:$0xff]
        %v2598 = vld [vmem:[%s2596 + $0x8] sm:$0xff]
        %v2599 = vld [vmem:[%s2596 + $0x10] sm:$0xff]
        %v2600 = vld [vmem:[%s2596 + $0x18] sm:$0xff]
        %v2601 = vld [vmem:[%s2596 + $0x20] sm:$0xff]
        %v2602 = vld [vmem:[%s2596 + $0x28] sm:$0xff]
        %v2603 = vld [vmem:[%s2596 + $0x30] sm:$0xff]
        %v2604 = vld [vmem:[%s2596 + $0x38] sm:$0xff]
        %v2606 = vsel %vm2283, %v2591, 0
        %v2609 = vsel %vm2283, %v2594, 0
        %2611 = vmatpush.msra.mxu0 0.0
        %2612 = vmatpush.msra.mxu0 0.0
        %2613 = vmatpush.msra.mxu0 0.0
        %2614 = vmatpush.msra.mxu0 0.0
        %2615 = vmatpush.msra.mxu0 0.0
        %2616 = vmatpush.msra.mxu0 0.0
        %2617 = vmatpush.msra.mxu0 0.0
        %2618 = vmatpush.msra.mxu0 0.0
        %2619 = vmatpush.msra.mxu0 %v2604
        %2620 = vmatpush.msra.mxu0 %v2603
        %2621 = vmatpush.msra.mxu0 %v2602
        %2622 = vmatpush.msra.mxu0 %v2601
        %2623 = vmatpush.msra.mxu0 %v2600
        %2624 = vmatpush.msra.mxu0 %v2599
        %2625 = vmatpush.msra.mxu0 %v2598
        %2626 = vmatpush.msra.mxu0 %v2597
        %2627 = vmatmul.f32.gmra.mxu0 %v2606
        %v2628 = vpop.f32.mrf.mxu0
        %v2629 = vadd.f32 0.0, %v2628
        %2630 = vmatmul.f32.gmra.mxu0 %v2609
        %v2631 = vpop.f32.mrf.mxu0
        %v2632 = vadd.f32 0.0, %v2631
        %2633 = vdwg.mxu0
        %v2634 = vadd.f32 %v2562, %v2629
        %v2635 = vadd.f32 %v2563, %v2632
        %s2636 = scalar_lea.vmem %s6, 80
        %v2637 = vld [vmem:[%s2636] sm:$0xff]
        %v2638 = vld [vmem:[%s2636 + $0x8] sm:$0xff]
        %v2640 = vsel %vm2283, %v2637, 0
        %v2643 = vsel %vm2283, %v2638, 0
        %2645 = vmatpush.msra.mxu0 0.0
        %2646 = vmatpush.msra.mxu0 0.0
        %2647 = vmatpush.msra.mxu0 0.0
        %2648 = vmatpush.msra.mxu0 0.0
        %2649 = vmatpush.msra.mxu0 0.0
        %2650 = vmatpush.msra.mxu0 0.0
        %2651 = vmatpush.msra.mxu0 0.0
        %2652 = vmatpush.msra.mxu0 0.0
        %2653 = vmatpush.msra.mxu0 %v2280
        %2654 = vmatpush.msra.mxu0 %v2279
        %2655 = vmatpush.msra.mxu0 %v2278
        %2656 = vmatpush.msra.mxu0 %v2277
        %2657 = vmatpush.msra.mxu0 %v2276
        %2658 = vmatpush.msra.mxu0 %v2275
        %2659 = vmatpush.msra.mxu0 %v2274
        %2660 = vmatpush.msra.mxu0 %v2273
        %2661 = vmatmul.f32.gmra.mxu0 %v2640
        %v2662 = vpop.f32.mrf.mxu0
        %v2663 = vadd.f32 0.0, %v2662
        %2664 = vmatmul.f32.gmra.mxu0 %v2643
        %v2665 = vpop.f32.mrf.mxu0
        %v2666 = vadd.f32 0.0, %v2665
        %2667 = vdwg.mxu0
        %s2668 = scalar_lea.vmem %s7, 320
        %v2669 = vld [vmem:[%s2668] sm:$0xff]
        %v2670 = vld [vmem:[%s2668 + $0x8] sm:$0xff]
        %v2671 = vld [vmem:[%s2668 + $0x10] sm:$0xff]
        %v2672 = vld [vmem:[%s2668 + $0x18] sm:$0xff]
        %v2673 = vld [vmem:[%s2668 + $0x20] sm:$0xff]
        %v2674 = vld [vmem:[%s2668 + $0x28] sm:$0xff]
        %v2675 = vld [vmem:[%s2668 + $0x30] sm:$0xff]
        %v2676 = vld [vmem:[%s2668 + $0x38] sm:$0xff]
        %v2678 = vsel %vm2283, %v2663, 0
        %v2681 = vsel %vm2283, %v2666, 0
        %2683 = vmatpush.msra.mxu0 0.0
        %2684 = vmatpush.msra.mxu0 0.0
        %2685 = vmatpush.msra.mxu0 0.0
        %2686 = vmatpush.msra.mxu0 0.0
        %2687 = vmatpush.msra.mxu0 0.0
        %2688 = vmatpush.msra.mxu0 0.0
        %2689 = vmatpush.msra.mxu0 0.0
        %2690 = vmatpush.msra.mxu0 0.0
        %2691 = vmatpush.msra.mxu0 %v2676
        %2692 = vmatpush.msra.mxu0 %v2675
        %2693 = vmatpush.msra.mxu0 %v2674
        %2694 = vmatpush.msra.mxu0 %v2673
        %2695 = vmatpush.msra.mxu0 %v2672
        %2696 = vmatpush.msra.mxu0 %v2671
        %2697 = vmatpush.msra.mxu0 %v2670
        %2698 = vmatpush.msra.mxu0 %v2669
        %2699 = vmatmul.f32.gmra.mxu0 %v2678
        %v2700 = vpop.f32.mrf.mxu0
        %v2701 = vadd.f32 0.0, %v2700
        %2702 = vmatmul.f32.gmra.mxu0 %v2681
        %v2703 = vpop.f32.mrf.mxu0
        %v2704 = vadd.f32 0.0, %v2703
        %2705 = vdwg.mxu0
        %v2706 = vadd.f32 %v2634, %v2701
        %v2707 = vadd.f32 %v2635, %v2704
        %s2708 = scalar_lea.vmem %s6, 96
        %v2709 = vld [vmem:[%s2708] sm:$0xff]
        %v2710 = vld [vmem:[%s2708 + $0x8] sm:$0xff]
        %v2712 = vsel %vm2283, %v2709, 0
        %v2715 = vsel %vm2283, %v2710, 0
        %2717 = vmatpush.msra.mxu0 0.0
        %2718 = vmatpush.msra.mxu0 0.0
        %2719 = vmatpush.msra.mxu0 0.0
        %2720 = vmatpush.msra.mxu0 0.0
        %2721 = vmatpush.msra.mxu0 0.0
        %2722 = vmatpush.msra.mxu0 0.0
        %2723 = vmatpush.msra.mxu0 0.0
        %2724 = vmatpush.msra.mxu0 0.0
        %2725 = vmatpush.msra.mxu0 %v2280
        %2726 = vmatpush.msra.mxu0 %v2279
        %2727 = vmatpush.msra.mxu0 %v2278
        %2728 = vmatpush.msra.mxu0 %v2277
        %2729 = vmatpush.msra.mxu0 %v2276
        %2730 = vmatpush.msra.mxu0 %v2275
        %2731 = vmatpush.msra.mxu0 %v2274
        %2732 = vmatpush.msra.mxu0 %v2273
        %2733 = vmatmul.f32.gmra.mxu0 %v2712
        %v2734 = vpop.f32.mrf.mxu0
        %v2735 = vadd.f32 0.0, %v2734
        %2736 = vmatmul.f32.gmra.mxu0 %v2715
        %v2737 = vpop.f32.mrf.mxu0
        %v2738 = vadd.f32 0.0, %v2737
        %2739 = vdwg.mxu0
        %s2740 = scalar_lea.vmem %s7, 384
        %v2741 = vld [vmem:[%s2740] sm:$0xff]
        %v2742 = vld [vmem:[%s2740 + $0x8] sm:$0xff]
        %v2743 = vld [vmem:[%s2740 + $0x10] sm:$0xff]
        %v2744 = vld [vmem:[%s2740 + $0x18] sm:$0xff]
        %v2745 = vld [vmem:[%s2740 + $0x20] sm:$0xff]
        %v2746 = vld [vmem:[%s2740 + $0x28] sm:$0xff]
        %v2747 = vld [vmem:[%s2740 + $0x30] sm:$0xff]
        %v2748 = vld [vmem:[%s2740 + $0x38] sm:$0xff]
        %v2750 = vsel %vm2283, %v2735, 0
        %v2753 = vsel %vm2283, %v2738, 0
        %2755 = vmatpush.msra.mxu0 0.0
        %2756 = vmatpush.msra.mxu0 0.0
        %2757 = vmatpush.msra.mxu0 0.0
        %2758 = vmatpush.msra.mxu0 0.0
        %2759 = vmatpush.msra.mxu0 0.0
        %2760 = vmatpush.msra.mxu0 0.0
        %2761 = vmatpush.msra.mxu0 0.0
        %2762 = vmatpush.msra.mxu0 0.0
        %2763 = vmatpush.msra.mxu0 %v2748
        %2764 = vmatpush.msra.mxu0 %v2747
        %2765 = vmatpush.msra.mxu0 %v2746
        %2766 = vmatpush.msra.mxu0 %v2745
        %2767 = vmatpush.msra.mxu0 %v2744
        %2768 = vmatpush.msra.mxu0 %v2743
        %2769 = vmatpush.msra.mxu0 %v2742
        %2770 = vmatpush.msra.mxu0 %v2741
        %2771 = vmatmul.f32.gmra.mxu0 %v2750
        %v2772 = vpop.f32.mrf.mxu0
        %v2773 = vadd.f32 0.0, %v2772
        %2774 = vmatmul.f32.gmra.mxu0 %v2753
        %v2775 = vpop.f32.mrf.mxu0
        %v2776 = vadd.f32 0.0, %v2775
        %2777 = vdwg.mxu0
        %v2778 = vadd.f32 %v2706, %v2773
        %v2779 = vadd.f32 %v2707, %v2776
        %s2780 = scalar_lea.vmem %s6, 112
        %v2781 = vld [vmem:[%s2780] sm:$0xff]
        %v2782 = vld [vmem:[%s2780 + $0x8] sm:$0xff]
        %v2784 = vsel %vm2283, %v2781, 0
        %v2787 = vsel %vm2283, %v2782, 0
        %2789 = vmatpush.msra.mxu0 0.0
        %2790 = vmatpush.msra.mxu0 0.0
        %2791 = vmatpush.msra.mxu0 0.0
        %2792 = vmatpush.msra.mxu0 0.0
        %2793 = vmatpush.msra.mxu0 0.0
        %2794 = vmatpush.msra.mxu0 0.0
        %2795 = vmatpush.msra.mxu0 0.0
        %2796 = vmatpush.msra.mxu0 0.0
        %2797 = vmatpush.msra.mxu0 %v2280
        %2798 = vmatpush.msra.mxu0 %v2279
        %2799 = vmatpush.msra.mxu0 %v2278
        %2800 = vmatpush.msra.mxu0 %v2277
        %2801 = vmatpush.msra.mxu0 %v2276
        %2802 = vmatpush.msra.mxu0 %v2275
        %2803 = vmatpush.msra.mxu0 %v2274
        %2804 = vmatpush.msra.mxu0 %v2273
        %2805 = vmatmul.f32.gmra.mxu0 %v2784
        %v2806 = vpop.f32.mrf.mxu0
        %v2807 = vadd.f32 0.0, %v2806
        %2808 = vmatmul.f32.gmra.mxu0 %v2787
        %v2809 = vpop.f32.mrf.mxu0
        %v2810 = vadd.f32 0.0, %v2809
        %2811 = vdwg.mxu0
        %s2812 = scalar_lea.vmem %s7, 448
        %v2813 = vld [vmem:[%s2812] sm:$0xff]
        %v2814 = vld [vmem:[%s2812 + $0x8] sm:$0xff]
        %v2815 = vld [vmem:[%s2812 + $0x10] sm:$0xff]
        %v2816 = vld [vmem:[%s2812 + $0x18] sm:$0xff]
        %v2817 = vld [vmem:[%s2812 + $0x20] sm:$0xff]
        %v2818 = vld [vmem:[%s2812 + $0x28] sm:$0xff]
        %v2819 = vld [vmem:[%s2812 + $0x30] sm:$0xff]
        %v2820 = vld [vmem:[%s2812 + $0x38] sm:$0xff]
        %v2822 = vsel %vm2283, %v2807, 0
        %v2825 = vsel %vm2283, %v2810, 0
        %2827 = vmatpush.msra.mxu0 0.0
        %2828 = vmatpush.msra.mxu0 0.0
        %2829 = vmatpush.msra.mxu0 0.0
        %2830 = vmatpush.msra.mxu0 0.0
        %2831 = vmatpush.msra.mxu0 0.0
        %2832 = vmatpush.msra.mxu0 0.0
        %2833 = vmatpush.msra.mxu0 0.0
        %2834 = vmatpush.msra.mxu0 0.0
        %2835 = vmatpush.msra.mxu0 %v2820
        %2836 = vmatpush.msra.mxu0 %v2819
        %2837 = vmatpush.msra.mxu0 %v2818
        %2838 = vmatpush.msra.mxu0 %v2817
        %2839 = vmatpush.msra.mxu0 %v2816
        %2840 = vmatpush.msra.mxu0 %v2815
        %2841 = vmatpush.msra.mxu0 %v2814
        %2842 = vmatpush.msra.mxu0 %v2813
        %2843 = vmatmul.f32.gmra.mxu0 %v2822
        %v2844 = vpop.f32.mrf.mxu0
        %v2845 = vadd.f32 0.0, %v2844
        %2846 = vmatmul.f32.gmra.mxu0 %v2825
        %v2847 = vpop.f32.mrf.mxu0
        %v2848 = vadd.f32 0.0, %v2847
        %2849 = vdwg.mxu0
        %v2850 = vadd.f32 %v2778, %v2845
        %v2851 = vadd.f32 %v2779, %v2848
        %s2852 = scalar_lea.vmem %s6, 128
        %v2853 = vld [vmem:[%s2852] sm:$0xff]
        %v2854 = vld [vmem:[%s2852 + $0x8] sm:$0xff]
        %v2856 = vsel %vm2283, %v2853, 0
        %v2859 = vsel %vm2283, %v2854, 0
        %2861 = vmatpush.msra.mxu0 0.0
        %2862 = vmatpush.msra.mxu0 0.0
        %2863 = vmatpush.msra.mxu0 0.0
        %2864 = vmatpush.msra.mxu0 0.0
        %2865 = vmatpush.msra.mxu0 0.0
        %2866 = vmatpush.msra.mxu0 0.0
        %2867 = vmatpush.msra.mxu0 0.0
        %2868 = vmatpush.msra.mxu0 0.0
        %2869 = vmatpush.msra.mxu0 %v2280
        %2870 = vmatpush.msra.mxu0 %v2279
        %2871 = vmatpush.msra.mxu0 %v2278
        %2872 = vmatpush.msra.mxu0 %v2277
        %2873 = vmatpush.msra.mxu0 %v2276
        %2874 = vmatpush.msra.mxu0 %v2275
        %2875 = vmatpush.msra.mxu0 %v2274
        %2876 = vmatpush.msra.mxu0 %v2273
        %2877 = vmatmul.f32.gmra.mxu0 %v2856
        %v2878 = vpop.f32.mrf.mxu0
        %v2879 = vadd.f32 0.0, %v2878
        %2880 = vmatmul.f32.gmra.mxu0 %v2859
        %v2881 = vpop.f32.mrf.mxu0
        %v2882 = vadd.f32 0.0, %v2881
        %2883 = vdwg.mxu0
        %s2884 = scalar_lea.vmem %s7, 512
        %v2885 = vld [vmem:[%s2884] sm:$0xff]
        %v2886 = vld [vmem:[%s2884 + $0x8] sm:$0xff]
        %v2887 = vld [vmem:[%s2884 + $0x10] sm:$0xff]
        %v2888 = vld [vmem:[%s2884 + $0x18] sm:$0xff]
        %v2889 = vld [vmem:[%s2884 + $0x20] sm:$0xff]
        %v2890 = vld [vmem:[%s2884 + $0x28] sm:$0xff]
        %v2891 = vld [vmem:[%s2884 + $0x30] sm:$0xff]
        %v2892 = vld [vmem:[%s2884 + $0x38] sm:$0xff]
        %v2894 = vsel %vm2283, %v2879, 0
        %v2897 = vsel %vm2283, %v2882, 0
        %2899 = vmatpush.msra.mxu0 0.0
        %2900 = vmatpush.msra.mxu0 0.0
        %2901 = vmatpush.msra.mxu0 0.0
        %2902 = vmatpush.msra.mxu0 0.0
        %2903 = vmatpush.msra.mxu0 0.0
        %2904 = vmatpush.msra.mxu0 0.0
        %2905 = vmatpush.msra.mxu0 0.0
        %2906 = vmatpush.msra.mxu0 0.0
        %2907 = vmatpush.msra.mxu0 %v2892
        %2908 = vmatpush.msra.mxu0 %v2891
        %2909 = vmatpush.msra.mxu0 %v2890
        %2910 = vmatpush.msra.mxu0 %v2889
        %2911 = vmatpush.msra.mxu0 %v2888
        %2912 = vmatpush.msra.mxu0 %v2887
        %2913 = vmatpush.msra.mxu0 %v2886
        %2914 = vmatpush.msra.mxu0 %v2885
        %2915 = vmatmul.f32.gmra.mxu0 %v2894
        %v2916 = vpop.f32.mrf.mxu0
        %v2917 = vadd.f32 0.0, %v2916
        %2918 = vmatmul.f32.gmra.mxu0 %v2897
        %v2919 = vpop.f32.mrf.mxu0
        %v2920 = vadd.f32 0.0, %v2919
        %2921 = vdwg.mxu0
        %v2922 = vadd.f32 %v2850, %v2917
        %v2923 = vadd.f32 %v2851, %v2920
        %v2924 = vld [vmem:[%s8] sm:$0x1]
        %v2926 = vperm.slane %v2924, 0
        %v2928 = vadd.f32 %v2922, %v2926
        %v2929 = vadd.f32 %v2923, %v2926
        %v2930 = vmax.f32 %v2928, 0.0
        %v2931 = vmax.f32 %v2929, 0.0
        %v2932 = vadd.f32 %v2930, %v2931
        %v2933 = vrot.slane %v2932, 4
        %v2934 = vadd.f32 %v2932, %v2933
        %v2935 = vrot.slane %v2934, 2
        %v2936 = vadd.f32 %v2934, %v2935
        %v2937 = vrot.slane %v2936, 1
        %v2938 = vadd.f32 %v2936, %v2937
        %v2939 = vrcp.pop 16.0
        %v2940 = vmul.f32 16.0, %v2939
        %v2941 = vsub.f32 1.0, %v2940
        %v2942 = vmul.f32 %v2939, %v2941
        %v2943 = vadd.f32 %v2939, %v2942
        %vm2944 = vweird.f32 %v2939
        %v2945 = vsel %vm2944, %v2939, %v2943
        %v2946 = vmul.f32 %v2938, %v2945
        %v2947 = vld [vmem:[%s9] sm:$0xff]
        %v2948 = vld [vmem:[%s9 + $0x8] sm:$0xff]
        %v2949 = vld [vmem:[%s9 + $0x10] sm:$0xff]
        %v2950 = vld [vmem:[%s9 + $0x18] sm:$0xff]
        %v2951 = vld [vmem:[%s9 + $0x20] sm:$0xff]
        %v2952 = vld [vmem:[%s9 + $0x28] sm:$0xff]
        %v2953 = vld [vmem:[%s9 + $0x30] sm:$0xff]
        %v2954 = vld [vmem:[%s9 + $0x38] sm:$0xff]
        %v2955 = vld [vmem:[%s9 + $0x40] sm:$0xff]
        %v2956 = vld [vmem:[%s9 + $0x48] sm:$0xff]
        %v2957 = vld [vmem:[%s9 + $0x50] sm:$0xff]
        %v2958 = vld [vmem:[%s9 + $0x58] sm:$0xff]
        %v2959 = vld [vmem:[%s9 + $0x60] sm:$0xff]
        %v2960 = vld [vmem:[%s9 + $0x68] sm:$0xff]
        %v2961 = vld [vmem:[%s9 + $0x70] sm:$0xff]
        %v2962 = vld [vmem:[%s9 + $0x78] sm:$0xff]
        %v2963 = vld [vmem:[%s10] sm:$0x1]
        %2964 = vmatpush.msra.mxu0 %v2962
        %2965 = vmatpush.msra.mxu0 %v2961
        %2966 = vmatpush.msra.mxu0 %v2960
        %2967 = vmatpush.msra.mxu0 %v2959
        %2968 = vmatpush.msra.mxu0 %v2958
        %2969 = vmatpush.msra.mxu0 %v2957
        %2970 = vmatpush.msra.mxu0 %v2956
        %2971 = vmatpush.msra.mxu0 %v2955
        %2972 = vmatpush.msra.mxu0 %v2954
        %2973 = vmatpush.msra.mxu0 %v2953
        %2974 = vmatpush.msra.mxu0 %v2952
        %2975 = vmatpush.msra.mxu0 %v2951
        %2976 = vmatpush.msra.mxu0 %v2950
        %2977 = vmatpush.msra.mxu0 %v2949
        %2978 = vmatpush.msra.mxu0 %v2948
        %2979 = vmatpush.msra.mxu0 %v2947
        %2980 = vmatmul.f32.gmra.mxu0 %v2946
        %v2981 = vpop.f32.mrf.mxu0
        %v2982 = vadd.f32 %v2963, %v2981
        %2983 = vdwg.mxu0
        %vm2984 = vcmask 73728
        %2985 = vst.msk [vmem:[%s395] sm:$0x1] %vm2984, %v2982
        %s2986 = sand.u32 %s270, 1
        %s2987 = scalar_lea.sflag [#allocation4], %s2986
        %s2988 = sand.u32 %s270, 1
        %s2989 = scalar_lea.vmem [#allocation5], %s2988
        // Predicated region
        $region69: #{cnn_forward.1} parent=63 // pred_check
          %p2990 = pneg %p280
        $region70: #{cnn_forward.1} parent=63 // pred_check_branch
          %2992 = sbr.rel (%p2990) target = $region72
        $region71: #{cnn_forward.1} parent=63 // pred_region
          %2994 = vsyncadd %s2987, 0
          %s2995 = scalar_lea.hbm %s11, %s26
          %s2997 = sshll.u32 %s2989, 4
          %s2998 = int_to_ptr.vmem [resolvable:$true] %s2997
          %s2999 = sshll.u32 %s2995, 4
          %s3000 = int_to_ptr.hbm [resolvable:$true] %s2999
          %3002 = dma.vmem_to_hbm [thread:$0]  %s2998, 16, %s3000, %s2987
        $region72: #{cnn_forward.1} parent=63 // pred_fallthru
          _
      $region64: #{cnn_forward.1} parent=5 // pred_fallthru
        _
      %p3003 = scmp.le.s32.totalorder 2, %s21
      // Predicated region
      $region73: #{cnn_forward.1} parent=5 // pred_check
        %p3004 = pneg %p3003
      $region74: #{cnn_forward.1} parent=5 // pred_check_branch
        %3006 = sbr.rel (%p3004) target = $region76
      $region75: #{cnn_forward.1} parent=5 // pred_region
        %s3007 = ssub.s32 %s21, 2
        // Predicated region
        $region77: #{cnn_forward.1} parent=75 // pred_check
          %p3008 = pneg %p286
        $region78: #{cnn_forward.1} parent=75 // pred_check_branch
          %3010 = sbr.rel (%p3008) target = $region80
        $region79: #{cnn_forward.1} parent=75 // pred_region
          %s3011 = sand.u32 %s271, 1
          %s3012 = scalar_lea.sflag [#allocation4], %s3011
          %s3013 = sand.u32 %s271, 1
          %s3014 = scalar_lea.vmem [#allocation5], %s3013
          %3016 = dma.done %s3012, 16
        $region80: #{cnn_forward.1} parent=75 // pred_fallthru
          _
      $region76: #{cnn_forward.1} parent=5 // pred_fallthru
        _
    $region6: #{cnn_forward.1} parent=1 // loop_footer
      %s25 = sadd.s32 1, %s21
    $region7: #{cnn_forward.1} parent=1 // loop_footer_branch
      %20 = sbr.rel target = $region3
    $region8: #{cnn_forward.1} parent=1 // loop_exit
      _
    %3017 = vsyncpa [#allocation3], 1
    %s3018 = scalar_lea.sflag [#allocation3], 1
    %3019 = vsyncpa %s3018, 1
    %3020 = vsyncpa [#allocation4], 1
    %s3021 = scalar_lea.sflag [#allocation4], 1
    %3022 = vsyncpa %s3021, 1

</llo_original>
